<compile_context>
chip_gen: v7x
topology: tpu7x:2x2x1
jax: 0.10.0
libtpu: 0.0.40
codegen_flags: <defaults>
</compile_context>

<pallas_src>
import jax
import jax.numpy as jnp
import numpy as np
from jax.experimental import pallas as pl
from jax.experimental.pallas import tpu as pltpu


# ----------------------------------------------------------------------------
# Fused kernel: conv stack + max over points + FC head (+ identity)
# ----------------------------------------------------------------------------
def stn3d_fused_kernel(x_ref, w1_ref, b1_ref, w2_ref, b2_ref, w3_ref, b3_ref,
                       w4_ref, b4_ref, w5_ref, b5_ref, w6_ref, b6_ref,
                       out_ref, gmax_ref):
    n = pl.program_id(0)
    B, TN, _ = x_ref.shape

    # ---- pointwise conv stack (1x1 convs == matmuls over channels) ----
    x = x_ref[...]                                       # (B, TN, 8) bf16/f32
    h = jnp.einsum('bnc,co->bno', x, w1_ref[...],
                   preferred_element_type=jnp.float32) + b1_ref[...]
    h = jnp.maximum(h, 0.0)                              # conv1 + relu, f32

    h = h.reshape(B * TN, 64)                            # fold batch into M
    h = jnp.dot(h.astype(w2_ref.dtype), w2_ref[...],
                preferred_element_type=jnp.float32) + b2_ref[...]
    h = jnp.maximum(h, 0.0)                              # conv2 + relu, f32

    h = jnp.dot(h.astype(w3_ref.dtype), w3_ref[...],
                preferred_element_type=jnp.float32) + b3_ref[...]
    h = jnp.maximum(h, 0.0)                              # conv3 + relu, f32

    m = jnp.max(h.reshape(B, TN, 1024), axis=1)          # (B, 1024) tile max

    # ---- running max over point tiles (resident VMEM accumulator) ----
    @pl.when(n == 0)
    def _():
        gmax_ref[...] = jnp.full_like(gmax_ref, -jnp.inf)

    gmax_ref[...] = jnp.maximum(gmax_ref[...], m)

    # ---- fused FC head on the last grid step only ----
    @pl.when(n == pl.num_programs(0) - 1)
    def _():
        g = gmax_ref[...]                                # (B, 1024) f32
        f = jnp.dot(g, w4_ref[...],
                    preferred_element_type=jnp.float32) + b4_ref[...]
        f = jnp.maximum(f, 0.0)                          # fc1 + relu
        f = jnp.dot(f, w5_ref[...],
                    preferred_element_type=jnp.float32) + b5_ref[...]
        f = jnp.maximum(f, 0.0)                          # fc2 + relu
        y = jnp.dot(f, w6_ref[...],
                    preferred_element_type=jnp.float32) + b6_ref[...]
        out_ref[...] = y.astype(out_ref.dtype)           # iden already in b6


# ----------------------------------------------------------------------------
# Tile-size selection: biggest point tile (multiple of 8, dividing N) such
# that B*tile_n <= max_rows, which caps the fp32 (B*tile_n, 1024) conv3
# intermediate at ~8 MiB (safe on v7x's 64 MiB VMEM, plenty on v5e/v6e).
# ----------------------------------------------------------------------------
def _choose_tile_n(B, N, max_rows=2048):
    cap = max(8, (max_rows // max(B, 1)) // 8 * 8)
    tn = min(N, cap)
    tn = max(8, tn // 8 * 8)
    while tn > 8 and N % tn != 0:
        tn -= 8
    if N % tn != 0:
        # TODO(synk): pad N to a multiple of 8 and mask the max for large
        # ragged point counts; a single tile is fine for modest N.
        tn = N
    return tn


# ----------------------------------------------------------------------------
# Wrapper
# ----------------------------------------------------------------------------
def stn3d_forward(x, params, *, use_bf16=True, max_rows_per_tile=2048):
    """x: (B, 3, N) float32 (PyTorch NCW).  Returns (B, 3, 3)."""
    B, C, N = x.shape
    assert C == 3
    (w1, b1, w2, b2, w3, b3, w4, b4, w5, b5, w6, b6) = params

    # NCW -> NWC; pad channel dim 3 -> 8 (zeros, exact) for alignment.
    CP = 8
    xt = jnp.transpose(x, (0, 2, 1))                     # (B, N, 3)
    xt = jnp.pad(xt, ((0, 0), (0, 0), (0, CP - C)))      # (B, N, 8)
    w1p = jnp.pad(w1, ((0, CP - C), (0, 0)))             # (8, 64)

    conv_dtype = jnp.bfloat16 if use_bf16 else jnp.float32
    xt = xt.astype(conv_dtype)
    w1p = w1p.astype(conv_dtype)
    w2c = w2.astype(conv_dtype)
    w3c = w3.astype(conv_dtype)

    # Fold identity-matrix add into the final bias (removes one operand/add).
    iden = jnp.array([1, 0, 0, 0, 1, 0, 0, 0, 1],
                     dtype=jnp.float32).reshape(1, 9)
    b6f = b6 + iden

    tile_n = _choose_tile_n(B, N, max_rows_per_tile)
    grid = (N // tile_n,)

    full = lambda n_: (0, 0)

    out9 = pl.pallas_call(
        stn3d_fused_kernel,
        out_shape=jax.ShapeDtypeStruct((B, 9), jnp.float32),
        grid=grid,
        in_specs=[
            pl.BlockSpec((B, tile_n, CP), lambda n_: (0, n_, 0)),
            pl.BlockSpec((CP, 64), full),   pl.BlockSpec((1, 64), full),
            pl.BlockSpec((64, 128), full),  pl.BlockSpec((1, 128), full),
            pl.BlockSpec((128, 1024), full), pl.BlockSpec((1, 1024), full),
            pl.BlockSpec((1024, 512), full), pl.BlockSpec((1, 512), full),
            pl.BlockSpec((512, 256), full),  pl.BlockSpec((1, 256), full),
            pl.BlockSpec((256, 9), full),    pl.BlockSpec((1, 9), full),
        ],
        out_specs=pl.BlockSpec((B, 9), full),
        scratch_shapes=[pltpu.VMEM((B, 1024), jnp.float32)],
        compiler_params=pltpu.CompilerParams(
            dimension_semantics=("arbitrary",),
            vmem_limit_bytes=48 * 1024 * 1024),
    )(xt, w1p, b1, w2c, b2, w3c, b3, w4, b4, w5, b5, w6, b6f)

    return out9.reshape(B, 3, 3)


# ----------------------------------------------------------------------------
# Pure-JAX fp32 reference (mirrors the PyTorch forward)
# ----------------------------------------------------------------------------
def stn3d_reference(x, params):
    (w1, b1, w2, b2, w3, b3, w4, b4, w5, b5, w6, b6) = params
    B = x.shape[0]
    xt = jnp.transpose(x, (0, 2, 1))                     # (B, N, 3)
    h = jax.nn.relu(jnp.einsum('bnc,co->bno', xt, w1) + b1)
    h = jax.nn.relu(jnp.einsum('bnc,co->bno', h, w2) + b2)
    h = jax.nn.relu(jnp.einsum('bnc,co->bno', h, w3) + b3)
    g = jnp.max(h, axis=1)                               # (B, 1024)
    h = jax.nn.relu(g @ w4 + b4)
    h = jax.nn.relu(h @ w5 + b5)
    y = h @ w6 + b6
    iden = jnp.array([1, 0, 0, 0, 1, 0, 0, 0, 1], dtype=jnp.float32)
    return (y + iden).reshape(B, 3, 3)


def init_params(key):
    """Deterministic synthetic params, shapes match STN3d.__init__.
    Conv1d(kernel=1) weight (out, in, 1) stored transposed as (in, out);
    Linear weight (out, in) stored transposed as (in, out)."""
    ks = jax.random.split(key, 12)
    def w(k, shape, fan_in):
        return (jax.random.normal(k, shape, jnp.float32) / np.sqrt(fan_in))
    w1 = w(ks[0], (3, 64), 3);        b1 = w(ks[1], (1, 64), 3)
    w2 = w(ks[2], (64, 128), 64);     b2 = w(ks[3], (1, 128), 64)
    w3 = w(ks[4], (128, 1024), 128);  b3 = w(ks[5], (1, 1024), 128)
    w4 = w(ks[6], (1024, 512), 1024); b4 = w(ks[7], (1, 512), 1024)
    w5 = w(ks[8], (512, 256), 512);   b5 = w(ks[9], (1, 256), 512)
    w6 = w(ks[10], (256, 9), 256);    b6 = w(ks[11], (1, 9), 256)
    return (w1, b1, w2, b2, w3, b3, w4, b4, w5, b5, w6, b6)


if __name__ == "__main__":
    key = jax.random.PRNGKey(0)
    kp, kx = jax.random.split(key)
    params = init_params(kp)

    B, N = 2, 16                       # small num_points for the test
    x = jax.random.normal(kx, (B, 3, N), jnp.float32)

    out = stn3d_forward(x, params, use_bf16=True)
    out = jax.block_until_ready(out)

    ref = stn3d_reference(x, params)
    assert out.shape == (B, 3, 3)
    # bf16 MXU operands with fp32 accumulation -> loosened tolerance.
    np.testing.assert_allclose(np.asarray(out), np.asarray(ref),
                               rtol=2e-2, atol=2e-2)
    print("KERNEL_OK")
</pallas_src>

<mosaic_0001>
module attributes {stable_mosaic.version = 11 : i64} {
  func.func @stn3d_fused_kernel(%arg0: i32, %arg1: memref<2x16x8xbf16, #tpu.memory_space<vmem>>, %arg2: memref<8x64xbf16, #tpu.memory_space<vmem>>, %arg3: memref<1x64xf32, #tpu.memory_space<vmem>>, %arg4: memref<64x128xbf16, #tpu.memory_space<vmem>>, %arg5: memref<1x128xf32, #tpu.memory_space<vmem>>, %arg6: memref<128x1024xbf16, #tpu.memory_space<vmem>>, %arg7: memref<1x1024xf32, #tpu.memory_space<vmem>>, %arg8: memref<1024x512xf32, #tpu.memory_space<vmem>>, %arg9: memref<1x512xf32, #tpu.memory_space<vmem>>, %arg10: memref<512x256xf32, #tpu.memory_space<vmem>>, %arg11: memref<1x256xf32, #tpu.memory_space<vmem>>, %arg12: memref<256x9xf32, #tpu.memory_space<vmem>>, %arg13: memref<1x9xf32, #tpu.memory_space<vmem>>, %arg14: memref<2x9xf32, #tpu.memory_space<vmem>>, %arg15: memref<2x1024xf32, #tpu.memory_space<vmem>>) attributes {dimension_semantics = [#tpu.dimension_semantics<arbitrary>], iteration_bounds = array<i64: 1>, scalar_prefetch = 0 : i64, scratch_operands = 1 : i64, tpu.core_type = #tpu.core_type<tc>, window_params = [{transform_indices = @transform_0, window_bounds = array<i64: 2, 16, 8>}, {pipeline_mode = #tpu.pipeline_mode<synchronous>, transform_indices = @transform_1, window_bounds = array<i64: 8, 64>}, {pipeline_mode = #tpu.pipeline_mode<synchronous>, transform_indices = @transform_2, window_bounds = array<i64: 1, 64>}, {pipeline_mode = #tpu.pipeline_mode<synchronous>, transform_indices = @transform_3, window_bounds = array<i64: 64, 128>}, {pipeline_mode = #tpu.pipeline_mode<synchronous>, transform_indices = @transform_4, window_bounds = array<i64: 1, 128>}, {pipeline_mode = #tpu.pipeline_mode<synchronous>, transform_indices = @transform_5, window_bounds = array<i64: 128, 1024>}, {pipeline_mode = #tpu.pipeline_mode<synchronous>, transform_indices = @transform_6, window_bounds = array<i64: 1, 1024>}, {pipeline_mode = #tpu.pipeline_mode<synchronous>, transform_indices = @transform_7, window_bounds = array<i64: 1024, 512>}, {pipeline_mode = #tpu.pipeline_mode<synchronous>, transform_indices = @transform_8, window_bounds = array<i64: 1, 512>}, {pipeline_mode = #tpu.pipeline_mode<synchronous>, transform_indices = @transform_9, window_bounds = array<i64: 512, 256>}, {pipeline_mode = #tpu.pipeline_mode<synchronous>, transform_indices = @transform_10, window_bounds = array<i64: 1, 256>}, {pipeline_mode = #tpu.pipeline_mode<synchronous>, transform_indices = @transform_11, window_bounds = array<i64: 256, 9>}, {pipeline_mode = #tpu.pipeline_mode<synchronous>, transform_indices = @transform_12, window_bounds = array<i64: 1, 9>}, {pipeline_mode = #tpu.pipeline_mode<synchronous>, transform_indices = @transform_13, window_bounds = array<i64: 2, 9>}]} {
    %c0 = arith.constant 0 : index
    %c0_0 = arith.constant 0 : index
    %c0_1 = arith.constant 0 : index
    %0 = vector.load %arg1[%c0, %c0_0, %c0_1] : memref<2x16x8xbf16, #tpu.memory_space<vmem>>, vector<2x16x8xbf16>
    %c0_2 = arith.constant 0 : index
    %c0_3 = arith.constant 0 : index
    %1 = vector.load %arg2[%c0_2, %c0_3] : memref<8x64xbf16, #tpu.memory_space<vmem>>, vector<8x64xbf16>
    "tpu.trace_start"() <{level = 10 : i32, message = "bnc,co->bno"}> : () -> ()
    %cst = arith.constant dense<0.000000e+00> : vector<2x16x64xf32>
    %2 = tpu.matmul %0, %1, %cst {dimension_numbers = #tpu.dot_dimension_numbers<[2], [0], [0, 1], [1], [0, 0, 0, 1, 1, 1], [], []>} : vector<2x16x8xbf16>, vector<8x64xbf16>, vector<2x16x64xf32> -> vector<2x16x64xf32>
    "tpu.trace_stop"() : () -> ()
    %c0_4 = arith.constant 0 : index
    %c0_5 = arith.constant 0 : index
    %3 = vector.load %arg3[%c0_4, %c0_5] : memref<1x64xf32, #tpu.memory_space<vmem>>, vector<1x64xf32>
    %4 = vector.shape_cast %3 : vector<1x64xf32> to vector<1x1x64xf32>
    %5 = vector.broadcast %4 : vector<1x1x64xf32> to vector<2x16x64xf32>
    %6 = arith.addf %2, %5 : vector<2x16x64xf32>
    %cst_6 = arith.constant 0.000000e+00 : f32
    %7 = vector.broadcast %cst_6 : f32 to vector<2x16x64xf32>
    %8 = arith.maximumf %6, %7 : vector<2x16x64xf32>
    %9 = vector.shape_cast %8 : vector<2x16x64xf32> to vector<32x64xf32>
    %10 = arith.truncf %9 : vector<32x64xf32> to vector<32x64xbf16>
    %c0_7 = arith.constant 0 : index
    %c0_8 = arith.constant 0 : index
    %11 = vector.load %arg4[%c0_7, %c0_8] : memref<64x128xbf16, #tpu.memory_space<vmem>>, vector<64x128xbf16>
    %cst_9 = arith.constant dense<0.000000e+00> : vector<32x128xf32>
    %12 = tpu.matmul %10, %11, %cst_9 {dimension_numbers = #tpu.dot_dimension_numbers<[1], [0], [0], [1], [0, 0, 1, 1], [], []>} : vector<32x64xbf16>, vector<64x128xbf16>, vector<32x128xf32> -> vector<32x128xf32>
    %c0_10 = arith.constant 0 : index
    %c0_11 = arith.constant 0 : index
    %13 = vector.load %arg5[%c0_10, %c0_11] : memref<1x128xf32, #tpu.memory_space<vmem>>, vector<1x128xf32>
    %14 = vector.broadcast %13 : vector<1x128xf32> to vector<32x128xf32>
    %15 = arith.addf %12, %14 : vector<32x128xf32>
    %cst_12 = arith.constant 0.000000e+00 : f32
    %16 = vector.broadcast %cst_12 : f32 to vector<32x128xf32>
    %17 = arith.maximumf %15, %16 : vector<32x128xf32>
    %18 = arith.truncf %17 : vector<32x128xf32> to vector<32x128xbf16>
    %c0_13 = arith.constant 0 : index
    %c0_14 = arith.constant 0 : index
    %19 = vector.load %arg6[%c0_13, %c0_14] : memref<128x1024xbf16, #tpu.memory_space<vmem>>, vector<128x1024xbf16>
    %cst_15 = arith.constant dense<0.000000e+00> : vector<32x1024xf32>
    %20 = tpu.matmul %18, %19, %cst_15 {dimension_numbers = #tpu.dot_dimension_numbers<[1], [0], [0], [1], [0, 0, 1, 1], [], []>} : vector<32x128xbf16>, vector<128x1024xbf16>, vector<32x1024xf32> -> vector<32x1024xf32>
    %c0_16 = arith.constant 0 : index
    %c0_17 = arith.constant 0 : index
    %21 = vector.load %arg7[%c0_16, %c0_17] : memref<1x1024xf32, #tpu.memory_space<vmem>>, vector<1x1024xf32>
    %22 = vector.broadcast %21 : vector<1x1024xf32> to vector<32x1024xf32>
    %23 = arith.addf %20, %22 : vector<32x1024xf32>
    %cst_18 = arith.constant 0.000000e+00 : f32
    %24 = vector.broadcast %cst_18 : f32 to vector<32x1024xf32>
    %25 = arith.maximumf %23, %24 : vector<32x1024xf32>
    %26 = vector.shape_cast %25 : vector<32x1024xf32> to vector<2x16x1024xf32>
    %cst_19 = arith.constant dense<0xFF800000> : vector<2x1024xf32>
    %27 = vector.multi_reduction <maximumf>, %26, %cst_19 [1] : vector<2x16x1024xf32> to vector<2x1024xf32>
    %c0_i32 = arith.constant 0 : i32
    %28 = arith.cmpi eq, %arg0, %c0_i32 : i32
    %29 = arith.extui %28 : i1 to i32
    %c0_i32_20 = arith.constant 0 : i32
    %30 = arith.cmpi ne, %29, %c0_i32_20 : i32
    scf.if %30 {
      %cst_27 = arith.constant 0xFF800000 : f32
      %37 = vector.broadcast %cst_27 : f32 to vector<2x1024xf32>
      %c0_28 = arith.constant 0 : index
      %c0_29 = arith.constant 0 : index
      %38 = vector.load %arg15[%c0_28, %c0_29] : memref<2x1024xf32, #tpu.memory_space<vmem>>, vector<2x1024xf32>
      tpu.vector_store %arg15[%c0_28, %c0_29], %37 {strides = array<i32>} : memref<2x1024xf32, #tpu.memory_space<vmem>>, vector<2x1024xf32>,
    } else {
    }
    %c0_21 = arith.constant 0 : index
    %c0_22 = arith.constant 0 : index
    %31 = vector.load %arg15[%c0_21, %c0_22] : memref<2x1024xf32, #tpu.memory_space<vmem>>, vector<2x1024xf32>
    %32 = arith.maximumf %31, %27 : vector<2x1024xf32>
    %c0_23 = arith.constant 0 : index
    %c0_24 = arith.constant 0 : index
    %33 = vector.load %arg15[%c0_23, %c0_24] : memref<2x1024xf32, #tpu.memory_space<vmem>>, vector<2x1024xf32>
    tpu.vector_store %arg15[%c0_23, %c0_24], %32 {strides = array<i32>} : memref<2x1024xf32, #tpu.memory_space<vmem>>, vector<2x1024xf32>,
    %c0_i32_25 = arith.constant 0 : i32
    %34 = arith.cmpi eq, %arg0, %c0_i32_25 : i32
    %35 = arith.extui %34 : i1 to i32
    %c0_i32_26 = arith.constant 0 : i32
    %36 = arith.cmpi ne, %35, %c0_i32_26 : i32
    scf.if %36 {
      %c0_27 = arith.constant 0 : index
      %c0_28 = arith.constant 0 : index
      %37 = vector.load %arg15[%c0_27, %c0_28] : memref<2x1024xf32, #tpu.memory_space<vmem>>, vector<2x1024xf32>
      %c0_29 = arith.constant 0 : index
      %c0_30 = arith.constant 0 : index
      %38 = vector.load %arg8[%c0_29, %c0_30] : memref<1024x512xf32, #tpu.memory_space<vmem>>, vector<1024x512xf32>
      %cst_31 = arith.constant dense<0.000000e+00> : vector<2x512xf32>
      %39 = tpu.matmul %37, %38, %cst_31 {dimension_numbers = #tpu.dot_dimension_numbers<[1], [0], [0], [1], [0, 0, 1, 1], [], []>} : vector<2x1024xf32>, vector<1024x512xf32>, vector<2x512xf32> -> vector<2x512xf32>
      %c0_32 = arith.constant 0 : index
      %c0_33 = arith.constant 0 : index
      %40 = vector.load %arg9[%c0_32, %c0_33] : memref<1x512xf32, #tpu.memory_space<vmem>>, vector<1x512xf32>
      %41 = vector.broadcast %40 : vector<1x512xf32> to vector<2x512xf32>
      %42 = arith.addf %39, %41 : vector<2x512xf32>
      %cst_34 = arith.constant 0.000000e+00 : f32
      %43 = vector.broadcast %cst_34 : f32 to vector<2x512xf32>
      %44 = arith.maximumf %42, %43 : vector<2x512xf32>
      %c0_35 = arith.constant 0 : index
      %c0_36 = arith.constant 0 : index
      %45 = vector.load %arg10[%c0_35, %c0_36] : memref<512x256xf32, #tpu.memory_space<vmem>>, vector<512x256xf32>
      %cst_37 = arith.constant dense<0.000000e+00> : vector<2x256xf32>
      %46 = tpu.matmul %44, %45, %cst_37 {dimension_numbers = #tpu.dot_dimension_numbers<[1], [0], [0], [1], [0, 0, 1, 1], [], []>} : vector<2x512xf32>, vector<512x256xf32>, vector<2x256xf32> -> vector<2x256xf32>
      %c0_38 = arith.constant 0 : index
      %c0_39 = arith.constant 0 : index
      %47 = vector.load %arg11[%c0_38, %c0_39] : memref<1x256xf32, #tpu.memory_space<vmem>>, vector<1x256xf32>
      %48 = vector.broadcast %47 : vector<1x256xf32> to vector<2x256xf32>
      %49 = arith.addf %46, %48 : vector<2x256xf32>
      %cst_40 = arith.constant 0.000000e+00 : f32
      %50 = vector.broadcast %cst_40 : f32 to vector<2x256xf32>
      %51 = arith.maximumf %49, %50 : vector<2x256xf32>
      %c0_41 = arith.constant 0 : index
      %c0_42 = arith.constant 0 : index
      %52 = vector.load %arg12[%c0_41, %c0_42] : memref<256x9xf32, #tpu.memory_space<vmem>>, vector<256x9xf32>
      %cst_43 = arith.constant dense<0.000000e+00> : vector<2x9xf32>
      %53 = tpu.matmul %51, %52, %cst_43 {dimension_numbers = #tpu.dot_dimension_numbers<[1], [0], [0], [1], [0, 0, 1, 1], [], []>} : vector<2x256xf32>, vector<256x9xf32>, vector<2x9xf32> -> vector<2x9xf32>
      %c0_44 = arith.constant 0 : index
      %c0_45 = arith.constant 0 : index
      %54 = vector.load %arg13[%c0_44, %c0_45] : memref<1x9xf32, #tpu.memory_space<vmem>>, vector<1x9xf32>
      %55 = vector.broadcast %54 : vector<1x9xf32> to vector<2x9xf32>
      %56 = arith.addf %53, %55 : vector<2x9xf32>
      %c0_46 = arith.constant 0 : index
      %c0_47 = arith.constant 0 : index
      %57 = vector.load %arg14[%c0_46, %c0_47] : memref<2x9xf32, #tpu.memory_space<vmem>>, vector<2x9xf32>
      tpu.vector_store %arg14[%c0_46, %c0_47], %56 {strides = array<i32>} : memref<2x9xf32, #tpu.memory_space<vmem>>, vector<2x9xf32>,
    } else {
    }
    return
  }
  func.func @transform_0(%arg0: i32) -> (i32, i32, i32) {
    %c0_i32 = arith.constant 0 : i32
    %c0_i32_0 = arith.constant 0 : i32
    %c0_i32_1 = arith.constant 0 : i32
    return %c0_i32, %arg0, %c0_i32_0 : i32, i32, i32
  }
  func.func @transform_1(%arg0: i32) -> (i32, i32) {
    %c0_i32 = arith.constant 0 : i32
    %c0_i32_0 = arith.constant 0 : i32
    %c0_i32_1 = arith.constant 0 : i32
    return %c0_i32, %c0_i32_0 : i32, i32
  }
  func.func @transform_2(%arg0: i32) -> (i32, i32) {
    %c0_i32 = arith.constant 0 : i32
    %c0_i32_0 = arith.constant 0 : i32
    %c0_i32_1 = arith.constant 0 : i32
    return %c0_i32, %c0_i32_0 : i32, i32
  }
  func.func @transform_3(%arg0: i32) -> (i32, i32) {
    %c0_i32 = arith.constant 0 : i32
    %c0_i32_0 = arith.constant 0 : i32
    %c0_i32_1 = arith.constant 0 : i32
    return %c0_i32, %c0_i32_0 : i32, i32
  }
  func.func @transform_4(%arg0: i32) -> (i32, i32) {
    %c0_i32 = arith.constant 0 : i32
    %c0_i32_0 = arith.constant 0 : i32
    %c0_i32_1 = arith.constant 0 : i32
    return %c0_i32, %c0_i32_0 : i32, i32
  }
  func.func @transform_5(%arg0: i32) -> (i32, i32) {
    %c0_i32 = arith.constant 0 : i32
    %c0_i32_0 = arith.constant 0 : i32
    %c0_i32_1 = arith.constant 0 : i32
    return %c0_i32, %c0_i32_0 : i32, i32
  }
  func.func @transform_6(%arg0: i32) -> (i32, i32) {
    %c0_i32 = arith.constant 0 : i32
    %c0_i32_0 = arith.constant 0 : i32
    %c0_i32_1 = arith.constant 0 : i32
    return %c0_i32, %c0_i32_0 : i32, i32
  }
  func.func @transform_7(%arg0: i32) -> (i32, i32) {
    %c0_i32 = arith.constant 0 : i32
    %c0_i32_0 = arith.constant 0 : i32
    %c0_i32_1 = arith.constant 0 : i32
    return %c0_i32, %c0_i32_0 : i32, i32
  }
  func.func @transform_8(%arg0: i32) -> (i32, i32) {
    %c0_i32 = arith.constant 0 : i32
    %c0_i32_0 = arith.constant 0 : i32
    %c0_i32_1 = arith.constant 0 : i32
    return %c0_i32, %c0_i32_0 : i32, i32
  }
  func.func @transform_9(%arg0: i32) -> (i32, i32) {
    %c0_i32 = arith.constant 0 : i32
    %c0_i32_0 = arith.constant 0 : i32
    %c0_i32_1 = arith.constant 0 : i32
    return %c0_i32, %c0_i32_0 : i32, i32
  }
  func.func @transform_10(%arg0: i32) -> (i32, i32) {
    %c0_i32 = arith.constant 0 : i32
    %c0_i32_0 = arith.constant 0 : i32
    %c0_i32_1 = arith.constant 0 : i32
    return %c0_i32, %c0_i32_0 : i32, i32
  }
  func.func @transform_11(%arg0: i32) -> (i32, i32) {
    %c0_i32 = arith.constant 0 : i32
    %c0_i32_0 = arith.constant 0 : i32
    %c0_i32_1 = arith.constant 0 : i32
    return %c0_i32, %c0_i32_0 : i32, i32
  }
  func.func @transform_12(%arg0: i32) -> (i32, i32) {
    %c0_i32 = arith.constant 0 : i32
    %c0_i32_0 = arith.constant 0 : i32
    %c0_i32_1 = arith.constant 0 : i32
    return %c0_i32, %c0_i32_0 : i32, i32
  }
  func.func @transform_13(%arg0: i32) -> (i32, i32) {
    %c0_i32 = arith.constant 0 : i32
    %c0_i32_0 = arith.constant 0 : i32
    %c0_i32_1 = arith.constant 0 : i32
    return %c0_i32, %c0_i32_0 : i32, i32
  }
}

</mosaic_0001>

<llo_original>
// kernel: tpu_custom_call.1
$region0: #{tpu_custom_call.1}
  #allocation0 [shape = 'u32[]', space=smem, size = 0x4, offset = 0x4, fixed_abs, tag = 'smem constant byte address 0x4 - core index']
  #allocation1 [shape = 'u32[144,128]{1,0:T(1,128)}', space=vmem, size = 0x12000, scoped, tag = 'internal scratch']
  #allocation2 [shape = 'f32[2,1024]{1,0:T(2,128)}', space=vmem, size = 0x2000, scoped, tag = 'scratch operand']
  %s0 = inlined_call_operand.vmem [shape: bf16[2,16,8], index: 0, kind: input, shape index: {}]
  %s1 = inlined_call_operand.hbm [shape: bf16[8,64], index: 1, kind: input, shape index: {}]
  %s2 = inlined_call_operand.hbm [shape: f32[1,64], index: 2, kind: input, shape index: {}]
  %s3 = inlined_call_operand.hbm [shape: bf16[64,128], index: 3, kind: input, shape index: {}]
  %s4 = inlined_call_operand.hbm [shape: f32[1,128], index: 4, kind: input, shape index: {}]
  %s5 = inlined_call_operand.hbm [shape: bf16[128,1024], index: 5, kind: input, shape index: {}]
  %s6 = inlined_call_operand.hbm [shape: f32[1,1024], index: 6, kind: input, shape index: {}]
  %s7 = inlined_call_operand.hbm [shape: f32[1024,512], index: 7, kind: input, shape index: {}]
  %s8 = inlined_call_operand.hbm [shape: f32[1,512], index: 8, kind: input, shape index: {}]
  %s9 = inlined_call_operand.hbm [shape: f32[512,256], index: 9, kind: input, shape index: {}]
  %s10 = inlined_call_operand.hbm [shape: f32[1,256], index: 10, kind: input, shape index: {}]
  %s11 = inlined_call_operand.vmem [shape: f32[256,9], index: 11, kind: input, shape index: {}]
  %s12 = inlined_call_operand.hbm [shape: f32[1,9], index: 12, kind: input, shape index: {}]
  %s13 = inlined_call_operand.hbm [shape: f32[2,9], index: 13, kind: output, shape index: {}]
  %s14 = sld [smem:[#allocation0]]
  $region114: #{tpu_custom_call.1} parent=0
    _
  %s16 = ssub.s32 1, %s14
  %s17 = scalar_select 0, %s16, %s14
  $region1: #{tpu_custom_call.1} parent=0
    #allocation3 [shape = 'u8[2048]{0}', space=vmem, size = 0x800, scoped, tag = 'input window, operand 1, single buffered']
    #allocation4 [shape = 's32[1]{0}', space=sflag, size = 0x4, scoped, tag = 'scoped memory for tpu_custom_call.1']
    #allocation5 [shape = 's32[1]{0}', space=sflag, size = 0x4, scoped, tag = 'scoped memory for tpu_custom_call.1']
    #allocation6 [shape = 'u8[512]{0}', space=vmem, size = 0x400, scoped, tag = 'input window, operand 2, single buffered']
    #allocation7 [shape = 's32[1]{0}', space=sflag, size = 0x4, scoped, tag = 'scoped memory for tpu_custom_call.1']
    #allocation8 [shape = 'u8[16384]{0}', space=vmem, size = 0x4000, scoped, tag = 'input window, operand 3, single buffered']
    #allocation9 [shape = 'u8[512]{0}', space=vmem, size = 0x400, scoped, tag = 'input window, operand 4, single buffered']
    #allocation10 [shape = 's32[1]{0}', space=sflag, size = 0x4, scoped, tag = 'scoped memory for tpu_custom_call.1']
    #allocation11 [shape = 'u8[262144]{0}', space=vmem, size = 0x40000, scoped, tag = 'input window, operand 5, single buffered']
    #allocation12 [shape = 'u8[4096]{0}', space=vmem, size = 0x1000, scoped, tag = 'input window, operand 6, single buffered']
    #allocation13 [shape = 's32[1]{0}', space=sflag, size = 0x4, scoped, tag = 'scoped memory for tpu_custom_call.1']
    #allocation14 [shape = 'u8[2097152]{0}', space=vmem, size = 0x200000, scoped, tag = 'input window, operand 7, single buffered']
    #allocation15 [shape = 'u8[2048]{0}', space=vmem, size = 0x800, scoped, tag = 'input window, operand 8, single buffered']
    #allocation16 [shape = 's32[1]{0}', space=sflag, size = 0x4, scoped, tag = 'scoped memory for tpu_custom_call.1']
    #allocation17 [shape = 'u8[524288]{0}', space=vmem, size = 0x80000, scoped, tag = 'input window, operand 9, single buffered']
    #allocation18 [shape = 'u8[1024]{0}', space=vmem, size = 0x400, scoped, tag = 'input window, operand 10, single buffered']
    #allocation19 [shape = 's32[1]{0}', space=sflag, size = 0x4, scoped, tag = 'scoped memory for tpu_custom_call.1']
    #allocation20 [shape = 'u8[512]{0}', space=vmem, size = 0x400, scoped, tag = 'input window, operand 12, single buffered']
    #allocation21 [shape = 'u8[1024]{0}', space=vmem, size = 0x400, scoped, tag = 'output window, operand 0, single buffered']
    %18 = vsyncpa [#allocation4], 0
    %19 = vsyncpa [#allocation7], 0
    %20 = vsyncpa [#allocation10], 0
    %21 = vsyncpa [#allocation13], 0
    %22 = vsyncpa [#allocation16], 0
    %23 = vsyncpa [#allocation19], 0
    %24 = vsyncpa [#allocation5], 0
    // Predicated region
    $region2: #{tpu_custom_call.1} parent=1 // pred_check
      _
    $region3: #{tpu_custom_call.1} parent=1 // pred_check_branch
      %26 = sbr.rel (0) target = $region5
    $region4: #{tpu_custom_call.1} parent=1 // pred_region
      _
    $region5: #{tpu_custom_call.1} parent=1 // pred_fallthru
      _
    // Predicated region
    $region6: #{tpu_custom_call.1} parent=1 // pred_check
      _
    $region7: #{tpu_custom_call.1} parent=1 // pred_check_branch
      %28 = sbr.rel (0) target = $region9
    $region8: #{tpu_custom_call.1} parent=1 // pred_region
      %s30 = ssub.s32 64, 64
      %31 = vsyncadd [#allocation4], %s30
      %s33 = sshll.u32 [#allocation3], 4
      %s34 = int_to_ptr.vmem [resolvable:$true] %s33
      %36 = dma.hbm_to_vmem [thread:$0]  %s1, 64, %s34, [#allocation4]
    $region9: #{tpu_custom_call.1} parent=1 // pred_fallthru
      _
    // Predicated region
    $region10: #{tpu_custom_call.1} parent=1 // pred_check
      _
    $region11: #{tpu_custom_call.1} parent=1 // pred_check_branch
      %38 = sbr.rel (0) target = $region13
    $region12: #{tpu_custom_call.1} parent=1 // pred_region
      %s40 = ssub.s32 16, 16
      %41 = vsyncadd [#allocation7], %s40
      %s43 = sshll.u32 [#allocation6], 4
      %s44 = int_to_ptr.vmem [resolvable:$true] %s43
      %46 = dma.hbm_to_vmem [thread:$0]  %s2, 16, %s44, [#allocation7]
    $region13: #{tpu_custom_call.1} parent=1 // pred_fallthru
      _
    // Predicated region
    $region14: #{tpu_custom_call.1} parent=1 // pred_check
      _
    $region15: #{tpu_custom_call.1} parent=1 // pred_check_branch
      %48 = sbr.rel (0) target = $region17
    $region16: #{tpu_custom_call.1} parent=1 // pred_region
      %s50 = ssub.s32 512, 512
      %51 = vsyncadd [#allocation7], %s50
      %s52 = sshll.u32 [#allocation8], 4
      %s53 = int_to_ptr.vmem [resolvable:$true] %s52
      %58 = dma.hbm_to_vmem [thread:$0]  %s3, 512, %s53, [#allocation7], 64, 64, 4
    $region17: #{tpu_custom_call.1} parent=1 // pred_fallthru
      _
    // Predicated region
    $region18: #{tpu_custom_call.1} parent=1 // pred_check
      _
    $region19: #{tpu_custom_call.1} parent=1 // pred_check_branch
      %60 = sbr.rel (0) target = $region21
    $region20: #{tpu_custom_call.1} parent=1 // pred_region
      %s62 = ssub.s32 16, 16
      %63 = vsyncadd [#allocation10], %s62
      %s65 = sshll.u32 [#allocation9], 4
      %s66 = int_to_ptr.vmem [resolvable:$true] %s65
      %68 = dma.hbm_to_vmem [thread:$0]  %s4, 16, %s66, [#allocation10]
    $region21: #{tpu_custom_call.1} parent=1 // pred_fallthru
      _
    // Predicated region
    $region22: #{tpu_custom_call.1} parent=1 // pred_check
      _
    $region23: #{tpu_custom_call.1} parent=1 // pred_check_branch
      %70 = sbr.rel (0) target = $region25
    $region24: #{tpu_custom_call.1} parent=1 // pred_region
      %s72 = ssub.s32 8192, 8192
      %73 = vsyncadd [#allocation10], %s72
      %s74 = sshll.u32 [#allocation11], 4
      %s75 = int_to_ptr.vmem [resolvable:$true] %s74
      %80 = dma.hbm_to_vmem [thread:$0]  %s5, 8192, %s75, [#allocation10], 512, 512, 32
    $region25: #{tpu_custom_call.1} parent=1 // pred_fallthru
      _
    // Predicated region
    $region26: #{tpu_custom_call.1} parent=1 // pred_check
      _
    $region27: #{tpu_custom_call.1} parent=1 // pred_check_branch
      %82 = sbr.rel (0) target = $region29
    $region28: #{tpu_custom_call.1} parent=1 // pred_region
      %s84 = ssub.s32 128, 128
      %85 = vsyncadd [#allocation13], %s84
      %s87 = sshll.u32 [#allocation12], 4
      %s88 = int_to_ptr.vmem [resolvable:$true] %s87
      %90 = dma.hbm_to_vmem [thread:$0]  %s6, 128, %s88, [#allocation13]
    $region29: #{tpu_custom_call.1} parent=1 // pred_fallthru
      _
    // Predicated region
    $region30: #{tpu_custom_call.1} parent=1 // pred_check
      _
    $region31: #{tpu_custom_call.1} parent=1 // pred_check_branch
      %92 = sbr.rel (0) target = $region33
    $region32: #{tpu_custom_call.1} parent=1 // pred_region
      %s94 = ssub.s32 65536, 65536
      %95 = vsyncadd [#allocation13], %s94
      %s96 = sshll.u32 [#allocation14], 4
      %s97 = int_to_ptr.vmem [resolvable:$true] %s96
      %102 = dma.hbm_to_vmem [thread:$0]  %s7, 65536, %s97, [#allocation13], 512, 512, 32
    $region33: #{tpu_custom_call.1} parent=1 // pred_fallthru
      _
    // Predicated region
    $region34: #{tpu_custom_call.1} parent=1 // pred_check
      _
    $region35: #{tpu_custom_call.1} parent=1 // pred_check_branch
      %104 = sbr.rel (0) target = $region37
    $region36: #{tpu_custom_call.1} parent=1 // pred_region
      %s106 = ssub.s32 64, 64
      %107 = vsyncadd [#allocation16], %s106
      %s109 = sshll.u32 [#allocation15], 4
      %s110 = int_to_ptr.vmem [resolvable:$true] %s109
      %112 = dma.hbm_to_vmem [thread:$0]  %s8, 64, %s110, [#allocation16]
    $region37: #{tpu_custom_call.1} parent=1 // pred_fallthru
      _
    // Predicated region
    $region38: #{tpu_custom_call.1} parent=1 // pred_check
      _
    $region39: #{tpu_custom_call.1} parent=1 // pred_check_branch
      %114 = sbr.rel (0) target = $region41
    $region40: #{tpu_custom_call.1} parent=1 // pred_region
      %s116 = ssub.s32 16384, 16384
      %117 = vsyncadd [#allocation16], %s116
      %s118 = sshll.u32 [#allocation17], 4
      %s119 = int_to_ptr.vmem [resolvable:$true] %s118
      %124 = dma.hbm_to_vmem [thread:$0]  %s9, 16384, %s119, [#allocation16], 256, 256, 16
    $region41: #{tpu_custom_call.1} parent=1 // pred_fallthru
      _
    // Predicated region
    $region42: #{tpu_custom_call.1} parent=1 // pred_check
      _
    $region43: #{tpu_custom_call.1} parent=1 // pred_check_branch
      %126 = sbr.rel (0) target = $region45
    $region44: #{tpu_custom_call.1} parent=1 // pred_region
      %s128 = ssub.s32 32, 32
      %129 = vsyncadd [#allocation19], %s128
      %s131 = sshll.u32 [#allocation18], 4
      %s132 = int_to_ptr.vmem [resolvable:$true] %s131
      %134 = dma.hbm_to_vmem [thread:$0]  %s10, 32, %s132, [#allocation19]
    $region45: #{tpu_custom_call.1} parent=1 // pred_fallthru
      _
    // Predicated region
    $region46: #{tpu_custom_call.1} parent=1 // pred_check
      _
    $region47: #{tpu_custom_call.1} parent=1 // pred_check_branch
      %136 = sbr.rel (0) target = $region49
    $region48: #{tpu_custom_call.1} parent=1 // pred_region
      _
    $region49: #{tpu_custom_call.1} parent=1 // pred_fallthru
      _
    // Predicated region
    $region50: #{tpu_custom_call.1} parent=1 // pred_check
      _
    $region51: #{tpu_custom_call.1} parent=1 // pred_check_branch
      %138 = sbr.rel (0) target = $region53
    $region52: #{tpu_custom_call.1} parent=1 // pred_region
      %s140 = ssub.s32 16, 16
      %141 = vsyncadd [#allocation19], %s140
      %s143 = sshll.u32 [#allocation20], 4
      %s144 = int_to_ptr.vmem [resolvable:$true] %s143
      %146 = dma.hbm_to_vmem [thread:$0]  %s12, 16, %s144, [#allocation19]
    $region53: #{tpu_custom_call.1} parent=1 // pred_fallthru
      _
    // Predicated region
    $region54: #{tpu_custom_call.1} parent=1 // pred_check
      _
    $region55: #{tpu_custom_call.1} parent=1 // pred_check_branch
      %148 = sbr.rel (0) target = $region57
    $region56: #{tpu_custom_call.1} parent=1 // pred_region
      %149 = dma.done [#allocation4], 64
    $region57: #{tpu_custom_call.1} parent=1 // pred_fallthru
      _
    // Predicated region
    $region58: #{tpu_custom_call.1} parent=1 // pred_check
      _
    $region59: #{tpu_custom_call.1} parent=1 // pred_check_branch
      %151 = sbr.rel (0) target = $region61
    $region60: #{tpu_custom_call.1} parent=1 // pred_region
      %152 = dma.done [#allocation7], 16
    $region61: #{tpu_custom_call.1} parent=1 // pred_fallthru
      _
    // Predicated region
    $region62: #{tpu_custom_call.1} parent=1 // pred_check
      _
    $region63: #{tpu_custom_call.1} parent=1 // pred_check_branch
      %154 = sbr.rel (0) target = $region65
    $region64: #{tpu_custom_call.1} parent=1 // pred_region
      %155 = dma.done [#allocation7], 512
    $region65: #{tpu_custom_call.1} parent=1 // pred_fallthru
      _
    // Predicated region
    $region66: #{tpu_custom_call.1} parent=1 // pred_check
      _
    $region67: #{tpu_custom_call.1} parent=1 // pred_check_branch
      %157 = sbr.rel (0) target = $region69
    $region68: #{tpu_custom_call.1} parent=1 // pred_region
      %158 = dma.done [#allocation10], 16
    $region69: #{tpu_custom_call.1} parent=1 // pred_fallthru
      _
    // Predicated region
    $region70: #{tpu_custom_call.1} parent=1 // pred_check
      _
    $region71: #{tpu_custom_call.1} parent=1 // pred_check_branch
      %160 = sbr.rel (0) target = $region73
    $region72: #{tpu_custom_call.1} parent=1 // pred_region
      %161 = dma.done [#allocation10], 8192
    $region73: #{tpu_custom_call.1} parent=1 // pred_fallthru
      _
    // Predicated region
    $region74: #{tpu_custom_call.1} parent=1 // pred_check
      _
    $region75: #{tpu_custom_call.1} parent=1 // pred_check_branch
      %163 = sbr.rel (0) target = $region77
    $region76: #{tpu_custom_call.1} parent=1 // pred_region
      %164 = dma.done [#allocation13], 128
    $region77: #{tpu_custom_call.1} parent=1 // pred_fallthru
      _
    // Predicated region
    $region78: #{tpu_custom_call.1} parent=1 // pred_check
      _
    $region79: #{tpu_custom_call.1} parent=1 // pred_check_branch
      %166 = sbr.rel (0) target = $region81
    $region80: #{tpu_custom_call.1} parent=1 // pred_region
      %167 = dma.done [#allocation13], 65536
    $region81: #{tpu_custom_call.1} parent=1 // pred_fallthru
      _
    // Predicated region
    $region82: #{tpu_custom_call.1} parent=1 // pred_check
      _
    $region83: #{tpu_custom_call.1} parent=1 // pred_check_branch
      %169 = sbr.rel (0) target = $region85
    $region84: #{tpu_custom_call.1} parent=1 // pred_region
      %170 = dma.done [#allocation16], 64
    $region85: #{tpu_custom_call.1} parent=1 // pred_fallthru
      _
    // Predicated region
    $region86: #{tpu_custom_call.1} parent=1 // pred_check
      _
    $region87: #{tpu_custom_call.1} parent=1 // pred_check_branch
      %172 = sbr.rel (0) target = $region89
    $region88: #{tpu_custom_call.1} parent=1 // pred_region
      %173 = dma.done [#allocation16], 16384
    $region89: #{tpu_custom_call.1} parent=1 // pred_fallthru
      _
    // Predicated region
    $region90: #{tpu_custom_call.1} parent=1 // pred_check
      _
    $region91: #{tpu_custom_call.1} parent=1 // pred_check_branch
      %175 = sbr.rel (0) target = $region93
    $region92: #{tpu_custom_call.1} parent=1 // pred_region
      %176 = dma.done [#allocation19], 32
    $region93: #{tpu_custom_call.1} parent=1 // pred_fallthru
      _
    // Predicated region
    $region94: #{tpu_custom_call.1} parent=1 // pred_check
      _
    $region95: #{tpu_custom_call.1} parent=1 // pred_check_branch
      %178 = sbr.rel (0) target = $region97
    $region96: #{tpu_custom_call.1} parent=1 // pred_region
      %179 = dma.done [#allocation19], 16
    $region97: #{tpu_custom_call.1} parent=1 // pred_fallthru
      _
    %v181 = vld [vmem:[%s0] sm:$0xf]
    %v182 = vld [vmem:[%s0 + $0x4] sm:$0xf]
    %v183 = vld [vmem:[%s0 + $0x8] sm:$0xf]
    %v184 = vld [vmem:[%s0 + $0xc] sm:$0xf]
    %v185 = vld [vmem:[#allocation3] sm:$0xf]
    %v186 = vld [vmem:[#allocation6] sm:$0x1]
    %v188 = vlaneseq
    %v189 = vshrl.u32 %v188, 7
    %v190 = vsub.s32 0, %v189
    %v191 = vrot.slane %v186, %v190
    %v197 = vunpack.c.l.b16 %v181
    %v198 = vunpack.c.l.b16 %v182
    %v199 = vunpack.c.l.b16 %v183
    %v200 = vunpack.c.l.b16 %v184
    %v201 = vpack.c.b16 %v198, %v197
    %v202 = vpack.c.b16 %v200, %v199
    %vm203 = vcmask 64512
    %v205 = vsel %vm203, %v201, 0
    %v208 = vsel %vm203, %v202, 0
    %vm210 = vcmask 1043456
    %v212 = vsel %vm210, %v185, 0
    %214 = vmatprep.subr.bf16.mxu0 0
    %215 = vmatpush1.bf16.msra.mxu0 %v212
    %216 = vmatprep.subr.bf16.mxu0 0
    %217 = vmatpush1.bf16.msra.mxu0 0
    %218 = vmatprep.subr.bf16.mxu0 0
    %219 = vmatpush1.bf16.msra.mxu0 0
    %220 = vmatprep.subr.bf16.mxu0 0
    %221 = vmatpush1.bf16.msra.mxu0 0
    %222 = vmatprep.subr.bf16.mxu0 0
    %223 = vmatpush1.bf16.msra.mxu0 0
    %224 = vmatprep.subr.bf16.mxu0 0
    %225 = vmatpush1.bf16.msra.mxu0 0
    %226 = vmatprep.subr.bf16.mxu0 0
    %227 = vmatpush1.bf16.msra.mxu0 0
    %228 = vmatprep.subr.bf16.mxu0 0
    %229 = vmatpush1.bf16.msra.mxu0 0
    %230 = vmatprep.subr.bf16.mxu0 0
    %231 = vmatpush1.bf16.msra.mxu0 0
    %232 = vmatprep.subr.bf16.mxu0 0
    %233 = vmatpush1.bf16.msra.mxu0 0
    %234 = vmatprep.subr.bf16.mxu0 0
    %235 = vmatpush1.bf16.msra.mxu0 0
    %236 = vmatprep.subr.bf16.mxu0 0
    %237 = vmatpush1.bf16.msra.mxu0 0
    %238 = vmatprep.subr.bf16.mxu0 0
    %239 = vmatpush1.bf16.msra.mxu0 0
    %240 = vmatprep.subr.bf16.mxu0 0
    %241 = vmatpush1.bf16.msra.mxu0 0
    %242 = vmatprep.subr.bf16.mxu0 0
    %243 = vmatpush1.bf16.msra.mxu0 0
    %244 = vmatprep.subr.bf16.mxu0 0
    %245 = vmatpush1.bf16.msra.mxu0 0
    %246 = vmatprep.mubr.bf16.mxu0 0
    %247 = vmatmul.mubr.bf16.gmra.mrb[0].mxu0 %v205
    %v248 = vpop.f32.mrb[0].mxu0
    %v249 = vadd.f32 %v191, %v248
    %v250 = vpop.f32.mrb[0].mxu0
    %v251 = vpop.f32.mrb[0].mxu0
    %v252 = vadd.f32 %v191, %v251
    %v253 = vpop.f32.mrb[0].mxu0
    %254 = vmatprep.mubr.bf16.mxu0 0
    %255 = vmatmul.mubr.bf16.gmra.mrb[0].mxu0 %v208
    %v256 = vpop.f32.mrb[0].mxu0
    %v257 = vadd.f32 %v191, %v256
    %v258 = vpop.f32.mrb[0].mxu0
    %v259 = vpop.f32.mrb[0].mxu0
    %v260 = vadd.f32 %v191, %v259
    %v261 = vpop.f32.mrb[0].mxu0
    %262 = vdwg.mxu0
    %v263 = vmax.f32 %v249, 0.0
    %v264 = vmax.f32 %v252, 0.0
    %v265 = vmax.f32 %v257, 0.0
    %v266 = vmax.f32 %v260, 0.0
    %v267 = vpack.c.bf16 %v264, %v263
    %v268 = vpack.c.bf16 %v266, %v265
    %v269 = vld [vmem:[#allocation8] sm:$0xf]
    %v270 = vld [vmem:[#allocation8 + $0x4] sm:$0xf]
    %v271 = vld [vmem:[#allocation8 + $0x8] sm:$0xf]
    %v272 = vld [vmem:[#allocation8 + $0xc] sm:$0xf]
    %v273 = vld [vmem:[#allocation8 + $0x10] sm:$0xf]
    %v274 = vld [vmem:[#allocation8 + $0x14] sm:$0xf]
    %v275 = vld [vmem:[#allocation8 + $0x18] sm:$0xf]
    %v276 = vld [vmem:[#allocation8 + $0x1c] sm:$0xf]
    %v277 = vld [vmem:[#allocation9] sm:$0x1]
    %v279 = vlaneseq
    %v280 = vshrl.u32 %v279, 7
    %v281 = vsub.s32 0, %v280
    %v282 = vrot.slane %v277, %v281
    %v292 = vunpack.c.l.b16 %v269
    %v293 = vunpack.c.l.b16 %v270
    %v294 = vunpack.c.l.b16 %v271
    %v295 = vunpack.c.l.b16 %v272
    %v296 = vunpack.c.l.b16 %v273
    %v297 = vunpack.c.l.b16 %v274
    %v298 = vunpack.c.l.b16 %v275
    %v299 = vunpack.c.l.b16 %v276
    %v300 = vpack.c.b16 %v293, %v292
    %v301 = vpack.c.b16 %v295, %v294
    %v302 = vpack.c.b16 %v297, %v296
    %v303 = vpack.c.b16 %v299, %v298
    %vm308 = vcmask 523264
    %v310 = vsel %vm308, %v267, 0
    %v313 = vsel %vm308, %v268, 0
    %315 = vmatprep.subr.bf16.mxu0 0
    %316 = vmatpush1.bf16.msra.mxu0 %v300
    %317 = vmatprep.subr.bf16.mxu0 0
    %318 = vmatpush1.bf16.msra.mxu0 %v301
    %319 = vmatprep.subr.bf16.mxu0 0
    %320 = vmatpush1.bf16.msra.mxu0 %v302
    %321 = vmatprep.subr.bf16.mxu0 0
    %322 = vmatpush1.bf16.msra.mxu0 %v303
    %323 = vmatprep.subr.bf16.mxu0 0
    %324 = vmatpush1.bf16.msra.mxu0 0
    %325 = vmatprep.subr.bf16.mxu0 0
    %326 = vmatpush1.bf16.msra.mxu0 0
    %327 = vmatprep.subr.bf16.mxu0 0
    %328 = vmatpush1.bf16.msra.mxu0 0
    %329 = vmatprep.subr.bf16.mxu0 0
    %330 = vmatpush1.bf16.msra.mxu0 0
    %331 = vmatprep.subr.bf16.mxu0 0
    %332 = vmatpush1.bf16.msra.mxu0 0
    %333 = vmatprep.subr.bf16.mxu0 0
    %334 = vmatpush1.bf16.msra.mxu0 0
    %335 = vmatprep.subr.bf16.mxu0 0
    %336 = vmatpush1.bf16.msra.mxu0 0
    %337 = vmatprep.subr.bf16.mxu0 0
    %338 = vmatpush1.bf16.msra.mxu0 0
    %339 = vmatprep.subr.bf16.mxu0 0
    %340 = vmatpush1.bf16.msra.mxu0 0
    %341 = vmatprep.subr.bf16.mxu0 0
    %342 = vmatpush1.bf16.msra.mxu0 0
    %343 = vmatprep.subr.bf16.mxu0 0
    %344 = vmatpush1.bf16.msra.mxu0 0
    %345 = vmatprep.subr.bf16.mxu0 0
    %346 = vmatpush1.bf16.msra.mxu0 0
    %347 = vmatprep.mubr.bf16.mxu0 0
    %348 = vmatmul.mubr.bf16.gmra.mrb[0].mxu0 %v310
    %v349 = vpop.f32.mrb[0].mxu0
    %v350 = vadd.f32 %v282, %v349
    %v351 = vpop.f32.mrb[0].mxu0
    %v352 = vpop.f32.mrb[0].mxu0
    %v353 = vadd.f32 %v282, %v352
    %v354 = vpop.f32.mrb[0].mxu0
    %355 = vmatprep.mubr.bf16.mxu0 0
    %356 = vmatmul.mubr.bf16.gmra.mrb[0].mxu0 %v313
    %v357 = vpop.f32.mrb[0].mxu0
    %v358 = vadd.f32 %v282, %v357
    %v359 = vpop.f32.mrb[0].mxu0
    %v360 = vpop.f32.mrb[0].mxu0
    %v361 = vadd.f32 %v282, %v360
    %v362 = vpop.f32.mrb[0].mxu0
    %363 = vdwg.mxu0
    %v364 = vmax.f32 %v350, 0.0
    %v365 = vmax.f32 %v353, 0.0
    %v366 = vmax.f32 %v358, 0.0
    %v367 = vmax.f32 %v361, 0.0
    %v368 = vpack.c.bf16 %v365, %v364
    %v369 = vpack.c.bf16 %v367, %v366
    %v370 = vld [vmem:[#allocation11] sm:$0xff]
    %v371 = vld [vmem:[#allocation11 + $0x8] sm:$0xff]
    %v372 = vld [vmem:[#allocation11 + $0x10] sm:$0xff]
    %v373 = vld [vmem:[#allocation11 + $0x18] sm:$0xff]
    %v374 = vld [vmem:[#allocation11 + $0x20] sm:$0xff]
    %v375 = vld [vmem:[#allocation11 + $0x28] sm:$0xff]
    %v376 = vld [vmem:[#allocation11 + $0x30] sm:$0xff]
    %v377 = vld [vmem:[#allocation11 + $0x38] sm:$0xff]
    %v378 = vld [vmem:[#allocation11 + $0x40] sm:$0xff]
    %v379 = vld [vmem:[#allocation11 + $0x48] sm:$0xff]
    %v380 = vld [vmem:[#allocation11 + $0x50] sm:$0xff]
    %v381 = vld [vmem:[#allocation11 + $0x58] sm:$0xff]
    %v382 = vld [vmem:[#allocation11 + $0x60] sm:$0xff]
    %v383 = vld [vmem:[#allocation11 + $0x68] sm:$0xff]
    %v384 = vld [vmem:[#allocation11 + $0x70] sm:$0xff]
    %v385 = vld [vmem:[#allocation11 + $0x78] sm:$0xff]
    %v386 = vld [vmem:[#allocation11 + $0x80] sm:$0xff]
    %v387 = vld [vmem:[#allocation11 + $0x88] sm:$0xff]
    %v388 = vld [vmem:[#allocation11 + $0x90] sm:$0xff]
    %v389 = vld [vmem:[#allocation11 + $0x98] sm:$0xff]
    %v390 = vld [vmem:[#allocation11 + $0xa0] sm:$0xff]
    %v391 = vld [vmem:[#allocation11 + $0xa8] sm:$0xff]
    %v392 = vld [vmem:[#allocation11 + $0xb0] sm:$0xff]
    %v393 = vld [vmem:[#allocation11 + $0xb8] sm:$0xff]
    %v394 = vld [vmem:[#allocation11 + $0xc0] sm:$0xff]
    %v395 = vld [vmem:[#allocation11 + $0xc8] sm:$0xff]
    %v396 = vld [vmem:[#allocation11 + $0xd0] sm:$0xff]
    %v397 = vld [vmem:[#allocation11 + $0xd8] sm:$0xff]
    %v398 = vld [vmem:[#allocation11 + $0xe0] sm:$0xff]
    %v399 = vld [vmem:[#allocation11 + $0xe8] sm:$0xff]
    %v400 = vld [vmem:[#allocation11 + $0xf0] sm:$0xff]
    %v401 = vld [vmem:[#allocation11 + $0xf8] sm:$0xff]
    %v402 = vld [vmem:[#allocation11 + $0x100] sm:$0xff]
    %v403 = vld [vmem:[#allocation11 + $0x108] sm:$0xff]
    %v404 = vld [vmem:[#allocation11 + $0x110] sm:$0xff]
    %v405 = vld [vmem:[#allocation11 + $0x118] sm:$0xff]
    %v406 = vld [vmem:[#allocation11 + $0x120] sm:$0xff]
    %v407 = vld [vmem:[#allocation11 + $0x128] sm:$0xff]
    %v408 = vld [vmem:[#allocation11 + $0x130] sm:$0xff]
    %v409 = vld [vmem:[#allocation11 + $0x138] sm:$0xff]
    %v410 = vld [vmem:[#allocation11 + $0x140] sm:$0xff]
    %v411 = vld [vmem:[#allocation11 + $0x148] sm:$0xff]
    %v412 = vld [vmem:[#allocation11 + $0x150] sm:$0xff]
    %v413 = vld [vmem:[#allocation11 + $0x158] sm:$0xff]
    %v414 = vld [vmem:[#allocation11 + $0x160] sm:$0xff]
    %v415 = vld [vmem:[#allocation11 + $0x168] sm:$0xff]
    %v416 = vld [vmem:[#allocation11 + $0x170] sm:$0xff]
    %v417 = vld [vmem:[#allocation11 + $0x178] sm:$0xff]
    %v418 = vld [vmem:[#allocation11 + $0x180] sm:$0xff]
    %v419 = vld [vmem:[#allocation11 + $0x188] sm:$0xff]
    %v420 = vld [vmem:[#allocation11 + $0x190] sm:$0xff]
    %v421 = vld [vmem:[#allocation11 + $0x198] sm:$0xff]
    %v422 = vld [vmem:[#allocation11 + $0x1a0] sm:$0xff]
    %v423 = vld [vmem:[#allocation11 + $0x1a8] sm:$0xff]
    %v424 = vld [vmem:[#allocation11 + $0x1b0] sm:$0xff]
    %v425 = vld [vmem:[#allocation11 + $0x1b8] sm:$0xff]
    %v426 = vld [vmem:[#allocation11 + $0x1c0] sm:$0xff]
    %v427 = vld [vmem:[#allocation11 + $0x1c8] sm:$0xff]
    %v428 = vld [vmem:[#allocation11 + $0x1d0] sm:$0xff]
    %v429 = vld [vmem:[#allocation11 + $0x1d8] sm:$0xff]
    %v430 = vld [vmem:[#allocation11 + $0x1e0] sm:$0xff]
    %v431 = vld [vmem:[#allocation11 + $0x1e8] sm:$0xff]
    %v432 = vld [vmem:[#allocation11 + $0x1f0] sm:$0xff]
    %v433 = vld [vmem:[#allocation11 + $0x1f8] sm:$0xff]
    %v434 = vld [vmem:[#allocation12] sm:$0xff]
    %v436 = vlaneseq
    %v437 = vshrl.u32 %v436, 7
    %v438 = vsub.s32 0, %v437
    %v439 = vrot.slane %v434, %v438
    %v440 = vlaneseq
    %v441 = vshrl.u32 %v440, 7
    %v442 = vsub.s32 1, %v441
    %v443 = vrot.slane %v434, %v442
    %v444 = vlaneseq
    %v445 = vshrl.u32 %v444, 7
    %v446 = vsub.s32 2, %v445
    %v447 = vrot.slane %v434, %v446
    %v448 = vlaneseq
    %v449 = vshrl.u32 %v448, 7
    %v450 = vsub.s32 3, %v449
    %v451 = vrot.slane %v434, %v450
    %v452 = vlaneseq
    %v453 = vshrl.u32 %v452, 7
    %v454 = vsub.s32 4, %v453
    %v455 = vrot.slane %v434, %v454
    %v456 = vlaneseq
    %v457 = vshrl.u32 %v456, 7
    %v458 = vsub.s32 5, %v457
    %v459 = vrot.slane %v434, %v458
    %v460 = vlaneseq
    %v461 = vshrl.u32 %v460, 7
    %v462 = vsub.s32 6, %v461
    %v463 = vrot.slane %v434, %v462
    %v464 = vlaneseq
    %v465 = vshrl.u32 %v464, 7
    %v466 = vsub.s32 7, %v465
    %v467 = vrot.slane %v434, %v466
    %v540 = vunpack.c.l.b16 %v370
    %v541 = vunpack.c.h.b16 %v370
    %v542 = vunpack.c.l.b16 %v371
    %v543 = vunpack.c.h.b16 %v371
    %v544 = vunpack.c.l.b16 %v372
    %v545 = vunpack.c.h.b16 %v372
    %v546 = vunpack.c.l.b16 %v373
    %v547 = vunpack.c.h.b16 %v373
    %v548 = vunpack.c.l.b16 %v374
    %v549 = vunpack.c.h.b16 %v374
    %v550 = vunpack.c.l.b16 %v375
    %v551 = vunpack.c.h.b16 %v375
    %v552 = vunpack.c.l.b16 %v376
    %v553 = vunpack.c.h.b16 %v376
    %v554 = vunpack.c.l.b16 %v377
    %v555 = vunpack.c.h.b16 %v377
    %v556 = vunpack.c.l.b16 %v378
    %v557 = vunpack.c.h.b16 %v378
    %v558 = vunpack.c.l.b16 %v379
    %v559 = vunpack.c.h.b16 %v379
    %v560 = vunpack.c.l.b16 %v380
    %v561 = vunpack.c.h.b16 %v380
    %v562 = vunpack.c.l.b16 %v381
    %v563 = vunpack.c.h.b16 %v381
    %v564 = vunpack.c.l.b16 %v382
    %v565 = vunpack.c.h.b16 %v382
    %v566 = vunpack.c.l.b16 %v383
    %v567 = vunpack.c.h.b16 %v383
    %v568 = vunpack.c.l.b16 %v384
    %v569 = vunpack.c.h.b16 %v384
    %v570 = vunpack.c.l.b16 %v385
    %v571 = vunpack.c.h.b16 %v385
    %v572 = vunpack.c.l.b16 %v386
    %v573 = vunpack.c.h.b16 %v386
    %v574 = vunpack.c.l.b16 %v387
    %v575 = vunpack.c.h.b16 %v387
    %v576 = vunpack.c.l.b16 %v388
    %v577 = vunpack.c.h.b16 %v388
    %v578 = vunpack.c.l.b16 %v389
    %v579 = vunpack.c.h.b16 %v389
    %v580 = vunpack.c.l.b16 %v390
    %v581 = vunpack.c.h.b16 %v390
    %v582 = vunpack.c.l.b16 %v391
    %v583 = vunpack.c.h.b16 %v391
    %v584 = vunpack.c.l.b16 %v392
    %v585 = vunpack.c.h.b16 %v392
    %v586 = vunpack.c.l.b16 %v393
    %v587 = vunpack.c.h.b16 %v393
    %v588 = vunpack.c.l.b16 %v394
    %v589 = vunpack.c.h.b16 %v394
    %v590 = vunpack.c.l.b16 %v395
    %v591 = vunpack.c.h.b16 %v395
    %v592 = vunpack.c.l.b16 %v396
    %v593 = vunpack.c.h.b16 %v396
    %v594 = vunpack.c.l.b16 %v397
    %v595 = vunpack.c.h.b16 %v397
    %v596 = vunpack.c.l.b16 %v398
    %v597 = vunpack.c.h.b16 %v398
    %v598 = vunpack.c.l.b16 %v399
    %v599 = vunpack.c.h.b16 %v399
    %v600 = vunpack.c.l.b16 %v400
    %v601 = vunpack.c.h.b16 %v400
    %v602 = vunpack.c.l.b16 %v401
    %v603 = vunpack.c.h.b16 %v401
    %v604 = vunpack.c.l.b16 %v402
    %v605 = vunpack.c.h.b16 %v402
    %v606 = vunpack.c.l.b16 %v403
    %v607 = vunpack.c.h.b16 %v403
    %v608 = vunpack.c.l.b16 %v404
    %v609 = vunpack.c.h.b16 %v404
    %v610 = vunpack.c.l.b16 %v405
    %v611 = vunpack.c.h.b16 %v405
    %v612 = vunpack.c.l.b16 %v406
    %v613 = vunpack.c.h.b16 %v406
    %v614 = vunpack.c.l.b16 %v407
    %v615 = vunpack.c.h.b16 %v407
    %v616 = vunpack.c.l.b16 %v408
    %v617 = vunpack.c.h.b16 %v408
    %v618 = vunpack.c.l.b16 %v409
    %v619 = vunpack.c.h.b16 %v409
    %v620 = vunpack.c.l.b16 %v410
    %v621 = vunpack.c.h.b16 %v410
    %v622 = vunpack.c.l.b16 %v411
    %v623 = vunpack.c.h.b16 %v411
    %v624 = vunpack.c.l.b16 %v412
    %v625 = vunpack.c.h.b16 %v412
    %v626 = vunpack.c.l.b16 %v413
    %v627 = vunpack.c.h.b16 %v413
    %v628 = vunpack.c.l.b16 %v414
    %v629 = vunpack.c.h.b16 %v414
    %v630 = vunpack.c.l.b16 %v415
    %v631 = vunpack.c.h.b16 %v415
    %v632 = vunpack.c.l.b16 %v416
    %v633 = vunpack.c.h.b16 %v416
    %v634 = vunpack.c.l.b16 %v417
    %v635 = vunpack.c.h.b16 %v417
    %v636 = vunpack.c.l.b16 %v418
    %v637 = vunpack.c.h.b16 %v418
    %v638 = vunpack.c.l.b16 %v419
    %v639 = vunpack.c.h.b16 %v419
    %v640 = vunpack.c.l.b16 %v420
    %v641 = vunpack.c.h.b16 %v420
    %v642 = vunpack.c.l.b16 %v421
    %v643 = vunpack.c.h.b16 %v421
    %v644 = vunpack.c.l.b16 %v422
    %v645 = vunpack.c.h.b16 %v422
    %v646 = vunpack.c.l.b16 %v423
    %v647 = vunpack.c.h.b16 %v423
    %v648 = vunpack.c.l.b16 %v424
    %v649 = vunpack.c.h.b16 %v424
    %v650 = vunpack.c.l.b16 %v425
    %v651 = vunpack.c.h.b16 %v425
    %v652 = vunpack.c.l.b16 %v426
    %v653 = vunpack.c.h.b16 %v426
    %v654 = vunpack.c.l.b16 %v427
    %v655 = vunpack.c.h.b16 %v427
    %v656 = vunpack.c.l.b16 %v428
    %v657 = vunpack.c.h.b16 %v428
    %v658 = vunpack.c.l.b16 %v429
    %v659 = vunpack.c.h.b16 %v429
    %v660 = vunpack.c.l.b16 %v430
    %v661 = vunpack.c.h.b16 %v430
    %v662 = vunpack.c.l.b16 %v431
    %v663 = vunpack.c.h.b16 %v431
    %v664 = vunpack.c.l.b16 %v432
    %v665 = vunpack.c.h.b16 %v432
    %v666 = vunpack.c.l.b16 %v433
    %v667 = vunpack.c.h.b16 %v433
    %v668 = vpack.c.b16 %v548, %v540
    %v669 = vpack.c.b16 %v549, %v541
    %v670 = vpack.c.b16 %v550, %v542
    %v671 = vpack.c.b16 %v551, %v543
    %v672 = vpack.c.b16 %v552, %v544
    %v673 = vpack.c.b16 %v553, %v545
    %v674 = vpack.c.b16 %v554, %v546
    %v675 = vpack.c.b16 %v555, %v547
    %v676 = vpack.c.b16 %v564, %v556
    %v677 = vpack.c.b16 %v565, %v557
    %v678 = vpack.c.b16 %v566, %v558
    %v679 = vpack.c.b16 %v567, %v559
    %v680 = vpack.c.b16 %v568, %v560
    %v681 = vpack.c.b16 %v569, %v561
    %v682 = vpack.c.b16 %v570, %v562
    %v683 = vpack.c.b16 %v571, %v563
    %v684 = vpack.c.b16 %v580, %v572
    %v685 = vpack.c.b16 %v581, %v573
    %v686 = vpack.c.b16 %v582, %v574
    %v687 = vpack.c.b16 %v583, %v575
    %v688 = vpack.c.b16 %v584, %v576
    %v689 = vpack.c.b16 %v585, %v577
    %v690 = vpack.c.b16 %v586, %v578
    %v691 = vpack.c.b16 %v587, %v579
    %v692 = vpack.c.b16 %v596, %v588
    %v693 = vpack.c.b16 %v597, %v589
    %v694 = vpack.c.b16 %v598, %v590
    %v695 = vpack.c.b16 %v599, %v591
    %v696 = vpack.c.b16 %v600, %v592
    %v697 = vpack.c.b16 %v601, %v593
    %v698 = vpack.c.b16 %v602, %v594
    %v699 = vpack.c.b16 %v603, %v595
    %v700 = vpack.c.b16 %v612, %v604
    %v701 = vpack.c.b16 %v613, %v605
    %v702 = vpack.c.b16 %v614, %v606
    %v703 = vpack.c.b16 %v615, %v607
    %v704 = vpack.c.b16 %v616, %v608
    %v705 = vpack.c.b16 %v617, %v609
    %v706 = vpack.c.b16 %v618, %v610
    %v707 = vpack.c.b16 %v619, %v611
    %v708 = vpack.c.b16 %v628, %v620
    %v709 = vpack.c.b16 %v629, %v621
    %v710 = vpack.c.b16 %v630, %v622
    %v711 = vpack.c.b16 %v631, %v623
    %v712 = vpack.c.b16 %v632, %v624
    %v713 = vpack.c.b16 %v633, %v625
    %v714 = vpack.c.b16 %v634, %v626
    %v715 = vpack.c.b16 %v635, %v627
    %v716 = vpack.c.b16 %v644, %v636
    %v717 = vpack.c.b16 %v645, %v637
    %v718 = vpack.c.b16 %v646, %v638
    %v719 = vpack.c.b16 %v647, %v639
    %v720 = vpack.c.b16 %v648, %v640
    %v721 = vpack.c.b16 %v649, %v641
    %v722 = vpack.c.b16 %v650, %v642
    %v723 = vpack.c.b16 %v651, %v643
    %v724 = vpack.c.b16 %v660, %v652
    %v725 = vpack.c.b16 %v661, %v653
    %v726 = vpack.c.b16 %v662, %v654
    %v727 = vpack.c.b16 %v663, %v655
    %v728 = vpack.c.b16 %v664, %v656
    %v729 = vpack.c.b16 %v665, %v657
    %v730 = vpack.c.b16 %v666, %v658
    %v731 = vpack.c.b16 %v667, %v659
    %796 = vmatprep.subr.bf16.mxu0 %v669
    %797 = vmatpush1.bf16.msra.mxu0 %v668
    %798 = vmatprep.subr.bf16.mxu0 %v677
    %799 = vmatpush1.bf16.msra.mxu0 %v676
    %800 = vmatprep.subr.bf16.mxu0 %v685
    %801 = vmatpush1.bf16.msra.mxu0 %v684
    %802 = vmatprep.subr.bf16.mxu0 %v693
    %803 = vmatpush1.bf16.msra.mxu0 %v692
    %804 = vmatprep.subr.bf16.mxu0 %v701
    %805 = vmatpush1.bf16.msra.mxu0 %v700
    %806 = vmatprep.subr.bf16.mxu0 %v709
    %807 = vmatpush1.bf16.msra.mxu0 %v708
    %808 = vmatprep.subr.bf16.mxu0 %v717
    %809 = vmatpush1.bf16.msra.mxu0 %v716
    %810 = vmatprep.subr.bf16.mxu0 %v725
    %811 = vmatpush1.bf16.msra.mxu0 %v724
    %812 = vmatprep.subr.bf16.mxu0 0
    %813 = vmatpush1.bf16.msra.mxu0 0
    %814 = vmatprep.subr.bf16.mxu0 0
    %815 = vmatpush1.bf16.msra.mxu0 0
    %816 = vmatprep.subr.bf16.mxu0 0
    %817 = vmatpush1.bf16.msra.mxu0 0
    %818 = vmatprep.subr.bf16.mxu0 0
    %819 = vmatpush1.bf16.msra.mxu0 0
    %820 = vmatprep.subr.bf16.mxu0 0
    %821 = vmatpush1.bf16.msra.mxu0 0
    %822 = vmatprep.subr.bf16.mxu0 0
    %823 = vmatpush1.bf16.msra.mxu0 0
    %824 = vmatprep.subr.bf16.mxu0 0
    %825 = vmatpush1.bf16.msra.mxu0 0
    %826 = vmatprep.subr.bf16.mxu0 0
    %827 = vmatpush1.bf16.msra.mxu0 0
    %828 = vmatprep.mubr.bf16.mxu0 0
    %829 = vmatmul.mubr.bf16.gmra.mrb[0].mxu0 %v368
    %v830 = vpop.f32.mrb[0].mxu0
    %v831 = vadd.f32 %v439, %v830
    %v832 = vpop.f32.mrb[0].mxu0
    %v833 = vadd.f32 %v443, %v832
    %v834 = vpop.f32.mrb[0].mxu0
    %v835 = vadd.f32 %v439, %v834
    %v836 = vpop.f32.mrb[0].mxu0
    %v837 = vadd.f32 %v443, %v836
    %838 = vmatprep.mubr.bf16.mxu0 0
    %839 = vmatmul.mubr.bf16.gmra.mrb[0].mxu0 %v369
    %v840 = vpop.f32.mrb[0].mxu0
    %v841 = vadd.f32 %v439, %v840
    %v842 = vpop.f32.mrb[0].mxu0
    %v843 = vadd.f32 %v443, %v842
    %v844 = vpop.f32.mrb[0].mxu0
    %v845 = vadd.f32 %v439, %v844
    %v846 = vpop.f32.mrb[0].mxu0
    %v847 = vadd.f32 %v443, %v846
    %848 = vdwg.mxu0
    %849 = vmatprep.subr.bf16.mxu0 %v671
    %850 = vmatpush1.bf16.msra.mxu0 %v670
    %851 = vmatprep.subr.bf16.mxu0 %v679
    %852 = vmatpush1.bf16.msra.mxu0 %v678
    %853 = vmatprep.subr.bf16.mxu0 %v687
    %854 = vmatpush1.bf16.msra.mxu0 %v686
    %855 = vmatprep.subr.bf16.mxu0 %v695
    %856 = vmatpush1.bf16.msra.mxu0 %v694
    %857 = vmatprep.subr.bf16.mxu0 %v703
    %858 = vmatpush1.bf16.msra.mxu0 %v702
    %859 = vmatprep.subr.bf16.mxu0 %v711
    %860 = vmatpush1.bf16.msra.mxu0 %v710
    %861 = vmatprep.subr.bf16.mxu0 %v719
    %862 = vmatpush1.bf16.msra.mxu0 %v718
    %863 = vmatprep.subr.bf16.mxu0 %v727
    %864 = vmatpush1.bf16.msra.mxu0 %v726
    %865 = vmatprep.subr.bf16.mxu0 0
    %866 = vmatpush1.bf16.msra.mxu0 0
    %867 = vmatprep.subr.bf16.mxu0 0
    %868 = vmatpush1.bf16.msra.mxu0 0
    %869 = vmatprep.subr.bf16.mxu0 0
    %870 = vmatpush1.bf16.msra.mxu0 0
    %871 = vmatprep.subr.bf16.mxu0 0
    %872 = vmatpush1.bf16.msra.mxu0 0
    %873 = vmatprep.subr.bf16.mxu0 0
    %874 = vmatpush1.bf16.msra.mxu0 0
    %875 = vmatprep.subr.bf16.mxu0 0
    %876 = vmatpush1.bf16.msra.mxu0 0
    %877 = vmatprep.subr.bf16.mxu0 0
    %878 = vmatpush1.bf16.msra.mxu0 0
    %879 = vmatprep.subr.bf16.mxu0 0
    %880 = vmatpush1.bf16.msra.mxu0 0
    %881 = vmatprep.mubr.bf16.mxu0 0
    %882 = vmatmul.mubr.bf16.gmra.mrb[0].mxu0 %v368
    %v883 = vpop.f32.mrb[0].mxu0
    %v884 = vadd.f32 %v447, %v883
    %v885 = vpop.f32.mrb[0].mxu0
    %v886 = vadd.f32 %v451, %v885
    %v887 = vpop.f32.mrb[0].mxu0
    %v888 = vadd.f32 %v447, %v887
    %v889 = vpop.f32.mrb[0].mxu0
    %v890 = vadd.f32 %v451, %v889
    %891 = vmatprep.mubr.bf16.mxu0 0
    %892 = vmatmul.mubr.bf16.gmra.mrb[0].mxu0 %v369
    %v893 = vpop.f32.mrb[0].mxu0
    %v894 = vadd.f32 %v447, %v893
    %v895 = vpop.f32.mrb[0].mxu0
    %v896 = vadd.f32 %v451, %v895
    %v897 = vpop.f32.mrb[0].mxu0
    %v898 = vadd.f32 %v447, %v897
    %v899 = vpop.f32.mrb[0].mxu0
    %v900 = vadd.f32 %v451, %v899
    %901 = vdwg.mxu0
    %902 = vmatprep.subr.bf16.mxu0 %v673
    %903 = vmatpush1.bf16.msra.mxu0 %v672
    %904 = vmatprep.subr.bf16.mxu0 %v681
    %905 = vmatpush1.bf16.msra.mxu0 %v680
    %906 = vmatprep.subr.bf16.mxu0 %v689
    %907 = vmatpush1.bf16.msra.mxu0 %v688
    %908 = vmatprep.subr.bf16.mxu0 %v697
    %909 = vmatpush1.bf16.msra.mxu0 %v696
    %910 = vmatprep.subr.bf16.mxu0 %v705
    %911 = vmatpush1.bf16.msra.mxu0 %v704
    %912 = vmatprep.subr.bf16.mxu0 %v713
    %913 = vmatpush1.bf16.msra.mxu0 %v712
    %914 = vmatprep.subr.bf16.mxu0 %v721
    %915 = vmatpush1.bf16.msra.mxu0 %v720
    %916 = vmatprep.subr.bf16.mxu0 %v729
    %917 = vmatpush1.bf16.msra.mxu0 %v728
    %918 = vmatprep.subr.bf16.mxu0 0
    %919 = vmatpush1.bf16.msra.mxu0 0
    %920 = vmatprep.subr.bf16.mxu0 0
    %921 = vmatpush1.bf16.msra.mxu0 0
    %922 = vmatprep.subr.bf16.mxu0 0
    %923 = vmatpush1.bf16.msra.mxu0 0
    %924 = vmatprep.subr.bf16.mxu0 0
    %925 = vmatpush1.bf16.msra.mxu0 0
    %926 = vmatprep.subr.bf16.mxu0 0
    %927 = vmatpush1.bf16.msra.mxu0 0
    %928 = vmatprep.subr.bf16.mxu0 0
    %929 = vmatpush1.bf16.msra.mxu0 0
    %930 = vmatprep.subr.bf16.mxu0 0
    %931 = vmatpush1.bf16.msra.mxu0 0
    %932 = vmatprep.subr.bf16.mxu0 0
    %933 = vmatpush1.bf16.msra.mxu0 0
    %934 = vmatprep.mubr.bf16.mxu0 0
    %935 = vmatmul.mubr.bf16.gmra.mrb[0].mxu0 %v368
    %v936 = vpop.f32.mrb[0].mxu0
    %v937 = vadd.f32 %v455, %v936
    %v938 = vpop.f32.mrb[0].mxu0
    %v939 = vadd.f32 %v459, %v938
    %v940 = vpop.f32.mrb[0].mxu0
    %v941 = vadd.f32 %v455, %v940
    %v942 = vpop.f32.mrb[0].mxu0
    %v943 = vadd.f32 %v459, %v942
    %944 = vmatprep.mubr.bf16.mxu0 0
    %945 = vmatmul.mubr.bf16.gmra.mrb[0].mxu0 %v369
    %v946 = vpop.f32.mrb[0].mxu0
    %v947 = vadd.f32 %v455, %v946
    %v948 = vpop.f32.mrb[0].mxu0
    %v949 = vadd.f32 %v459, %v948
    %v950 = vpop.f32.mrb[0].mxu0
    %v951 = vadd.f32 %v455, %v950
    %v952 = vpop.f32.mrb[0].mxu0
    %v953 = vadd.f32 %v459, %v952
    %954 = vdwg.mxu0
    %955 = vmatprep.subr.bf16.mxu0 %v675
    %956 = vmatpush1.bf16.msra.mxu0 %v674
    %957 = vmatprep.subr.bf16.mxu0 %v683
    %958 = vmatpush1.bf16.msra.mxu0 %v682
    %959 = vmatprep.subr.bf16.mxu0 %v691
    %960 = vmatpush1.bf16.msra.mxu0 %v690
    %961 = vmatprep.subr.bf16.mxu0 %v699
    %962 = vmatpush1.bf16.msra.mxu0 %v698
    %963 = vmatprep.subr.bf16.mxu0 %v707
    %964 = vmatpush1.bf16.msra.mxu0 %v706
    %965 = vmatprep.subr.bf16.mxu0 %v715
    %966 = vmatpush1.bf16.msra.mxu0 %v714
    %967 = vmatprep.subr.bf16.mxu0 %v723
    %968 = vmatpush1.bf16.msra.mxu0 %v722
    %969 = vmatprep.subr.bf16.mxu0 %v731
    %970 = vmatpush1.bf16.msra.mxu0 %v730
    %971 = vmatprep.subr.bf16.mxu0 0
    %972 = vmatpush1.bf16.msra.mxu0 0
    %973 = vmatprep.subr.bf16.mxu0 0
    %974 = vmatpush1.bf16.msra.mxu0 0
    %975 = vmatprep.subr.bf16.mxu0 0
    %976 = vmatpush1.bf16.msra.mxu0 0
    %977 = vmatprep.subr.bf16.mxu0 0
    %978 = vmatpush1.bf16.msra.mxu0 0
    %979 = vmatprep.subr.bf16.mxu0 0
    %980 = vmatpush1.bf16.msra.mxu0 0
    %981 = vmatprep.subr.bf16.mxu0 0
    %982 = vmatpush1.bf16.msra.mxu0 0
    %983 = vmatprep.subr.bf16.mxu0 0
    %984 = vmatpush1.bf16.msra.mxu0 0
    %985 = vmatprep.subr.bf16.mxu0 0
    %986 = vmatpush1.bf16.msra.mxu0 0
    %987 = vmatprep.mubr.bf16.mxu0 0
    %988 = vmatmul.mubr.bf16.gmra.mrb[0].mxu0 %v368
    %v989 = vpop.f32.mrb[0].mxu0
    %v990 = vadd.f32 %v463, %v989
    %v991 = vpop.f32.mrb[0].mxu0
    %v992 = vadd.f32 %v467, %v991
    %v993 = vpop.f32.mrb[0].mxu0
    %v994 = vadd.f32 %v463, %v993
    %v995 = vpop.f32.mrb[0].mxu0
    %v996 = vadd.f32 %v467, %v995
    %997 = vmatprep.mubr.bf16.mxu0 0
    %998 = vmatmul.mubr.bf16.gmra.mrb[0].mxu0 %v369
    %v999 = vpop.f32.mrb[0].mxu0
    %v1000 = vadd.f32 %v463, %v999
    %v1001 = vpop.f32.mrb[0].mxu0
    %v1002 = vadd.f32 %v467, %v1001
    %v1003 = vpop.f32.mrb[0].mxu0
    %v1004 = vadd.f32 %v463, %v1003
    %v1005 = vpop.f32.mrb[0].mxu0
    %v1006 = vadd.f32 %v467, %v1005
    %1007 = vdwg.mxu0
    %v1008 = vmax.f32 %v831, 0.0
    %v1009 = vmax.f32 %v833, 0.0
    %v1010 = vmax.f32 %v884, 0.0
    %v1011 = vmax.f32 %v886, 0.0
    %v1012 = vmax.f32 %v937, 0.0
    %v1013 = vmax.f32 %v939, 0.0
    %v1014 = vmax.f32 %v990, 0.0
    %v1015 = vmax.f32 %v992, 0.0
    %v1016 = vmax.f32 %v835, 0.0
    %v1017 = vmax.f32 %v837, 0.0
    %v1018 = vmax.f32 %v888, 0.0
    %v1019 = vmax.f32 %v890, 0.0
    %v1020 = vmax.f32 %v941, 0.0
    %v1021 = vmax.f32 %v943, 0.0
    %v1022 = vmax.f32 %v994, 0.0
    %v1023 = vmax.f32 %v996, 0.0
    %v1024 = vmax.f32 %v841, 0.0
    %v1025 = vmax.f32 %v843, 0.0
    %v1026 = vmax.f32 %v894, 0.0
    %v1027 = vmax.f32 %v896, 0.0
    %v1028 = vmax.f32 %v947, 0.0
    %v1029 = vmax.f32 %v949, 0.0
    %v1030 = vmax.f32 %v1000, 0.0
    %v1031 = vmax.f32 %v1002, 0.0
    %v1032 = vmax.f32 %v845, 0.0
    %v1033 = vmax.f32 %v847, 0.0
    %v1034 = vmax.f32 %v898, 0.0
    %v1035 = vmax.f32 %v900, 0.0
    %v1036 = vmax.f32 %v951, 0.0
    %v1037 = vmax.f32 %v953, 0.0
    %v1038 = vmax.f32 %v1004, 0.0
    %v1039 = vmax.f32 %v1006, 0.0
    %v1040 = vmax.f32 %v1008, %v1016
    %v1041 = vrot.slane %v1040, 4
    %v1042 = vmax.f32 %v1040, %v1041
    %v1043 = vrot.slane %v1042, 2
    %v1044 = vmax.f32 %v1042, %v1043
    %v1045 = vrot.slane %v1044, 1
    %v1046 = vmax.f32 %v1044, %v1045
    %v1047 = vmax.f32 %v1009, %v1017
    %v1048 = vrot.slane %v1047, 4
    %v1049 = vmax.f32 %v1047, %v1048
    %v1050 = vrot.slane %v1049, 2
    %v1051 = vmax.f32 %v1049, %v1050
    %v1052 = vrot.slane %v1051, 1
    %v1053 = vmax.f32 %v1051, %v1052
    %v1054 = vmax.f32 %v1010, %v1018
    %v1055 = vrot.slane %v1054, 4
    %v1056 = vmax.f32 %v1054, %v1055
    %v1057 = vrot.slane %v1056, 2
    %v1058 = vmax.f32 %v1056, %v1057
    %v1059 = vrot.slane %v1058, 1
    %v1060 = vmax.f32 %v1058, %v1059
    %v1061 = vmax.f32 %v1011, %v1019
    %v1062 = vrot.slane %v1061, 4
    %v1063 = vmax.f32 %v1061, %v1062
    %v1064 = vrot.slane %v1063, 2
    %v1065 = vmax.f32 %v1063, %v1064
    %v1066 = vrot.slane %v1065, 1
    %v1067 = vmax.f32 %v1065, %v1066
    %v1068 = vmax.f32 %v1012, %v1020
    %v1069 = vrot.slane %v1068, 4
    %v1070 = vmax.f32 %v1068, %v1069
    %v1071 = vrot.slane %v1070, 2
    %v1072 = vmax.f32 %v1070, %v1071
    %v1073 = vrot.slane %v1072, 1
    %v1074 = vmax.f32 %v1072, %v1073
    %v1075 = vmax.f32 %v1013, %v1021
    %v1076 = vrot.slane %v1075, 4
    %v1077 = vmax.f32 %v1075, %v1076
    %v1078 = vrot.slane %v1077, 2
    %v1079 = vmax.f32 %v1077, %v1078
    %v1080 = vrot.slane %v1079, 1
    %v1081 = vmax.f32 %v1079, %v1080
    %v1082 = vmax.f32 %v1014, %v1022
    %v1083 = vrot.slane %v1082, 4
    %v1084 = vmax.f32 %v1082, %v1083
    %v1085 = vrot.slane %v1084, 2
    %v1086 = vmax.f32 %v1084, %v1085
    %v1087 = vrot.slane %v1086, 1
    %v1088 = vmax.f32 %v1086, %v1087
    %v1089 = vmax.f32 %v1015, %v1023
    %v1090 = vrot.slane %v1089, 4
    %v1091 = vmax.f32 %v1089, %v1090
    %v1092 = vrot.slane %v1091, 2
    %v1093 = vmax.f32 %v1091, %v1092
    %v1094 = vrot.slane %v1093, 1
    %v1095 = vmax.f32 %v1093, %v1094
    %v1096 = vmax.f32 %v1024, %v1032
    %v1097 = vrot.slane %v1096, 4
    %v1098 = vmax.f32 %v1096, %v1097
    %v1099 = vrot.slane %v1098, 2
    %v1100 = vmax.f32 %v1098, %v1099
    %v1101 = vrot.slane %v1100, 1
    %v1102 = vmax.f32 %v1100, %v1101
    %v1103 = vmax.f32 %v1025, %v1033
    %v1104 = vrot.slane %v1103, 4
    %v1105 = vmax.f32 %v1103, %v1104
    %v1106 = vrot.slane %v1105, 2
    %v1107 = vmax.f32 %v1105, %v1106
    %v1108 = vrot.slane %v1107, 1
    %v1109 = vmax.f32 %v1107, %v1108
    %v1110 = vmax.f32 %v1026, %v1034
    %v1111 = vrot.slane %v1110, 4
    %v1112 = vmax.f32 %v1110, %v1111
    %v1113 = vrot.slane %v1112, 2
    %v1114 = vmax.f32 %v1112, %v1113
    %v1115 = vrot.slane %v1114, 1
    %v1116 = vmax.f32 %v1114, %v1115
    %v1117 = vmax.f32 %v1027, %v1035
    %v1118 = vrot.slane %v1117, 4
    %v1119 = vmax.f32 %v1117, %v1118
    %v1120 = vrot.slane %v1119, 2
    %v1121 = vmax.f32 %v1119, %v1120
    %v1122 = vrot.slane %v1121, 1
    %v1123 = vmax.f32 %v1121, %v1122
    %v1124 = vmax.f32 %v1028, %v1036
    %v1125 = vrot.slane %v1124, 4
    %v1126 = vmax.f32 %v1124, %v1125
    %v1127 = vrot.slane %v1126, 2
    %v1128 = vmax.f32 %v1126, %v1127
    %v1129 = vrot.slane %v1128, 1
    %v1130 = vmax.f32 %v1128, %v1129
    %v1131 = vmax.f32 %v1029, %v1037
    %v1132 = vrot.slane %v1131, 4
    %v1133 = vmax.f32 %v1131, %v1132
    %v1134 = vrot.slane %v1133, 2
    %v1135 = vmax.f32 %v1133, %v1134
    %v1136 = vrot.slane %v1135, 1
    %v1137 = vmax.f32 %v1135, %v1136
    %v1138 = vmax.f32 %v1030, %v1038
    %v1139 = vrot.slane %v1138, 4
    %v1140 = vmax.f32 %v1138, %v1139
    %v1141 = vrot.slane %v1140, 2
    %v1142 = vmax.f32 %v1140, %v1141
    %v1143 = vrot.slane %v1142, 1
    %v1144 = vmax.f32 %v1142, %v1143
    %v1145 = vmax.f32 %v1031, %v1039
    %v1146 = vrot.slane %v1145, 4
    %v1147 = vmax.f32 %v1145, %v1146
    %v1148 = vrot.slane %v1147, 2
    %v1149 = vmax.f32 %v1147, %v1148
    %v1150 = vrot.slane %v1149, 1
    %v1151 = vmax.f32 %v1149, %v1150
    %p1152 = scmp.eq.s32.totalorder 0, 0
    // Predicated region
    $region98: #{tpu_custom_call.1} parent=1 // pred_check
      %p1153 = pneg %p1152
    $region99: #{tpu_custom_call.1} parent=1 // pred_check_branch
      %1155 = sbr.rel (%p1153) target = $region101
    $region100: #{tpu_custom_call.1} parent=1 // pred_region
      %1156 = vst [vmem:[#allocation2] sm:$0xff] -inf
      %1157 = vst [vmem:[#allocation2 + $0x8] sm:$0xff] -inf
    $region101: #{tpu_custom_call.1} parent=1 // pred_fallthru
      _
    %v1158 = vld [vmem:[#allocation2] sm:$0xff]
    %v1159 = vld [vmem:[#allocation2 + $0x8] sm:$0xff]
    %v1176 = vcombine.low %v1046, %v1053
    %v1177 = vcombine.low %v1060, %v1067
    %v1179 = vunpack.c.l.s4 1983009808
    %v1180 = vunpack.c.0.s8 %v1179
    %v1181 = vlaneseq
    %v1182 = vshrl.u32 %v1181, 7
    %v1183 = vsub.s32 %v1180, %v1182
    %v1184 = vrot.slane %v1176, %v1183
    %v1186 = vunpack.c.l.s4 1983009808
    %v1187 = vunpack.c.0.s8 %v1186
    %v1188 = vlaneseq
    %v1189 = vshrl.u32 %v1188, 7
    %v1190 = vsub.s32 %v1187, %v1189
    %v1191 = vrot.slane %v1177, %v1190
    %v1192 = vcombine.low %v1184, %v1191
    %v1193 = vcombine.low %v1074, %v1081
    %v1194 = vcombine.low %v1088, %v1095
    %v1196 = vunpack.c.l.s4 1983009808
    %v1197 = vunpack.c.0.s8 %v1196
    %v1198 = vlaneseq
    %v1199 = vshrl.u32 %v1198, 7
    %v1200 = vsub.s32 %v1197, %v1199
    %v1201 = vrot.slane %v1193, %v1200
    %v1203 = vunpack.c.l.s4 1983009808
    %v1204 = vunpack.c.0.s8 %v1203
    %v1205 = vlaneseq
    %v1206 = vshrl.u32 %v1205, 7
    %v1207 = vsub.s32 %v1204, %v1206
    %v1208 = vrot.slane %v1194, %v1207
    %v1209 = vcombine.low %v1201, %v1208
    %v1210 = vcombine.low %v1102, %v1109
    %v1211 = vcombine.low %v1116, %v1123
    %v1213 = vunpack.c.l.s4 1983009808
    %v1214 = vunpack.c.0.s8 %v1213
    %v1215 = vlaneseq
    %v1216 = vshrl.u32 %v1215, 7
    %v1217 = vsub.s32 %v1214, %v1216
    %v1218 = vrot.slane %v1210, %v1217
    %v1220 = vunpack.c.l.s4 1983009808
    %v1221 = vunpack.c.0.s8 %v1220
    %v1222 = vlaneseq
    %v1223 = vshrl.u32 %v1222, 7
    %v1224 = vsub.s32 %v1221, %v1223
    %v1225 = vrot.slane %v1211, %v1224
    %v1226 = vcombine.low %v1218, %v1225
    %v1227 = vcombine.low %v1130, %v1137
    %v1228 = vcombine.low %v1144, %v1151
    %v1230 = vunpack.c.l.s4 1983009808
    %v1231 = vunpack.c.0.s8 %v1230
    %v1232 = vlaneseq
    %v1233 = vshrl.u32 %v1232, 7
    %v1234 = vsub.s32 %v1231, %v1233
    %v1235 = vrot.slane %v1227, %v1234
    %v1237 = vunpack.c.l.s4 1983009808
    %v1238 = vunpack.c.0.s8 %v1237
    %v1239 = vlaneseq
    %v1240 = vshrl.u32 %v1239, 7
    %v1241 = vsub.s32 %v1238, %v1240
    %v1242 = vrot.slane %v1228, %v1241
    %v1243 = vcombine.low %v1235, %v1242
    %vm1244 = vcmask 1044484
    %v1245 = vsel %vm1244, %v1192, %v1192
    %vm1246 = vcmask 1046534
    %v1247 = vsel %vm1246, %v1192, %v1245
    %v1248 = vrot.slane %v1226, 7
    %vm1249 = vcmask 1041409
    %v1250 = vsel %vm1249, %v1248, %v1247
    %vm1251 = vcmask 1043459
    %v1252 = vsel %vm1251, %v1248, %v1250
    %vm1253 = vcmask 1045509
    %v1254 = vsel %vm1253, %v1248, %v1252
    %vm1255 = vcmask 1047559
    %v1256 = vsel %vm1255, %v1248, %v1254
    %v1257 = vsel %vm1244, %v1209, %v1209
    %v1258 = vsel %vm1246, %v1209, %v1257
    %v1259 = vrot.slane %v1243, 7
    %v1260 = vsel %vm1249, %v1259, %v1258
    %v1261 = vsel %vm1251, %v1259, %v1260
    %v1262 = vsel %vm1253, %v1259, %v1261
    %v1263 = vsel %vm1255, %v1259, %v1262
    %v1266 = vmax.f32 %v1158, %v1256
    %v1267 = vmax.f32 %v1159, %v1263
    %1268 = vst [vmem:[#allocation2] sm:$0xff] %v1266
    %1269 = vst [vmem:[#allocation2 + $0x8] sm:$0xff] %v1267
    // Predicated region
    $region102: #{tpu_custom_call.1} parent=1 // pred_check
      %p1270 = pneg %p1152
    $region103: #{tpu_custom_call.1} parent=1 // pred_check_branch
      %1272 = sbr.rel (%p1270) target = $region105
    $region104: #{tpu_custom_call.1} parent=1 // pred_region
      %v1273 = vld [vmem:[#allocation2] sm:$0xff]
      %v1274 = vld [vmem:[#allocation2 + $0x8] sm:$0xff]
      %v1275 = vld [vmem:[#allocation14] sm:$0xff]
      %v1276 = vld [vmem:[#allocation14 + $0x8] sm:$0xff]
      %v1277 = vld [vmem:[#allocation14 + $0x10] sm:$0xff]
      %v1278 = vld [vmem:[#allocation14 + $0x18] sm:$0xff]
      %v1279 = vld [vmem:[#allocation14 + $0x20] sm:$0xff]
      %v1280 = vld [vmem:[#allocation14 + $0x28] sm:$0xff]
      %v1281 = vld [vmem:[#allocation14 + $0x30] sm:$0xff]
      %v1282 = vld [vmem:[#allocation14 + $0x38] sm:$0xff]
      %v1283 = vld [vmem:[#allocation14 + $0x40] sm:$0xff]
      %v1284 = vld [vmem:[#allocation14 + $0x48] sm:$0xff]
      %v1285 = vld [vmem:[#allocation14 + $0x50] sm:$0xff]
      %v1286 = vld [vmem:[#allocation14 + $0x58] sm:$0xff]
      %v1287 = vld [vmem:[#allocation14 + $0x60] sm:$0xff]
      %v1288 = vld [vmem:[#allocation14 + $0x68] sm:$0xff]
      %v1289 = vld [vmem:[#allocation14 + $0x70] sm:$0xff]
      %v1290 = vld [vmem:[#allocation14 + $0x78] sm:$0xff]
      %v1291 = vld [vmem:[#allocation14 + $0x80] sm:$0xff]
      %v1292 = vld [vmem:[#allocation14 + $0x88] sm:$0xff]
      %v1293 = vld [vmem:[#allocation14 + $0x90] sm:$0xff]
      %v1294 = vld [vmem:[#allocation14 + $0x98] sm:$0xff]
      %v1295 = vld [vmem:[#allocation14 + $0xa0] sm:$0xff]
      %v1296 = vld [vmem:[#allocation14 + $0xa8] sm:$0xff]
      %v1297 = vld [vmem:[#allocation14 + $0xb0] sm:$0xff]
      %v1298 = vld [vmem:[#allocation14 + $0xb8] sm:$0xff]
      %v1299 = vld [vmem:[#allocation14 + $0xc0] sm:$0xff]
      %v1300 = vld [vmem:[#allocation14 + $0xc8] sm:$0xff]
      %v1301 = vld [vmem:[#allocation14 + $0xd0] sm:$0xff]
      %v1302 = vld [vmem:[#allocation14 + $0xd8] sm:$0xff]
      %v1303 = vld [vmem:[#allocation14 + $0xe0] sm:$0xff]
      %v1304 = vld [vmem:[#allocation14 + $0xe8] sm:$0xff]
      %v1305 = vld [vmem:[#allocation14 + $0xf0] sm:$0xff]
      %v1306 = vld [vmem:[#allocation14 + $0xf8] sm:$0xff]
      %v1307 = vld [vmem:[#allocation14 + $0x100] sm:$0xff]
      %v1308 = vld [vmem:[#allocation14 + $0x108] sm:$0xff]
      %v1309 = vld [vmem:[#allocation14 + $0x110] sm:$0xff]
      %v1310 = vld [vmem:[#allocation14 + $0x118] sm:$0xff]
      %v1311 = vld [vmem:[#allocation14 + $0x120] sm:$0xff]
      %v1312 = vld [vmem:[#allocation14 + $0x128] sm:$0xff]
      %v1313 = vld [vmem:[#allocation14 + $0x130] sm:$0xff]
      %v1314 = vld [vmem:[#allocation14 + $0x138] sm:$0xff]
      %v1315 = vld [vmem:[#allocation14 + $0x140] sm:$0xff]
      %v1316 = vld [vmem:[#allocation14 + $0x148] sm:$0xff]
      %v1317 = vld [vmem:[#allocation14 + $0x150] sm:$0xff]
      %v1318 = vld [vmem:[#allocation14 + $0x158] sm:$0xff]
      %v1319 = vld [vmem:[#allocation14 + $0x160] sm:$0xff]
      %v1320 = vld [vmem:[#allocation14 + $0x168] sm:$0xff]
      %v1321 = vld [vmem:[#allocation14 + $0x170] sm:$0xff]
      %v1322 = vld [vmem:[#allocation14 + $0x178] sm:$0xff]
      %v1323 = vld [vmem:[#allocation14 + $0x180] sm:$0xff]
      %v1324 = vld [vmem:[#allocation14 + $0x188] sm:$0xff]
      %v1325 = vld [vmem:[#allocation14 + $0x190] sm:$0xff]
      %v1326 = vld [vmem:[#allocation14 + $0x198] sm:$0xff]
      %v1327 = vld [vmem:[#allocation14 + $0x1a0] sm:$0xff]
      %v1328 = vld [vmem:[#allocation14 + $0x1a8] sm:$0xff]
      %v1329 = vld [vmem:[#allocation14 + $0x1b0] sm:$0xff]
      %v1330 = vld [vmem:[#allocation14 + $0x1b8] sm:$0xff]
      %v1331 = vld [vmem:[#allocation14 + $0x1c0] sm:$0xff]
      %v1332 = vld [vmem:[#allocation14 + $0x1c8] sm:$0xff]
      %v1333 = vld [vmem:[#allocation14 + $0x1d0] sm:$0xff]
      %v1334 = vld [vmem:[#allocation14 + $0x1d8] sm:$0xff]
      %v1335 = vld [vmem:[#allocation14 + $0x1e0] sm:$0xff]
      %v1336 = vld [vmem:[#allocation14 + $0x1e8] sm:$0xff]
      %v1337 = vld [vmem:[#allocation14 + $0x1f0] sm:$0xff]
      %v1338 = vld [vmem:[#allocation14 + $0x1f8] sm:$0xff]
      %v1339 = vld [vmem:[#allocation14 + $0x200] sm:$0xff]
      %v1340 = vld [vmem:[#allocation14 + $0x208] sm:$0xff]
      %v1341 = vld [vmem:[#allocation14 + $0x210] sm:$0xff]
      %v1342 = vld [vmem:[#allocation14 + $0x218] sm:$0xff]
      %v1343 = vld [vmem:[#allocation14 + $0x220] sm:$0xff]
      %v1344 = vld [vmem:[#allocation14 + $0x228] sm:$0xff]
      %v1345 = vld [vmem:[#allocation14 + $0x230] sm:$0xff]
      %v1346 = vld [vmem:[#allocation14 + $0x238] sm:$0xff]
      %v1347 = vld [vmem:[#allocation14 + $0x240] sm:$0xff]
      %v1348 = vld [vmem:[#allocation14 + $0x248] sm:$0xff]
      %v1349 = vld [vmem:[#allocation14 + $0x250] sm:$0xff]
      %v1350 = vld [vmem:[#allocation14 + $0x258] sm:$0xff]
      %v1351 = vld [vmem:[#allocation14 + $0x260] sm:$0xff]
      %v1352 = vld [vmem:[#allocation14 + $0x268] sm:$0xff]
      %v1353 = vld [vmem:[#allocation14 + $0x270] sm:$0xff]
      %v1354 = vld [vmem:[#allocation14 + $0x278] sm:$0xff]
      %v1355 = vld [vmem:[#allocation14 + $0x280] sm:$0xff]
      %v1356 = vld [vmem:[#allocation14 + $0x288] sm:$0xff]
      %v1357 = vld [vmem:[#allocation14 + $0x290] sm:$0xff]
      %v1358 = vld [vmem:[#allocation14 + $0x298] sm:$0xff]
      %v1359 = vld [vmem:[#allocation14 + $0x2a0] sm:$0xff]
      %v1360 = vld [vmem:[#allocation14 + $0x2a8] sm:$0xff]
      %v1361 = vld [vmem:[#allocation14 + $0x2b0] sm:$0xff]
      %v1362 = vld [vmem:[#allocation14 + $0x2b8] sm:$0xff]
      %v1363 = vld [vmem:[#allocation14 + $0x2c0] sm:$0xff]
      %v1364 = vld [vmem:[#allocation14 + $0x2c8] sm:$0xff]
      %v1365 = vld [vmem:[#allocation14 + $0x2d0] sm:$0xff]
      %v1366 = vld [vmem:[#allocation14 + $0x2d8] sm:$0xff]
      %v1367 = vld [vmem:[#allocation14 + $0x2e0] sm:$0xff]
      %v1368 = vld [vmem:[#allocation14 + $0x2e8] sm:$0xff]
      %v1369 = vld [vmem:[#allocation14 + $0x2f0] sm:$0xff]
      %v1370 = vld [vmem:[#allocation14 + $0x2f8] sm:$0xff]
      %v1371 = vld [vmem:[#allocation14 + $0x300] sm:$0xff]
      %v1372 = vld [vmem:[#allocation14 + $0x308] sm:$0xff]
      %v1373 = vld [vmem:[#allocation14 + $0x310] sm:$0xff]
      %v1374 = vld [vmem:[#allocation14 + $0x318] sm:$0xff]
      %v1375 = vld [vmem:[#allocation14 + $0x320] sm:$0xff]
      %v1376 = vld [vmem:[#allocation14 + $0x328] sm:$0xff]
      %v1377 = vld [vmem:[#allocation14 + $0x330] sm:$0xff]
      %v1378 = vld [vmem:[#allocation14 + $0x338] sm:$0xff]
      %v1379 = vld [vmem:[#allocation14 + $0x340] sm:$0xff]
      %v1380 = vld [vmem:[#allocation14 + $0x348] sm:$0xff]
      %v1381 = vld [vmem:[#allocation14 + $0x350] sm:$0xff]
      %v1382 = vld [vmem:[#allocation14 + $0x358] sm:$0xff]
      %v1383 = vld [vmem:[#allocation14 + $0x360] sm:$0xff]
      %v1384 = vld [vmem:[#allocation14 + $0x368] sm:$0xff]
      %v1385 = vld [vmem:[#allocation14 + $0x370] sm:$0xff]
      %v1386 = vld [vmem:[#allocation14 + $0x378] sm:$0xff]
      %v1387 = vld [vmem:[#allocation14 + $0x380] sm:$0xff]
      %v1388 = vld [vmem:[#allocation14 + $0x388] sm:$0xff]
      %v1389 = vld [vmem:[#allocation14 + $0x390] sm:$0xff]
      %v1390 = vld [vmem:[#allocation14 + $0x398] sm:$0xff]
      %v1391 = vld [vmem:[#allocation14 + $0x3a0] sm:$0xff]
      %v1392 = vld [vmem:[#allocation14 + $0x3a8] sm:$0xff]
      %v1393 = vld [vmem:[#allocation14 + $0x3b0] sm:$0xff]
      %v1394 = vld [vmem:[#allocation14 + $0x3b8] sm:$0xff]
      %v1395 = vld [vmem:[#allocation14 + $0x3c0] sm:$0xff]
      %v1396 = vld [vmem:[#allocation14 + $0x3c8] sm:$0xff]
      %v1397 = vld [vmem:[#allocation14 + $0x3d0] sm:$0xff]
      %v1398 = vld [vmem:[#allocation14 + $0x3d8] sm:$0xff]
      %v1399 = vld [vmem:[#allocation14 + $0x3e0] sm:$0xff]
      %v1400 = vld [vmem:[#allocation14 + $0x3e8] sm:$0xff]
      %v1401 = vld [vmem:[#allocation14 + $0x3f0] sm:$0xff]
      %v1402 = vld [vmem:[#allocation14 + $0x3f8] sm:$0xff]
      %v1403 = vld [vmem:[#allocation14 + $0x400] sm:$0xff]
      %v1404 = vld [vmem:[#allocation14 + $0x408] sm:$0xff]
      %v1405 = vld [vmem:[#allocation14 + $0x410] sm:$0xff]
      %v1406 = vld [vmem:[#allocation14 + $0x418] sm:$0xff]
      %v1407 = vld [vmem:[#allocation14 + $0x420] sm:$0xff]
      %v1408 = vld [vmem:[#allocation14 + $0x428] sm:$0xff]
      %v1409 = vld [vmem:[#allocation14 + $0x430] sm:$0xff]
      %v1410 = vld [vmem:[#allocation14 + $0x438] sm:$0xff]
      %v1411 = vld [vmem:[#allocation14 + $0x440] sm:$0xff]
      %v1412 = vld [vmem:[#allocation14 + $0x448] sm:$0xff]
      %v1413 = vld [vmem:[#allocation14 + $0x450] sm:$0xff]
      %v1414 = vld [vmem:[#allocation14 + $0x458] sm:$0xff]
      %v1415 = vld [vmem:[#allocation14 + $0x460] sm:$0xff]
      %v1416 = vld [vmem:[#allocation14 + $0x468] sm:$0xff]
      %v1417 = vld [vmem:[#allocation14 + $0x470] sm:$0xff]
      %v1418 = vld [vmem:[#allocation14 + $0x478] sm:$0xff]
      %v1419 = vld [vmem:[#allocation14 + $0x480] sm:$0xff]
      %v1420 = vld [vmem:[#allocation14 + $0x488] sm:$0xff]
      %v1421 = vld [vmem:[#allocation14 + $0x490] sm:$0xff]
      %v1422 = vld [vmem:[#allocation14 + $0x498] sm:$0xff]
      %v1423 = vld [vmem:[#allocation14 + $0x4a0] sm:$0xff]
      %v1424 = vld [vmem:[#allocation14 + $0x4a8] sm:$0xff]
      %v1425 = vld [vmem:[#allocation14 + $0x4b0] sm:$0xff]
      %v1426 = vld [vmem:[#allocation14 + $0x4b8] sm:$0xff]
      %v1427 = vld [vmem:[#allocation14 + $0x4c0] sm:$0xff]
      %v1428 = vld [vmem:[#allocation14 + $0x4c8] sm:$0xff]
      %v1429 = vld [vmem:[#allocation14 + $0x4d0] sm:$0xff]
      %v1430 = vld [vmem:[#allocation14 + $0x4d8] sm:$0xff]
      %v1431 = vld [vmem:[#allocation14 + $0x4e0] sm:$0xff]
      %v1432 = vld [vmem:[#allocation14 + $0x4e8] sm:$0xff]
      %v1433 = vld [vmem:[#allocation14 + $0x4f0] sm:$0xff]
      %v1434 = vld [vmem:[#allocation14 + $0x4f8] sm:$0xff]
      %v1435 = vld [vmem:[#allocation14 + $0x500] sm:$0xff]
      %v1436 = vld [vmem:[#allocation14 + $0x508] sm:$0xff]
      %v1437 = vld [vmem:[#allocation14 + $0x510] sm:$0xff]
      %v1438 = vld [vmem:[#allocation14 + $0x518] sm:$0xff]
      %v1439 = vld [vmem:[#allocation14 + $0x520] sm:$0xff]
      %v1440 = vld [vmem:[#allocation14 + $0x528] sm:$0xff]
      %v1441 = vld [vmem:[#allocation14 + $0x530] sm:$0xff]
      %v1442 = vld [vmem:[#allocation14 + $0x538] sm:$0xff]
      %v1443 = vld [vmem:[#allocation14 + $0x540] sm:$0xff]
      %v1444 = vld [vmem:[#allocation14 + $0x548] sm:$0xff]
      %v1445 = vld [vmem:[#allocation14 + $0x550] sm:$0xff]
      %v1446 = vld [vmem:[#allocation14 + $0x558] sm:$0xff]
      %v1447 = vld [vmem:[#allocation14 + $0x560] sm:$0xff]
      %v1448 = vld [vmem:[#allocation14 + $0x568] sm:$0xff]
      %v1449 = vld [vmem:[#allocation14 + $0x570] sm:$0xff]
      %v1450 = vld [vmem:[#allocation14 + $0x578] sm:$0xff]
      %v1451 = vld [vmem:[#allocation14 + $0x580] sm:$0xff]
      %v1452 = vld [vmem:[#allocation14 + $0x588] sm:$0xff]
      %v1453 = vld [vmem:[#allocation14 + $0x590] sm:$0xff]
      %v1454 = vld [vmem:[#allocation14 + $0x598] sm:$0xff]
      %v1455 = vld [vmem:[#allocation14 + $0x5a0] sm:$0xff]
      %v1456 = vld [vmem:[#allocation14 + $0x5a8] sm:$0xff]
      %v1457 = vld [vmem:[#allocation14 + $0x5b0] sm:$0xff]
      %v1458 = vld [vmem:[#allocation14 + $0x5b8] sm:$0xff]
      %v1459 = vld [vmem:[#allocation14 + $0x5c0] sm:$0xff]
      %v1460 = vld [vmem:[#allocation14 + $0x5c8] sm:$0xff]
      %v1461 = vld [vmem:[#allocation14 + $0x5d0] sm:$0xff]
      %v1462 = vld [vmem:[#allocation14 + $0x5d8] sm:$0xff]
      %v1463 = vld [vmem:[#allocation14 + $0x5e0] sm:$0xff]
      %v1464 = vld [vmem:[#allocation14 + $0x5e8] sm:$0xff]
      %v1465 = vld [vmem:[#allocation14 + $0x5f0] sm:$0xff]
      %v1466 = vld [vmem:[#allocation14 + $0x5f8] sm:$0xff]
      %v1467 = vld [vmem:[#allocation14 + $0x600] sm:$0xff]
      %v1468 = vld [vmem:[#allocation14 + $0x608] sm:$0xff]
      %v1469 = vld [vmem:[#allocation14 + $0x610] sm:$0xff]
      %v1470 = vld [vmem:[#allocation14 + $0x618] sm:$0xff]
      %v1471 = vld [vmem:[#allocation14 + $0x620] sm:$0xff]
      %v1472 = vld [vmem:[#allocation14 + $0x628] sm:$0xff]
      %v1473 = vld [vmem:[#allocation14 + $0x630] sm:$0xff]
      %v1474 = vld [vmem:[#allocation14 + $0x638] sm:$0xff]
      %v1475 = vld [vmem:[#allocation14 + $0x640] sm:$0xff]
      %v1476 = vld [vmem:[#allocation14 + $0x648] sm:$0xff]
      %v1477 = vld [vmem:[#allocation14 + $0x650] sm:$0xff]
      %v1478 = vld [vmem:[#allocation14 + $0x658] sm:$0xff]
      %v1479 = vld [vmem:[#allocation14 + $0x660] sm:$0xff]
      %v1480 = vld [vmem:[#allocation14 + $0x668] sm:$0xff]
      %v1481 = vld [vmem:[#allocation14 + $0x670] sm:$0xff]
      %v1482 = vld [vmem:[#allocation14 + $0x678] sm:$0xff]
      %v1483 = vld [vmem:[#allocation14 + $0x680] sm:$0xff]
      %v1484 = vld [vmem:[#allocation14 + $0x688] sm:$0xff]
      %v1485 = vld [vmem:[#allocation14 + $0x690] sm:$0xff]
      %v1486 = vld [vmem:[#allocation14 + $0x698] sm:$0xff]
      %v1487 = vld [vmem:[#allocation14 + $0x6a0] sm:$0xff]
      %v1488 = vld [vmem:[#allocation14 + $0x6a8] sm:$0xff]
      %v1489 = vld [vmem:[#allocation14 + $0x6b0] sm:$0xff]
      %v1490 = vld [vmem:[#allocation14 + $0x6b8] sm:$0xff]
      %v1491 = vld [vmem:[#allocation14 + $0x6c0] sm:$0xff]
      %v1492 = vld [vmem:[#allocation14 + $0x6c8] sm:$0xff]
      %v1493 = vld [vmem:[#allocation14 + $0x6d0] sm:$0xff]
      %v1494 = vld [vmem:[#allocation14 + $0x6d8] sm:$0xff]
      %v1495 = vld [vmem:[#allocation14 + $0x6e0] sm:$0xff]
      %v1496 = vld [vmem:[#allocation14 + $0x6e8] sm:$0xff]
      %v1497 = vld [vmem:[#allocation14 + $0x6f0] sm:$0xff]
      %v1498 = vld [vmem:[#allocation14 + $0x6f8] sm:$0xff]
      %v1499 = vld [vmem:[#allocation14 + $0x700] sm:$0xff]
      %v1500 = vld [vmem:[#allocation14 + $0x708] sm:$0xff]
      %v1501 = vld [vmem:[#allocation14 + $0x710] sm:$0xff]
      %v1502 = vld [vmem:[#allocation14 + $0x718] sm:$0xff]
      %v1503 = vld [vmem:[#allocation14 + $0x720] sm:$0xff]
      %v1504 = vld [vmem:[#allocation14 + $0x728] sm:$0xff]
      %v1505 = vld [vmem:[#allocation14 + $0x730] sm:$0xff]
      %v1506 = vld [vmem:[#allocation14 + $0x738] sm:$0xff]
      %v1507 = vld [vmem:[#allocation14 + $0x740] sm:$0xff]
      %v1508 = vld [vmem:[#allocation14 + $0x748] sm:$0xff]
      %v1509 = vld [vmem:[#allocation14 + $0x750] sm:$0xff]
      %v1510 = vld [vmem:[#allocation14 + $0x758] sm:$0xff]
      %v1511 = vld [vmem:[#allocation14 + $0x760] sm:$0xff]
      %v1512 = vld [vmem:[#allocation14 + $0x768] sm:$0xff]
      %v1513 = vld [vmem:[#allocation14 + $0x770] sm:$0xff]
      %v1514 = vld [vmem:[#allocation14 + $0x778] sm:$0xff]
      %v1515 = vld [vmem:[#allocation14 + $0x780] sm:$0xff]
      %v1516 = vld [vmem:[#allocation14 + $0x788] sm:$0xff]
      %v1517 = vld [vmem:[#allocation14 + $0x790] sm:$0xff]
      %v1518 = vld [vmem:[#allocation14 + $0x798] sm:$0xff]
      %v1519 = vld [vmem:[#allocation14 + $0x7a0] sm:$0xff]
      %v1520 = vld [vmem:[#allocation14 + $0x7a8] sm:$0xff]
      %v1521 = vld [vmem:[#allocation14 + $0x7b0] sm:$0xff]
      %v1522 = vld [vmem:[#allocation14 + $0x7b8] sm:$0xff]
      %v1523 = vld [vmem:[#allocation14 + $0x7c0] sm:$0xff]
      %v1524 = vld [vmem:[#allocation14 + $0x7c8] sm:$0xff]
      %v1525 = vld [vmem:[#allocation14 + $0x7d0] sm:$0xff]
      %v1526 = vld [vmem:[#allocation14 + $0x7d8] sm:$0xff]
      %v1527 = vld [vmem:[#allocation14 + $0x7e0] sm:$0xff]
      %v1528 = vld [vmem:[#allocation14 + $0x7e8] sm:$0xff]
      %v1529 = vld [vmem:[#allocation14 + $0x7f0] sm:$0xff]
      %v1530 = vld [vmem:[#allocation14 + $0x7f8] sm:$0xff]
      %v1531 = vld [vmem:[#allocation14 + $0x800] sm:$0xff]
      %v1532 = vld [vmem:[#allocation14 + $0x808] sm:$0xff]
      %v1533 = vld [vmem:[#allocation14 + $0x810] sm:$0xff]
      %v1534 = vld [vmem:[#allocation14 + $0x818] sm:$0xff]
      %v1535 = vld [vmem:[#allocation14 + $0x820] sm:$0xff]
      %v1536 = vld [vmem:[#allocation14 + $0x828] sm:$0xff]
      %v1537 = vld [vmem:[#allocation14 + $0x830] sm:$0xff]
      %v1538 = vld [vmem:[#allocation14 + $0x838] sm:$0xff]
      %v1539 = vld [vmem:[#allocation14 + $0x840] sm:$0xff]
      %v1540 = vld [vmem:[#allocation14 + $0x848] sm:$0xff]
      %v1541 = vld [vmem:[#allocation14 + $0x850] sm:$0xff]
      %v1542 = vld [vmem:[#allocation14 + $0x858] sm:$0xff]
      %v1543 = vld [vmem:[#allocation14 + $0x860] sm:$0xff]
      %v1544 = vld [vmem:[#allocation14 + $0x868] sm:$0xff]
      %v1545 = vld [vmem:[#allocation14 + $0x870] sm:$0xff]
      %v1546 = vld [vmem:[#allocation14 + $0x878] sm:$0xff]
      %v1547 = vld [vmem:[#allocation14 + $0x880] sm:$0xff]
      %v1548 = vld [vmem:[#allocation14 + $0x888] sm:$0xff]
      %v1549 = vld [vmem:[#allocation14 + $0x890] sm:$0xff]
      %v1550 = vld [vmem:[#allocation14 + $0x898] sm:$0xff]
      %v1551 = vld [vmem:[#allocation14 + $0x8a0] sm:$0xff]
      %v1552 = vld [vmem:[#allocation14 + $0x8a8] sm:$0xff]
      %v1553 = vld [vmem:[#allocation14 + $0x8b0] sm:$0xff]
      %v1554 = vld [vmem:[#allocation14 + $0x8b8] sm:$0xff]
      %v1555 = vld [vmem:[#allocation14 + $0x8c0] sm:$0xff]
      %v1556 = vld [vmem:[#allocation14 + $0x8c8] sm:$0xff]
      %v1557 = vld [vmem:[#allocation14 + $0x8d0] sm:$0xff]
      %v1558 = vld [vmem:[#allocation14 + $0x8d8] sm:$0xff]
      %v1559 = vld [vmem:[#allocation14 + $0x8e0] sm:$0xff]
      %v1560 = vld [vmem:[#allocation14 + $0x8e8] sm:$0xff]
      %v1561 = vld [vmem:[#allocation14 + $0x8f0] sm:$0xff]
      %v1562 = vld [vmem:[#allocation14 + $0x8f8] sm:$0xff]
      %v1563 = vld [vmem:[#allocation14 + $0x900] sm:$0xff]
      %v1564 = vld [vmem:[#allocation14 + $0x908] sm:$0xff]
      %v1565 = vld [vmem:[#allocation14 + $0x910] sm:$0xff]
      %v1566 = vld [vmem:[#allocation14 + $0x918] sm:$0xff]
      %v1567 = vld [vmem:[#allocation14 + $0x920] sm:$0xff]
      %v1568 = vld [vmem:[#allocation14 + $0x928] sm:$0xff]
      %v1569 = vld [vmem:[#allocation14 + $0x930] sm:$0xff]
      %v1570 = vld [vmem:[#allocation14 + $0x938] sm:$0xff]
      %v1571 = vld [vmem:[#allocation14 + $0x940] sm:$0xff]
      %v1572 = vld [vmem:[#allocation14 + $0x948] sm:$0xff]
      %v1573 = vld [vmem:[#allocation14 + $0x950] sm:$0xff]
      %v1574 = vld [vmem:[#allocation14 + $0x958] sm:$0xff]
      %v1575 = vld [vmem:[#allocation14 + $0x960] sm:$0xff]
      %v1576 = vld [vmem:[#allocation14 + $0x968] sm:$0xff]
      %v1577 = vld [vmem:[#allocation14 + $0x970] sm:$0xff]
      %v1578 = vld [vmem:[#allocation14 + $0x978] sm:$0xff]
      %v1579 = vld [vmem:[#allocation14 + $0x980] sm:$0xff]
      %v1580 = vld [vmem:[#allocation14 + $0x988] sm:$0xff]
      %v1581 = vld [vmem:[#allocation14 + $0x990] sm:$0xff]
      %v1582 = vld [vmem:[#allocation14 + $0x998] sm:$0xff]
      %v1583 = vld [vmem:[#allocation14 + $0x9a0] sm:$0xff]
      %v1584 = vld [vmem:[#allocation14 + $0x9a8] sm:$0xff]
      %v1585 = vld [vmem:[#allocation14 + $0x9b0] sm:$0xff]
      %v1586 = vld [vmem:[#allocation14 + $0x9b8] sm:$0xff]
      %v1587 = vld [vmem:[#allocation14 + $0x9c0] sm:$0xff]
      %v1588 = vld [vmem:[#allocation14 + $0x9c8] sm:$0xff]
      %v1589 = vld [vmem:[#allocation14 + $0x9d0] sm:$0xff]
      %v1590 = vld [vmem:[#allocation14 + $0x9d8] sm:$0xff]
      %v1591 = vld [vmem:[#allocation14 + $0x9e0] sm:$0xff]
      %v1592 = vld [vmem:[#allocation14 + $0x9e8] sm:$0xff]
      %v1593 = vld [vmem:[#allocation14 + $0x9f0] sm:$0xff]
      %v1594 = vld [vmem:[#allocation14 + $0x9f8] sm:$0xff]
      %v1595 = vld [vmem:[#allocation14 + $0xa00] sm:$0xff]
      %v1596 = vld [vmem:[#allocation14 + $0xa08] sm:$0xff]
      %v1597 = vld [vmem:[#allocation14 + $0xa10] sm:$0xff]
      %v1598 = vld [vmem:[#allocation14 + $0xa18] sm:$0xff]
      %v1599 = vld [vmem:[#allocation14 + $0xa20] sm:$0xff]
      %v1600 = vld [vmem:[#allocation14 + $0xa28] sm:$0xff]
      %v1601 = vld [vmem:[#allocation14 + $0xa30] sm:$0xff]
      %v1602 = vld [vmem:[#allocation14 + $0xa38] sm:$0xff]
      %v1603 = vld [vmem:[#allocation14 + $0xa40] sm:$0xff]
      %v1604 = vld [vmem:[#allocation14 + $0xa48] sm:$0xff]
      %v1605 = vld [vmem:[#allocation14 + $0xa50] sm:$0xff]
      %v1606 = vld [vmem:[#allocation14 + $0xa58] sm:$0xff]
      %v1607 = vld [vmem:[#allocation14 + $0xa60] sm:$0xff]
      %v1608 = vld [vmem:[#allocation14 + $0xa68] sm:$0xff]
      %v1609 = vld [vmem:[#allocation14 + $0xa70] sm:$0xff]
      %v1610 = vld [vmem:[#allocation14 + $0xa78] sm:$0xff]
      %v1611 = vld [vmem:[#allocation14 + $0xa80] sm:$0xff]
      %v1612 = vld [vmem:[#allocation14 + $0xa88] sm:$0xff]
      %v1613 = vld [vmem:[#allocation14 + $0xa90] sm:$0xff]
      %v1614 = vld [vmem:[#allocation14 + $0xa98] sm:$0xff]
      %v1615 = vld [vmem:[#allocation14 + $0xaa0] sm:$0xff]
      %v1616 = vld [vmem:[#allocation14 + $0xaa8] sm:$0xff]
      %v1617 = vld [vmem:[#allocation14 + $0xab0] sm:$0xff]
      %v1618 = vld [vmem:[#allocation14 + $0xab8] sm:$0xff]
      %v1619 = vld [vmem:[#allocation14 + $0xac0] sm:$0xff]
      %v1620 = vld [vmem:[#allocation14 + $0xac8] sm:$0xff]
      %v1621 = vld [vmem:[#allocation14 + $0xad0] sm:$0xff]
      %v1622 = vld [vmem:[#allocation14 + $0xad8] sm:$0xff]
      %v1623 = vld [vmem:[#allocation14 + $0xae0] sm:$0xff]
      %v1624 = vld [vmem:[#allocation14 + $0xae8] sm:$0xff]
      %v1625 = vld [vmem:[#allocation14 + $0xaf0] sm:$0xff]
      %v1626 = vld [vmem:[#allocation14 + $0xaf8] sm:$0xff]
      %v1627 = vld [vmem:[#allocation14 + $0xb00] sm:$0xff]
      %v1628 = vld [vmem:[#allocation14 + $0xb08] sm:$0xff]
      %v1629 = vld [vmem:[#allocation14 + $0xb10] sm:$0xff]
      %v1630 = vld [vmem:[#allocation14 + $0xb18] sm:$0xff]
      %v1631 = vld [vmem:[#allocation14 + $0xb20] sm:$0xff]
      %v1632 = vld [vmem:[#allocation14 + $0xb28] sm:$0xff]
      %v1633 = vld [vmem:[#allocation14 + $0xb30] sm:$0xff]
      %v1634 = vld [vmem:[#allocation14 + $0xb38] sm:$0xff]
      %v1635 = vld [vmem:[#allocation14 + $0xb40] sm:$0xff]
      %v1636 = vld [vmem:[#allocation14 + $0xb48] sm:$0xff]
      %v1637 = vld [vmem:[#allocation14 + $0xb50] sm:$0xff]
      %v1638 = vld [vmem:[#allocation14 + $0xb58] sm:$0xff]
      %v1639 = vld [vmem:[#allocation14 + $0xb60] sm:$0xff]
      %v1640 = vld [vmem:[#allocation14 + $0xb68] sm:$0xff]
      %v1641 = vld [vmem:[#allocation14 + $0xb70] sm:$0xff]
      %v1642 = vld [vmem:[#allocation14 + $0xb78] sm:$0xff]
      %v1643 = vld [vmem:[#allocation14 + $0xb80] sm:$0xff]
      %v1644 = vld [vmem:[#allocation14 + $0xb88] sm:$0xff]
      %v1645 = vld [vmem:[#allocation14 + $0xb90] sm:$0xff]
      %v1646 = vld [vmem:[#allocation14 + $0xb98] sm:$0xff]
      %v1647 = vld [vmem:[#allocation14 + $0xba0] sm:$0xff]
      %v1648 = vld [vmem:[#allocation14 + $0xba8] sm:$0xff]
      %v1649 = vld [vmem:[#allocation14 + $0xbb0] sm:$0xff]
      %v1650 = vld [vmem:[#allocation14 + $0xbb8] sm:$0xff]
      %v1651 = vld [vmem:[#allocation14 + $0xbc0] sm:$0xff]
      %v1652 = vld [vmem:[#allocation14 + $0xbc8] sm:$0xff]
      %v1653 = vld [vmem:[#allocation14 + $0xbd0] sm:$0xff]
      %v1654 = vld [vmem:[#allocation14 + $0xbd8] sm:$0xff]
      %v1655 = vld [vmem:[#allocation14 + $0xbe0] sm:$0xff]
      %v1656 = vld [vmem:[#allocation14 + $0xbe8] sm:$0xff]
      %v1657 = vld [vmem:[#allocation14 + $0xbf0] sm:$0xff]
      %v1658 = vld [vmem:[#allocation14 + $0xbf8] sm:$0xff]
      %v1659 = vld [vmem:[#allocation14 + $0xc00] sm:$0xff]
      %v1660 = vld [vmem:[#allocation14 + $0xc08] sm:$0xff]
      %v1661 = vld [vmem:[#allocation14 + $0xc10] sm:$0xff]
      %v1662 = vld [vmem:[#allocation14 + $0xc18] sm:$0xff]
      %v1663 = vld [vmem:[#allocation14 + $0xc20] sm:$0xff]
      %v1664 = vld [vmem:[#allocation14 + $0xc28] sm:$0xff]
      %v1665 = vld [vmem:[#allocation14 + $0xc30] sm:$0xff]
      %v1666 = vld [vmem:[#allocation14 + $0xc38] sm:$0xff]
      %v1667 = vld [vmem:[#allocation14 + $0xc40] sm:$0xff]
      %v1668 = vld [vmem:[#allocation14 + $0xc48] sm:$0xff]
      %v1669 = vld [vmem:[#allocation14 + $0xc50] sm:$0xff]
      %v1670 = vld [vmem:[#allocation14 + $0xc58] sm:$0xff]
      %v1671 = vld [vmem:[#allocation14 + $0xc60] sm:$0xff]
      %v1672 = vld [vmem:[#allocation14 + $0xc68] sm:$0xff]
      %v1673 = vld [vmem:[#allocation14 + $0xc70] sm:$0xff]
      %v1674 = vld [vmem:[#allocation14 + $0xc78] sm:$0xff]
      %v1675 = vld [vmem:[#allocation14 + $0xc80] sm:$0xff]
      %v1676 = vld [vmem:[#allocation14 + $0xc88] sm:$0xff]
      %v1677 = vld [vmem:[#allocation14 + $0xc90] sm:$0xff]
      %v1678 = vld [vmem:[#allocation14 + $0xc98] sm:$0xff]
      %v1679 = vld [vmem:[#allocation14 + $0xca0] sm:$0xff]
      %v1680 = vld [vmem:[#allocation14 + $0xca8] sm:$0xff]
      %v1681 = vld [vmem:[#allocation14 + $0xcb0] sm:$0xff]
      %v1682 = vld [vmem:[#allocation14 + $0xcb8] sm:$0xff]
      %v1683 = vld [vmem:[#allocation14 + $0xcc0] sm:$0xff]
      %v1684 = vld [vmem:[#allocation14 + $0xcc8] sm:$0xff]
      %v1685 = vld [vmem:[#allocation14 + $0xcd0] sm:$0xff]
      %v1686 = vld [vmem:[#allocation14 + $0xcd8] sm:$0xff]
      %v1687 = vld [vmem:[#allocation14 + $0xce0] sm:$0xff]
      %v1688 = vld [vmem:[#allocation14 + $0xce8] sm:$0xff]
      %v1689 = vld [vmem:[#allocation14 + $0xcf0] sm:$0xff]
      %v1690 = vld [vmem:[#allocation14 + $0xcf8] sm:$0xff]
      %v1691 = vld [vmem:[#allocation14 + $0xd00] sm:$0xff]
      %v1692 = vld [vmem:[#allocation14 + $0xd08] sm:$0xff]
      %v1693 = vld [vmem:[#allocation14 + $0xd10] sm:$0xff]
      %v1694 = vld [vmem:[#allocation14 + $0xd18] sm:$0xff]
      %v1695 = vld [vmem:[#allocation14 + $0xd20] sm:$0xff]
      %v1696 = vld [vmem:[#allocation14 + $0xd28] sm:$0xff]
      %v1697 = vld [vmem:[#allocation14 + $0xd30] sm:$0xff]
      %v1698 = vld [vmem:[#allocation14 + $0xd38] sm:$0xff]
      %v1699 = vld [vmem:[#allocation14 + $0xd40] sm:$0xff]
      %v1700 = vld [vmem:[#allocation14 + $0xd48] sm:$0xff]
      %v1701 = vld [vmem:[#allocation14 + $0xd50] sm:$0xff]
      %v1702 = vld [vmem:[#allocation14 + $0xd58] sm:$0xff]
      %v1703 = vld [vmem:[#allocation14 + $0xd60] sm:$0xff]
      %v1704 = vld [vmem:[#allocation14 + $0xd68] sm:$0xff]
      %v1705 = vld [vmem:[#allocation14 + $0xd70] sm:$0xff]
      %v1706 = vld [vmem:[#allocation14 + $0xd78] sm:$0xff]
      %v1707 = vld [vmem:[#allocation14 + $0xd80] sm:$0xff]
      %v1708 = vld [vmem:[#allocation14 + $0xd88] sm:$0xff]
      %v1709 = vld [vmem:[#allocation14 + $0xd90] sm:$0xff]
      %v1710 = vld [vmem:[#allocation14 + $0xd98] sm:$0xff]
      %v1711 = vld [vmem:[#allocation14 + $0xda0] sm:$0xff]
      %v1712 = vld [vmem:[#allocation14 + $0xda8] sm:$0xff]
      %v1713 = vld [vmem:[#allocation14 + $0xdb0] sm:$0xff]
      %v1714 = vld [vmem:[#allocation14 + $0xdb8] sm:$0xff]
      %v1715 = vld [vmem:[#allocation14 + $0xdc0] sm:$0xff]
      %v1716 = vld [vmem:[#allocation14 + $0xdc8] sm:$0xff]
      %v1717 = vld [vmem:[#allocation14 + $0xdd0] sm:$0xff]
      %v1718 = vld [vmem:[#allocation14 + $0xdd8] sm:$0xff]
      %v1719 = vld [vmem:[#allocation14 + $0xde0] sm:$0xff]
      %v1720 = vld [vmem:[#allocation14 + $0xde8] sm:$0xff]
      %v1721 = vld [vmem:[#allocation14 + $0xdf0] sm:$0xff]
      %v1722 = vld [vmem:[#allocation14 + $0xdf8] sm:$0xff]
      %v1723 = vld [vmem:[#allocation14 + $0xe00] sm:$0xff]
      %v1724 = vld [vmem:[#allocation14 + $0xe08] sm:$0xff]
      %v1725 = vld [vmem:[#allocation14 + $0xe10] sm:$0xff]
      %v1726 = vld [vmem:[#allocation14 + $0xe18] sm:$0xff]
      %v1727 = vld [vmem:[#allocation14 + $0xe20] sm:$0xff]
      %v1728 = vld [vmem:[#allocation14 + $0xe28] sm:$0xff]
      %v1729 = vld [vmem:[#allocation14 + $0xe30] sm:$0xff]
      %v1730 = vld [vmem:[#allocation14 + $0xe38] sm:$0xff]
      %v1731 = vld [vmem:[#allocation14 + $0xe40] sm:$0xff]
      %v1732 = vld [vmem:[#allocation14 + $0xe48] sm:$0xff]
      %v1733 = vld [vmem:[#allocation14 + $0xe50] sm:$0xff]
      %v1734 = vld [vmem:[#allocation14 + $0xe58] sm:$0xff]
      %v1735 = vld [vmem:[#allocation14 + $0xe60] sm:$0xff]
      %v1736 = vld [vmem:[#allocation14 + $0xe68] sm:$0xff]
      %v1737 = vld [vmem:[#allocation14 + $0xe70] sm:$0xff]
      %v1738 = vld [vmem:[#allocation14 + $0xe78] sm:$0xff]
      %v1739 = vld [vmem:[#allocation14 + $0xe80] sm:$0xff]
      %v1740 = vld [vmem:[#allocation14 + $0xe88] sm:$0xff]
      %v1741 = vld [vmem:[#allocation14 + $0xe90] sm:$0xff]
      %v1742 = vld [vmem:[#allocation14 + $0xe98] sm:$0xff]
      %v1743 = vld [vmem:[#allocation14 + $0xea0] sm:$0xff]
      %v1744 = vld [vmem:[#allocation14 + $0xea8] sm:$0xff]
      %v1745 = vld [vmem:[#allocation14 + $0xeb0] sm:$0xff]
      %v1746 = vld [vmem:[#allocation14 + $0xeb8] sm:$0xff]
      %v1747 = vld [vmem:[#allocation14 + $0xec0] sm:$0xff]
      %v1748 = vld [vmem:[#allocation14 + $0xec8] sm:$0xff]
      %v1749 = vld [vmem:[#allocation14 + $0xed0] sm:$0xff]
      %v1750 = vld [vmem:[#allocation14 + $0xed8] sm:$0xff]
      %v1751 = vld [vmem:[#allocation14 + $0xee0] sm:$0xff]
      %v1752 = vld [vmem:[#allocation14 + $0xee8] sm:$0xff]
      %v1753 = vld [vmem:[#allocation14 + $0xef0] sm:$0xff]
      %v1754 = vld [vmem:[#allocation14 + $0xef8] sm:$0xff]
      %v1755 = vld [vmem:[#allocation14 + $0xf00] sm:$0xff]
      %v1756 = vld [vmem:[#allocation14 + $0xf08] sm:$0xff]
      %v1757 = vld [vmem:[#allocation14 + $0xf10] sm:$0xff]
      %v1758 = vld [vmem:[#allocation14 + $0xf18] sm:$0xff]
      %v1759 = vld [vmem:[#allocation14 + $0xf20] sm:$0xff]
      %v1760 = vld [vmem:[#allocation14 + $0xf28] sm:$0xff]
      %v1761 = vld [vmem:[#allocation14 + $0xf30] sm:$0xff]
      %v1762 = vld [vmem:[#allocation14 + $0xf38] sm:$0xff]
      %v1763 = vld [vmem:[#allocation14 + $0xf40] sm:$0xff]
      %v1764 = vld [vmem:[#allocation14 + $0xf48] sm:$0xff]
      %v1765 = vld [vmem:[#allocation14 + $0xf50] sm:$0xff]
      %v1766 = vld [vmem:[#allocation14 + $0xf58] sm:$0xff]
      %v1767 = vld [vmem:[#allocation14 + $0xf60] sm:$0xff]
      %v1768 = vld [vmem:[#allocation14 + $0xf68] sm:$0xff]
      %v1769 = vld [vmem:[#allocation14 + $0xf70] sm:$0xff]
      %v1770 = vld [vmem:[#allocation14 + $0xf78] sm:$0xff]
      %v1771 = vld [vmem:[#allocation14 + $0xf80] sm:$0xff]
      %v1772 = vld [vmem:[#allocation14 + $0xf88] sm:$0xff]
      %v1773 = vld [vmem:[#allocation14 + $0xf90] sm:$0xff]
      %v1774 = vld [vmem:[#allocation14 + $0xf98] sm:$0xff]
      %v1775 = vld [vmem:[#allocation14 + $0xfa0] sm:$0xff]
      %v1776 = vld [vmem:[#allocation14 + $0xfa8] sm:$0xff]
      %v1777 = vld [vmem:[#allocation14 + $0xfb0] sm:$0xff]
      %v1778 = vld [vmem:[#allocation14 + $0xfb8] sm:$0xff]
      %v1779 = vld [vmem:[#allocation14 + $0xfc0] sm:$0xff]
      %v1780 = vld [vmem:[#allocation14 + $0xfc8] sm:$0xff]
      %v1781 = vld [vmem:[#allocation14 + $0xfd0] sm:$0xff]
      %v1782 = vld [vmem:[#allocation14 + $0xfd8] sm:$0xff]
      %v1783 = vld [vmem:[#allocation14 + $0xfe0] sm:$0xff]
      %v1784 = vld [vmem:[#allocation14 + $0xfe8] sm:$0xff]
      %v1785 = vld [vmem:[#allocation14 + $0xff0] sm:$0xff]
      %v1786 = vld [vmem:[#allocation14 + $0xff8] sm:$0xff]
      %v1787 = vld [vmem:[#allocation15] sm:$0xf]
      %v1789 = vlaneseq
      %v1790 = vshrl.u32 %v1789, 7
      %v1791 = vsub.s32 0, %v1790
      %v1792 = vrot.slane %v1787, %v1791
      %v1793 = vlaneseq
      %v1794 = vshrl.u32 %v1793, 7
      %v1795 = vsub.s32 1, %v1794
      %v1796 = vrot.slane %v1787, %v1795
      %v1797 = vlaneseq
      %v1798 = vshrl.u32 %v1797, 7
      %v1799 = vsub.s32 2, %v1798
      %v1800 = vrot.slane %v1787, %v1799
      %v1801 = vlaneseq
      %v1802 = vshrl.u32 %v1801, 7
      %v1803 = vsub.s32 3, %v1802
      %v1804 = vrot.slane %v1787, %v1803
      %v1811 = vcombine.high %v1273, %v1273
      %v1813 = vunpack.c.l.s4 1983009808
      %v1814 = vunpack.c.0.s8 %v1813
      %v1815 = vlaneseq
      %v1816 = vshrl.u32 %v1815, 7
      %v1817 = vsub.s32 %v1814, %v1816
      %v1818 = vrot.slane %v1273, %v1817
      %v1820 = vunpack.c.l.s4 1983009808
      %v1821 = vunpack.c.0.s8 %v1820
      %v1822 = vlaneseq
      %v1823 = vshrl.u32 %v1822, 7
      %v1824 = vsub.s32 %v1821, %v1823
      %v1825 = vrot.slane %v1811, %v1824
      %v1826 = vcombine.high %v1818, %v1818
      %v1827 = vcombine.high %v1825, %v1825
      %v1828 = vcombine.high %v1274, %v1274
      %v1830 = vunpack.c.l.s4 1983009808
      %v1831 = vunpack.c.0.s8 %v1830
      %v1832 = vlaneseq
      %v1833 = vshrl.u32 %v1832, 7
      %v1834 = vsub.s32 %v1831, %v1833
      %v1835 = vrot.slane %v1274, %v1834
      %v1837 = vunpack.c.l.s4 1983009808
      %v1838 = vunpack.c.0.s8 %v1837
      %v1839 = vlaneseq
      %v1840 = vshrl.u32 %v1839, 7
      %v1841 = vsub.s32 %v1838, %v1840
      %v1842 = vrot.slane %v1828, %v1841
      %v1843 = vcombine.high %v1835, %v1835
      %v1844 = vcombine.high %v1842, %v1842
      %1853 = vmatprep.subr.mxu0 %v1276
      %1854 = vmatpush1.msra.mxu0 %v1275
      %1855 = vmatprep.subr.mxu0 %v1280
      %1856 = vmatpush1.msra.mxu0 %v1279
      %1857 = vmatprep.subr.mxu0 %v1284
      %1858 = vmatpush1.msra.mxu0 %v1283
      %1859 = vmatprep.subr.mxu0 %v1288
      %1860 = vmatpush1.msra.mxu0 %v1287
      %1861 = vmatprep.subr.mxu0 %v1292
      %1862 = vmatpush1.msra.mxu0 %v1291
      %1863 = vmatprep.subr.mxu0 %v1296
      %1864 = vmatpush1.msra.mxu0 %v1295
      %1865 = vmatprep.subr.mxu0 %v1300
      %1866 = vmatpush1.msra.mxu0 %v1299
      %1867 = vmatprep.subr.mxu0 %v1304
      %1868 = vmatpush1.msra.mxu0 %v1303
      %1869 = vmatprep.subr.mxu0 %v1308
      %1870 = vmatpush1.msra.mxu0 %v1307
      %1871 = vmatprep.subr.mxu0 %v1312
      %1872 = vmatpush1.msra.mxu0 %v1311
      %1873 = vmatprep.subr.mxu0 %v1316
      %1874 = vmatpush1.msra.mxu0 %v1315
      %1875 = vmatprep.subr.mxu0 %v1320
      %1876 = vmatpush1.msra.mxu0 %v1319
      %1877 = vmatprep.subr.mxu0 %v1324
      %1878 = vmatpush1.msra.mxu0 %v1323
      %1879 = vmatprep.subr.mxu0 %v1328
      %1880 = vmatpush1.msra.mxu0 %v1327
      %1881 = vmatprep.subr.mxu0 %v1332
      %1882 = vmatpush1.msra.mxu0 %v1331
      %1883 = vmatprep.subr.mxu0 %v1336
      %1884 = vmatpush1.msra.mxu0 %v1335
      %1885 = vmatprep.subr.mxu0 %v1340
      %1886 = vmatpush1.msra.mxu0 %v1339
      %1887 = vmatprep.subr.mxu0 %v1344
      %1888 = vmatpush1.msra.mxu0 %v1343
      %1889 = vmatprep.subr.mxu0 %v1348
      %1890 = vmatpush1.msra.mxu0 %v1347
      %1891 = vmatprep.subr.mxu0 %v1352
      %1892 = vmatpush1.msra.mxu0 %v1351
      %1893 = vmatprep.subr.mxu0 %v1356
      %1894 = vmatpush1.msra.mxu0 %v1355
      %1895 = vmatprep.subr.mxu0 %v1360
      %1896 = vmatpush1.msra.mxu0 %v1359
      %1897 = vmatprep.subr.mxu0 %v1364
      %1898 = vmatpush1.msra.mxu0 %v1363
      %1899 = vmatprep.subr.mxu0 %v1368
      %1900 = vmatpush1.msra.mxu0 %v1367
      %1901 = vmatprep.subr.mxu0 %v1372
      %1902 = vmatpush1.msra.mxu0 %v1371
      %1903 = vmatprep.subr.mxu0 %v1376
      %1904 = vmatpush1.msra.mxu0 %v1375
      %1905 = vmatprep.subr.mxu0 %v1380
      %1906 = vmatpush1.msra.mxu0 %v1379
      %1907 = vmatprep.subr.mxu0 %v1384
      %1908 = vmatpush1.msra.mxu0 %v1383
      %1909 = vmatprep.subr.mxu0 %v1388
      %1910 = vmatpush1.msra.mxu0 %v1387
      %1911 = vmatprep.subr.mxu0 %v1392
      %1912 = vmatpush1.msra.mxu0 %v1391
      %1913 = vmatprep.subr.mxu0 %v1396
      %1914 = vmatpush1.msra.mxu0 %v1395
      %1915 = vmatprep.subr.mxu0 %v1400
      %1916 = vmatpush1.msra.mxu0 %v1399
      %1917 = vmatprep.mubr.f32.mxu0 %v1826
      %1918 = vmatmul.mubr.f32.gmra.mrb[0].mxu0 %v1818
      %v1919 = vpop.f32.mrb[0].mxu0
      %v1920 = vadd.f32 %v1792, %v1919
      %v1921 = vpop.f32.mrb[0].mxu0
      %v1922 = vadd.f32 %v1796, %v1921
      %1923 = vdwg.mxu0
      %1924 = vmatprep.subr.mxu0 %v1404
      %1925 = vmatpush1.msra.mxu0 %v1403
      %1926 = vmatprep.subr.mxu0 %v1408
      %1927 = vmatpush1.msra.mxu0 %v1407
      %1928 = vmatprep.subr.mxu0 %v1412
      %1929 = vmatpush1.msra.mxu0 %v1411
      %1930 = vmatprep.subr.mxu0 %v1416
      %1931 = vmatpush1.msra.mxu0 %v1415
      %1932 = vmatprep.subr.mxu0 %v1420
      %1933 = vmatpush1.msra.mxu0 %v1419
      %1934 = vmatprep.subr.mxu0 %v1424
      %1935 = vmatpush1.msra.mxu0 %v1423
      %1936 = vmatprep.subr.mxu0 %v1428
      %1937 = vmatpush1.msra.mxu0 %v1427
      %1938 = vmatprep.subr.mxu0 %v1432
      %1939 = vmatpush1.msra.mxu0 %v1431
      %1940 = vmatprep.subr.mxu0 %v1436
      %1941 = vmatpush1.msra.mxu0 %v1435
      %1942 = vmatprep.subr.mxu0 %v1440
      %1943 = vmatpush1.msra.mxu0 %v1439
      %1944 = vmatprep.subr.mxu0 %v1444
      %1945 = vmatpush1.msra.mxu0 %v1443
      %1946 = vmatprep.subr.mxu0 %v1448
      %1947 = vmatpush1.msra.mxu0 %v1447
      %1948 = vmatprep.subr.mxu0 %v1452
      %1949 = vmatpush1.msra.mxu0 %v1451
      %1950 = vmatprep.subr.mxu0 %v1456
      %1951 = vmatpush1.msra.mxu0 %v1455
      %1952 = vmatprep.subr.mxu0 %v1460
      %1953 = vmatpush1.msra.mxu0 %v1459
      %1954 = vmatprep.subr.mxu0 %v1464
      %1955 = vmatpush1.msra.mxu0 %v1463
      %1956 = vmatprep.subr.mxu0 %v1468
      %1957 = vmatpush1.msra.mxu0 %v1467
      %1958 = vmatprep.subr.mxu0 %v1472
      %1959 = vmatpush1.msra.mxu0 %v1471
      %1960 = vmatprep.subr.mxu0 %v1476
      %1961 = vmatpush1.msra.mxu0 %v1475
      %1962 = vmatprep.subr.mxu0 %v1480
      %1963 = vmatpush1.msra.mxu0 %v1479
      %1964 = vmatprep.subr.mxu0 %v1484
      %1965 = vmatpush1.msra.mxu0 %v1483
      %1966 = vmatprep.subr.mxu0 %v1488
      %1967 = vmatpush1.msra.mxu0 %v1487
      %1968 = vmatprep.subr.mxu0 %v1492
      %1969 = vmatpush1.msra.mxu0 %v1491
      %1970 = vmatprep.subr.mxu0 %v1496
      %1971 = vmatpush1.msra.mxu0 %v1495
      %1972 = vmatprep.subr.mxu0 %v1500
      %1973 = vmatpush1.msra.mxu0 %v1499
      %1974 = vmatprep.subr.mxu0 %v1504
      %1975 = vmatpush1.msra.mxu0 %v1503
      %1976 = vmatprep.subr.mxu0 %v1508
      %1977 = vmatpush1.msra.mxu0 %v1507
      %1978 = vmatprep.subr.mxu0 %v1512
      %1979 = vmatpush1.msra.mxu0 %v1511
      %1980 = vmatprep.subr.mxu0 %v1516
      %1981 = vmatpush1.msra.mxu0 %v1515
      %1982 = vmatprep.subr.mxu0 %v1520
      %1983 = vmatpush1.msra.mxu0 %v1519
      %1984 = vmatprep.subr.mxu0 %v1524
      %1985 = vmatpush1.msra.mxu0 %v1523
      %1986 = vmatprep.subr.mxu0 %v1528
      %1987 = vmatpush1.msra.mxu0 %v1527
      %1988 = vmatprep.mubr.f32.mxu0 %v1827
      %1989 = vmatmul.mubr.f32.gmra.mrb[0].mxu0 %v1825
      %v1990 = vpop.f32.mrb[0].mxu0
      %v1991 = vadd.f32 %v1920, %v1990
      %v1992 = vpop.f32.mrb[0].mxu0
      %v1993 = vadd.f32 %v1922, %v1992
      %1994 = vdwg.mxu0
      %1995 = vmatprep.subr.mxu0 %v1532
      %1996 = vmatpush1.msra.mxu0 %v1531
      %1997 = vmatprep.subr.mxu0 %v1536
      %1998 = vmatpush1.msra.mxu0 %v1535
      %1999 = vmatprep.subr.mxu0 %v1540
      %2000 = vmatpush1.msra.mxu0 %v1539
      %2001 = vmatprep.subr.mxu0 %v1544
      %2002 = vmatpush1.msra.mxu0 %v1543
      %2003 = vmatprep.subr.mxu0 %v1548
      %2004 = vmatpush1.msra.mxu0 %v1547
      %2005 = vmatprep.subr.mxu0 %v1552
      %2006 = vmatpush1.msra.mxu0 %v1551
      %2007 = vmatprep.subr.mxu0 %v1556
      %2008 = vmatpush1.msra.mxu0 %v1555
      %2009 = vmatprep.subr.mxu0 %v1560
      %2010 = vmatpush1.msra.mxu0 %v1559
      %2011 = vmatprep.subr.mxu0 %v1564
      %2012 = vmatpush1.msra.mxu0 %v1563
      %2013 = vmatprep.subr.mxu0 %v1568
      %2014 = vmatpush1.msra.mxu0 %v1567
      %2015 = vmatprep.subr.mxu0 %v1572
      %2016 = vmatpush1.msra.mxu0 %v1571
      %2017 = vmatprep.subr.mxu0 %v1576
      %2018 = vmatpush1.msra.mxu0 %v1575
      %2019 = vmatprep.subr.mxu0 %v1580
      %2020 = vmatpush1.msra.mxu0 %v1579
      %2021 = vmatprep.subr.mxu0 %v1584
      %2022 = vmatpush1.msra.mxu0 %v1583
      %2023 = vmatprep.subr.mxu0 %v1588
      %2024 = vmatpush1.msra.mxu0 %v1587
      %2025 = vmatprep.subr.mxu0 %v1592
      %2026 = vmatpush1.msra.mxu0 %v1591
      %2027 = vmatprep.subr.mxu0 %v1596
      %2028 = vmatpush1.msra.mxu0 %v1595
      %2029 = vmatprep.subr.mxu0 %v1600
      %2030 = vmatpush1.msra.mxu0 %v1599
      %2031 = vmatprep.subr.mxu0 %v1604
      %2032 = vmatpush1.msra.mxu0 %v1603
      %2033 = vmatprep.subr.mxu0 %v1608
      %2034 = vmatpush1.msra.mxu0 %v1607
      %2035 = vmatprep.subr.mxu0 %v1612
      %2036 = vmatpush1.msra.mxu0 %v1611
      %2037 = vmatprep.subr.mxu0 %v1616
      %2038 = vmatpush1.msra.mxu0 %v1615
      %2039 = vmatprep.subr.mxu0 %v1620
      %2040 = vmatpush1.msra.mxu0 %v1619
      %2041 = vmatprep.subr.mxu0 %v1624
      %2042 = vmatpush1.msra.mxu0 %v1623
      %2043 = vmatprep.subr.mxu0 %v1628
      %2044 = vmatpush1.msra.mxu0 %v1627
      %2045 = vmatprep.subr.mxu0 %v1632
      %2046 = vmatpush1.msra.mxu0 %v1631
      %2047 = vmatprep.subr.mxu0 %v1636
      %2048 = vmatpush1.msra.mxu0 %v1635
      %2049 = vmatprep.subr.mxu0 %v1640
      %2050 = vmatpush1.msra.mxu0 %v1639
      %2051 = vmatprep.subr.mxu0 %v1644
      %2052 = vmatpush1.msra.mxu0 %v1643
      %2053 = vmatprep.subr.mxu0 %v1648
      %2054 = vmatpush1.msra.mxu0 %v1647
      %2055 = vmatprep.subr.mxu0 %v1652
      %2056 = vmatpush1.msra.mxu0 %v1651
      %2057 = vmatprep.subr.mxu0 %v1656
      %2058 = vmatpush1.msra.mxu0 %v1655
      %2059 = vmatprep.mubr.f32.mxu0 %v1843
      %2060 = vmatmul.mubr.f32.gmra.mrb[0].mxu0 %v1835
      %v2061 = vpop.f32.mrb[0].mxu0
      %v2062 = vadd.f32 %v1991, %v2061
      %v2063 = vpop.f32.mrb[0].mxu0
      %v2064 = vadd.f32 %v1993, %v2063
      %2065 = vdwg.mxu0
      %2066 = vmatprep.subr.mxu0 %v1660
      %2067 = vmatpush1.msra.mxu0 %v1659
      %2068 = vmatprep.subr.mxu0 %v1664
      %2069 = vmatpush1.msra.mxu0 %v1663
      %2070 = vmatprep.subr.mxu0 %v1668
      %2071 = vmatpush1.msra.mxu0 %v1667
      %2072 = vmatprep.subr.mxu0 %v1672
      %2073 = vmatpush1.msra.mxu0 %v1671
      %2074 = vmatprep.subr.mxu0 %v1676
      %2075 = vmatpush1.msra.mxu0 %v1675
      %2076 = vmatprep.subr.mxu0 %v1680
      %2077 = vmatpush1.msra.mxu0 %v1679
      %2078 = vmatprep.subr.mxu0 %v1684
      %2079 = vmatpush1.msra.mxu0 %v1683
      %2080 = vmatprep.subr.mxu0 %v1688
      %2081 = vmatpush1.msra.mxu0 %v1687
      %2082 = vmatprep.subr.mxu0 %v1692
      %2083 = vmatpush1.msra.mxu0 %v1691
      %2084 = vmatprep.subr.mxu0 %v1696
      %2085 = vmatpush1.msra.mxu0 %v1695
      %2086 = vmatprep.subr.mxu0 %v1700
      %2087 = vmatpush1.msra.mxu0 %v1699
      %2088 = vmatprep.subr.mxu0 %v1704
      %2089 = vmatpush1.msra.mxu0 %v1703
      %2090 = vmatprep.subr.mxu0 %v1708
      %2091 = vmatpush1.msra.mxu0 %v1707
      %2092 = vmatprep.subr.mxu0 %v1712
      %2093 = vmatpush1.msra.mxu0 %v1711
      %2094 = vmatprep.subr.mxu0 %v1716
      %2095 = vmatpush1.msra.mxu0 %v1715
      %2096 = vmatprep.subr.mxu0 %v1720
      %2097 = vmatpush1.msra.mxu0 %v1719
      %2098 = vmatprep.subr.mxu0 %v1724
      %2099 = vmatpush1.msra.mxu0 %v1723
      %2100 = vmatprep.subr.mxu0 %v1728
      %2101 = vmatpush1.msra.mxu0 %v1727
      %2102 = vmatprep.subr.mxu0 %v1732
      %2103 = vmatpush1.msra.mxu0 %v1731
      %2104 = vmatprep.subr.mxu0 %v1736
      %2105 = vmatpush1.msra.mxu0 %v1735
      %2106 = vmatprep.subr.mxu0 %v1740
      %2107 = vmatpush1.msra.mxu0 %v1739
      %2108 = vmatprep.subr.mxu0 %v1744
      %2109 = vmatpush1.msra.mxu0 %v1743
      %2110 = vmatprep.subr.mxu0 %v1748
      %2111 = vmatpush1.msra.mxu0 %v1747
      %2112 = vmatprep.subr.mxu0 %v1752
      %2113 = vmatpush1.msra.mxu0 %v1751
      %2114 = vmatprep.subr.mxu0 %v1756
      %2115 = vmatpush1.msra.mxu0 %v1755
      %2116 = vmatprep.subr.mxu0 %v1760
      %2117 = vmatpush1.msra.mxu0 %v1759
      %2118 = vmatprep.subr.mxu0 %v1764
      %2119 = vmatpush1.msra.mxu0 %v1763
      %2120 = vmatprep.subr.mxu0 %v1768
      %2121 = vmatpush1.msra.mxu0 %v1767
      %2122 = vmatprep.subr.mxu0 %v1772
      %2123 = vmatpush1.msra.mxu0 %v1771
      %2124 = vmatprep.subr.mxu0 %v1776
      %2125 = vmatpush1.msra.mxu0 %v1775
      %2126 = vmatprep.subr.mxu0 %v1780
      %2127 = vmatpush1.msra.mxu0 %v1779
      %2128 = vmatprep.subr.mxu0 %v1784
      %2129 = vmatpush1.msra.mxu0 %v1783
      %2130 = vmatprep.mubr.f32.mxu0 %v1844
      %2131 = vmatmul.mubr.f32.gmra.mrb[0].mxu0 %v1842
      %v2132 = vpop.f32.mrb[0].mxu0
      %v2133 = vadd.f32 %v2062, %v2132
      %v2134 = vpop.f32.mrb[0].mxu0
      %v2135 = vadd.f32 %v2064, %v2134
      %2136 = vdwg.mxu0
      %2137 = vmatprep.subr.mxu0 %v1278
      %2138 = vmatpush1.msra.mxu0 %v1277
      %2139 = vmatprep.subr.mxu0 %v1282
      %2140 = vmatpush1.msra.mxu0 %v1281
      %2141 = vmatprep.subr.mxu0 %v1286
      %2142 = vmatpush1.msra.mxu0 %v1285
      %2143 = vmatprep.subr.mxu0 %v1290
      %2144 = vmatpush1.msra.mxu0 %v1289
      %2145 = vmatprep.subr.mxu0 %v1294
      %2146 = vmatpush1.msra.mxu0 %v1293
      %2147 = vmatprep.subr.mxu0 %v1298
      %2148 = vmatpush1.msra.mxu0 %v1297
      %2149 = vmatprep.subr.mxu0 %v1302
      %2150 = vmatpush1.msra.mxu0 %v1301
      %2151 = vmatprep.subr.mxu0 %v1306
      %2152 = vmatpush1.msra.mxu0 %v1305
      %2153 = vmatprep.subr.mxu0 %v1310
      %2154 = vmatpush1.msra.mxu0 %v1309
      %2155 = vmatprep.subr.mxu0 %v1314
      %2156 = vmatpush1.msra.mxu0 %v1313
      %2157 = vmatprep.subr.mxu0 %v1318
      %2158 = vmatpush1.msra.mxu0 %v1317
      %2159 = vmatprep.subr.mxu0 %v1322
      %2160 = vmatpush1.msra.mxu0 %v1321
      %2161 = vmatprep.subr.mxu0 %v1326
      %2162 = vmatpush1.msra.mxu0 %v1325
      %2163 = vmatprep.subr.mxu0 %v1330
      %2164 = vmatpush1.msra.mxu0 %v1329
      %2165 = vmatprep.subr.mxu0 %v1334
      %2166 = vmatpush1.msra.mxu0 %v1333
      %2167 = vmatprep.subr.mxu0 %v1338
      %2168 = vmatpush1.msra.mxu0 %v1337
      %2169 = vmatprep.subr.mxu0 %v1342
      %2170 = vmatpush1.msra.mxu0 %v1341
      %2171 = vmatprep.subr.mxu0 %v1346
      %2172 = vmatpush1.msra.mxu0 %v1345
      %2173 = vmatprep.subr.mxu0 %v1350
      %2174 = vmatpush1.msra.mxu0 %v1349
      %2175 = vmatprep.subr.mxu0 %v1354
      %2176 = vmatpush1.msra.mxu0 %v1353
      %2177 = vmatprep.subr.mxu0 %v1358
      %2178 = vmatpush1.msra.mxu0 %v1357
      %2179 = vmatprep.subr.mxu0 %v1362
      %2180 = vmatpush1.msra.mxu0 %v1361
      %2181 = vmatprep.subr.mxu0 %v1366
      %2182 = vmatpush1.msra.mxu0 %v1365
      %2183 = vmatprep.subr.mxu0 %v1370
      %2184 = vmatpush1.msra.mxu0 %v1369
      %2185 = vmatprep.subr.mxu0 %v1374
      %2186 = vmatpush1.msra.mxu0 %v1373
      %2187 = vmatprep.subr.mxu0 %v1378
      %2188 = vmatpush1.msra.mxu0 %v1377
      %2189 = vmatprep.subr.mxu0 %v1382
      %2190 = vmatpush1.msra.mxu0 %v1381
      %2191 = vmatprep.subr.mxu0 %v1386
      %2192 = vmatpush1.msra.mxu0 %v1385
      %2193 = vmatprep.subr.mxu0 %v1390
      %2194 = vmatpush1.msra.mxu0 %v1389
      %2195 = vmatprep.subr.mxu0 %v1394
      %2196 = vmatpush1.msra.mxu0 %v1393
      %2197 = vmatprep.subr.mxu0 %v1398
      %2198 = vmatpush1.msra.mxu0 %v1397
      %2199 = vmatprep.subr.mxu0 %v1402
      %2200 = vmatpush1.msra.mxu0 %v1401
      %2201 = vmatprep.mubr.f32.mxu0 %v1826
      %2202 = vmatmul.mubr.f32.gmra.mrb[0].mxu0 %v1818
      %v2203 = vpop.f32.mrb[0].mxu0
      %v2204 = vadd.f32 %v1800, %v2203
      %v2205 = vpop.f32.mrb[0].mxu0
      %v2206 = vadd.f32 %v1804, %v2205
      %2207 = vdwg.mxu0
      %2208 = vmatprep.subr.mxu0 %v1406
      %2209 = vmatpush1.msra.mxu0 %v1405
      %2210 = vmatprep.subr.mxu0 %v1410
      %2211 = vmatpush1.msra.mxu0 %v1409
      %2212 = vmatprep.subr.mxu0 %v1414
      %2213 = vmatpush1.msra.mxu0 %v1413
      %2214 = vmatprep.subr.mxu0 %v1418
      %2215 = vmatpush1.msra.mxu0 %v1417
      %2216 = vmatprep.subr.mxu0 %v1422
      %2217 = vmatpush1.msra.mxu0 %v1421
      %2218 = vmatprep.subr.mxu0 %v1426
      %2219 = vmatpush1.msra.mxu0 %v1425
      %2220 = vmatprep.subr.mxu0 %v1430
      %2221 = vmatpush1.msra.mxu0 %v1429
      %2222 = vmatprep.subr.mxu0 %v1434
      %2223 = vmatpush1.msra.mxu0 %v1433
      %2224 = vmatprep.subr.mxu0 %v1438
      %2225 = vmatpush1.msra.mxu0 %v1437
      %2226 = vmatprep.subr.mxu0 %v1442
      %2227 = vmatpush1.msra.mxu0 %v1441
      %2228 = vmatprep.subr.mxu0 %v1446
      %2229 = vmatpush1.msra.mxu0 %v1445
      %2230 = vmatprep.subr.mxu0 %v1450
      %2231 = vmatpush1.msra.mxu0 %v1449
      %2232 = vmatprep.subr.mxu0 %v1454
      %2233 = vmatpush1.msra.mxu0 %v1453
      %2234 = vmatprep.subr.mxu0 %v1458
      %2235 = vmatpush1.msra.mxu0 %v1457
      %2236 = vmatprep.subr.mxu0 %v1462
      %2237 = vmatpush1.msra.mxu0 %v1461
      %2238 = vmatprep.subr.mxu0 %v1466
      %2239 = vmatpush1.msra.mxu0 %v1465
      %2240 = vmatprep.subr.mxu0 %v1470
      %2241 = vmatpush1.msra.mxu0 %v1469
      %2242 = vmatprep.subr.mxu0 %v1474
      %2243 = vmatpush1.msra.mxu0 %v1473
      %2244 = vmatprep.subr.mxu0 %v1478
      %2245 = vmatpush1.msra.mxu0 %v1477
      %2246 = vmatprep.subr.mxu0 %v1482
      %2247 = vmatpush1.msra.mxu0 %v1481
      %2248 = vmatprep.subr.mxu0 %v1486
      %2249 = vmatpush1.msra.mxu0 %v1485
      %2250 = vmatprep.subr.mxu0 %v1490
      %2251 = vmatpush1.msra.mxu0 %v1489
      %2252 = vmatprep.subr.mxu0 %v1494
      %2253 = vmatpush1.msra.mxu0 %v1493
      %2254 = vmatprep.subr.mxu0 %v1498
      %2255 = vmatpush1.msra.mxu0 %v1497
      %2256 = vmatprep.subr.mxu0 %v1502
      %2257 = vmatpush1.msra.mxu0 %v1501
      %2258 = vmatprep.subr.mxu0 %v1506
      %2259 = vmatpush1.msra.mxu0 %v1505
      %2260 = vmatprep.subr.mxu0 %v1510
      %2261 = vmatpush1.msra.mxu0 %v1509
      %2262 = vmatprep.subr.mxu0 %v1514
      %2263 = vmatpush1.msra.mxu0 %v1513
      %2264 = vmatprep.subr.mxu0 %v1518
      %2265 = vmatpush1.msra.mxu0 %v1517
      %2266 = vmatprep.subr.mxu0 %v1522
      %2267 = vmatpush1.msra.mxu0 %v1521
      %2268 = vmatprep.subr.mxu0 %v1526
      %2269 = vmatpush1.msra.mxu0 %v1525
      %2270 = vmatprep.subr.mxu0 %v1530
      %2271 = vmatpush1.msra.mxu0 %v1529
      %2272 = vmatprep.mubr.f32.mxu0 %v1827
      %2273 = vmatmul.mubr.f32.gmra.mrb[0].mxu0 %v1825
      %v2274 = vpop.f32.mrb[0].mxu0
      %v2275 = vadd.f32 %v2204, %v2274
      %v2276 = vpop.f32.mrb[0].mxu0
      %v2277 = vadd.f32 %v2206, %v2276
      %2278 = vdwg.mxu0
      %2279 = vmatprep.subr.mxu0 %v1534
      %2280 = vmatpush1.msra.mxu0 %v1533
      %2281 = vmatprep.subr.mxu0 %v1538
      %2282 = vmatpush1.msra.mxu0 %v1537
      %2283 = vmatprep.subr.mxu0 %v1542
      %2284 = vmatpush1.msra.mxu0 %v1541
      %2285 = vmatprep.subr.mxu0 %v1546
      %2286 = vmatpush1.msra.mxu0 %v1545
      %2287 = vmatprep.subr.mxu0 %v1550
      %2288 = vmatpush1.msra.mxu0 %v1549
      %2289 = vmatprep.subr.mxu0 %v1554
      %2290 = vmatpush1.msra.mxu0 %v1553
      %2291 = vmatprep.subr.mxu0 %v1558
      %2292 = vmatpush1.msra.mxu0 %v1557
      %2293 = vmatprep.subr.mxu0 %v1562
      %2294 = vmatpush1.msra.mxu0 %v1561
      %2295 = vmatprep.subr.mxu0 %v1566
      %2296 = vmatpush1.msra.mxu0 %v1565
      %2297 = vmatprep.subr.mxu0 %v1570
      %2298 = vmatpush1.msra.mxu0 %v1569
      %2299 = vmatprep.subr.mxu0 %v1574
      %2300 = vmatpush1.msra.mxu0 %v1573
      %2301 = vmatprep.subr.mxu0 %v1578
      %2302 = vmatpush1.msra.mxu0 %v1577
      %2303 = vmatprep.subr.mxu0 %v1582
      %2304 = vmatpush1.msra.mxu0 %v1581
      %2305 = vmatprep.subr.mxu0 %v1586
      %2306 = vmatpush1.msra.mxu0 %v1585
      %2307 = vmatprep.subr.mxu0 %v1590
      %2308 = vmatpush1.msra.mxu0 %v1589
      %2309 = vmatprep.subr.mxu0 %v1594
      %2310 = vmatpush1.msra.mxu0 %v1593
      %2311 = vmatprep.subr.mxu0 %v1598
      %2312 = vmatpush1.msra.mxu0 %v1597
      %2313 = vmatprep.subr.mxu0 %v1602
      %2314 = vmatpush1.msra.mxu0 %v1601
      %2315 = vmatprep.subr.mxu0 %v1606
      %2316 = vmatpush1.msra.mxu0 %v1605
      %2317 = vmatprep.subr.mxu0 %v1610
      %2318 = vmatpush1.msra.mxu0 %v1609
      %2319 = vmatprep.subr.mxu0 %v1614
      %2320 = vmatpush1.msra.mxu0 %v1613
      %2321 = vmatprep.subr.mxu0 %v1618
      %2322 = vmatpush1.msra.mxu0 %v1617
      %2323 = vmatprep.subr.mxu0 %v1622
      %2324 = vmatpush1.msra.mxu0 %v1621
      %2325 = vmatprep.subr.mxu0 %v1626
      %2326 = vmatpush1.msra.mxu0 %v1625
      %2327 = vmatprep.subr.mxu0 %v1630
      %2328 = vmatpush1.msra.mxu0 %v1629
      %2329 = vmatprep.subr.mxu0 %v1634
      %2330 = vmatpush1.msra.mxu0 %v1633
      %2331 = vmatprep.subr.mxu0 %v1638
      %2332 = vmatpush1.msra.mxu0 %v1637
      %2333 = vmatprep.subr.mxu0 %v1642
      %2334 = vmatpush1.msra.mxu0 %v1641
      %2335 = vmatprep.subr.mxu0 %v1646
      %2336 = vmatpush1.msra.mxu0 %v1645
      %2337 = vmatprep.subr.mxu0 %v1650
      %2338 = vmatpush1.msra.mxu0 %v1649
      %2339 = vmatprep.subr.mxu0 %v1654
      %2340 = vmatpush1.msra.mxu0 %v1653
      %2341 = vmatprep.subr.mxu0 %v1658
      %2342 = vmatpush1.msra.mxu0 %v1657
      %2343 = vmatprep.mubr.f32.mxu0 %v1843
      %2344 = vmatmul.mubr.f32.gmra.mrb[0].mxu0 %v1835
      %v2345 = vpop.f32.mrb[0].mxu0
      %v2346 = vadd.f32 %v2275, %v2345
      %v2347 = vpop.f32.mrb[0].mxu0
      %v2348 = vadd.f32 %v2277, %v2347
      %2349 = vdwg.mxu0
      %2350 = vmatprep.subr.mxu0 %v1662
      %2351 = vmatpush1.msra.mxu0 %v1661
      %2352 = vmatprep.subr.mxu0 %v1666
      %2353 = vmatpush1.msra.mxu0 %v1665
      %2354 = vmatprep.subr.mxu0 %v1670
      %2355 = vmatpush1.msra.mxu0 %v1669
      %2356 = vmatprep.subr.mxu0 %v1674
      %2357 = vmatpush1.msra.mxu0 %v1673
      %2358 = vmatprep.subr.mxu0 %v1678
      %2359 = vmatpush1.msra.mxu0 %v1677
      %2360 = vmatprep.subr.mxu0 %v1682
      %2361 = vmatpush1.msra.mxu0 %v1681
      %2362 = vmatprep.subr.mxu0 %v1686
      %2363 = vmatpush1.msra.mxu0 %v1685
      %2364 = vmatprep.subr.mxu0 %v1690
      %2365 = vmatpush1.msra.mxu0 %v1689
      %2366 = vmatprep.subr.mxu0 %v1694
      %2367 = vmatpush1.msra.mxu0 %v1693
      %2368 = vmatprep.subr.mxu0 %v1698
      %2369 = vmatpush1.msra.mxu0 %v1697
      %2370 = vmatprep.subr.mxu0 %v1702
      %2371 = vmatpush1.msra.mxu0 %v1701
      %2372 = vmatprep.subr.mxu0 %v1706
      %2373 = vmatpush1.msra.mxu0 %v1705
      %2374 = vmatprep.subr.mxu0 %v1710
      %2375 = vmatpush1.msra.mxu0 %v1709
      %2376 = vmatprep.subr.mxu0 %v1714
      %2377 = vmatpush1.msra.mxu0 %v1713
      %2378 = vmatprep.subr.mxu0 %v1718
      %2379 = vmatpush1.msra.mxu0 %v1717
      %2380 = vmatprep.subr.mxu0 %v1722
      %2381 = vmatpush1.msra.mxu0 %v1721
      %2382 = vmatprep.subr.mxu0 %v1726
      %2383 = vmatpush1.msra.mxu0 %v1725
      %2384 = vmatprep.subr.mxu0 %v1730
      %2385 = vmatpush1.msra.mxu0 %v1729
      %2386 = vmatprep.subr.mxu0 %v1734
      %2387 = vmatpush1.msra.mxu0 %v1733
      %2388 = vmatprep.subr.mxu0 %v1738
      %2389 = vmatpush1.msra.mxu0 %v1737
      %2390 = vmatprep.subr.mxu0 %v1742
      %2391 = vmatpush1.msra.mxu0 %v1741
      %2392 = vmatprep.subr.mxu0 %v1746
      %2393 = vmatpush1.msra.mxu0 %v1745
      %2394 = vmatprep.subr.mxu0 %v1750
      %2395 = vmatpush1.msra.mxu0 %v1749
      %2396 = vmatprep.subr.mxu0 %v1754
      %2397 = vmatpush1.msra.mxu0 %v1753
      %2398 = vmatprep.subr.mxu0 %v1758
      %2399 = vmatpush1.msra.mxu0 %v1757
      %2400 = vmatprep.subr.mxu0 %v1762
      %2401 = vmatpush1.msra.mxu0 %v1761
      %2402 = vmatprep.subr.mxu0 %v1766
      %2403 = vmatpush1.msra.mxu0 %v1765
      %2404 = vmatprep.subr.mxu0 %v1770
      %2405 = vmatpush1.msra.mxu0 %v1769
      %2406 = vmatprep.subr.mxu0 %v1774
      %2407 = vmatpush1.msra.mxu0 %v1773
      %2408 = vmatprep.subr.mxu0 %v1778
      %2409 = vmatpush1.msra.mxu0 %v1777
      %2410 = vmatprep.subr.mxu0 %v1782
      %2411 = vmatpush1.msra.mxu0 %v1781
      %2412 = vmatprep.subr.mxu0 %v1786
      %2413 = vmatpush1.msra.mxu0 %v1785
      %2414 = vmatprep.mubr.f32.mxu0 %v1844
      %2415 = vmatmul.mubr.f32.gmra.mrb[0].mxu0 %v1842
      %v2416 = vpop.f32.mrb[0].mxu0
      %v2417 = vadd.f32 %v2346, %v2416
      %v2418 = vpop.f32.mrb[0].mxu0
      %v2419 = vadd.f32 %v2348, %v2418
      %2420 = vdwg.mxu0
      %v2421 = vmax.f32 %v2133, 0.0
      %v2422 = vmax.f32 %v2135, 0.0
      %v2423 = vmax.f32 %v2417, 0.0
      %v2424 = vmax.f32 %v2419, 0.0
      %v2425 = vld [vmem:[#allocation17] sm:$0xff]
      %v2426 = vld [vmem:[#allocation17 + $0x8] sm:$0xff]
      %v2427 = vld [vmem:[#allocation17 + $0x10] sm:$0xff]
      %v2428 = vld [vmem:[#allocation17 + $0x18] sm:$0xff]
      %v2429 = vld [vmem:[#allocation17 + $0x20] sm:$0xff]
      %v2430 = vld [vmem:[#allocation17 + $0x28] sm:$0xff]
      %v2431 = vld [vmem:[#allocation17 + $0x30] sm:$0xff]
      %v2432 = vld [vmem:[#allocation17 + $0x38] sm:$0xff]
      %v2433 = vld [vmem:[#allocation17 + $0x40] sm:$0xff]
      %v2434 = vld [vmem:[#allocation17 + $0x48] sm:$0xff]
      %v2435 = vld [vmem:[#allocation17 + $0x50] sm:$0xff]
      %v2436 = vld [vmem:[#allocation17 + $0x58] sm:$0xff]
      %v2437 = vld [vmem:[#allocation17 + $0x60] sm:$0xff]
      %v2438 = vld [vmem:[#allocation17 + $0x68] sm:$0xff]
      %v2439 = vld [vmem:[#allocation17 + $0x70] sm:$0xff]
      %v2440 = vld [vmem:[#allocation17 + $0x78] sm:$0xff]
      %v2441 = vld [vmem:[#allocation17 + $0x80] sm:$0xff]
      %v2442 = vld [vmem:[#allocation17 + $0x88] sm:$0xff]
      %v2443 = vld [vmem:[#allocation17 + $0x90] sm:$0xff]
      %v2444 = vld [vmem:[#allocation17 + $0x98] sm:$0xff]
      %v2445 = vld [vmem:[#allocation17 + $0xa0] sm:$0xff]
      %v2446 = vld [vmem:[#allocation17 + $0xa8] sm:$0xff]
      %v2447 = vld [vmem:[#allocation17 + $0xb0] sm:$0xff]
      %v2448 = vld [vmem:[#allocation17 + $0xb8] sm:$0xff]
      %v2449 = vld [vmem:[#allocation17 + $0xc0] sm:$0xff]
      %v2450 = vld [vmem:[#allocation17 + $0xc8] sm:$0xff]
      %v2451 = vld [vmem:[#allocation17 + $0xd0] sm:$0xff]
      %v2452 = vld [vmem:[#allocation17 + $0xd8] sm:$0xff]
      %v2453 = vld [vmem:[#allocation17 + $0xe0] sm:$0xff]
      %v2454 = vld [vmem:[#allocation17 + $0xe8] sm:$0xff]
      %v2455 = vld [vmem:[#allocation17 + $0xf0] sm:$0xff]
      %v2456 = vld [vmem:[#allocation17 + $0xf8] sm:$0xff]
      %v2457 = vld [vmem:[#allocation17 + $0x100] sm:$0xff]
      %v2458 = vld [vmem:[#allocation17 + $0x108] sm:$0xff]
      %v2459 = vld [vmem:[#allocation17 + $0x110] sm:$0xff]
      %v2460 = vld [vmem:[#allocation17 + $0x118] sm:$0xff]
      %v2461 = vld [vmem:[#allocation17 + $0x120] sm:$0xff]
      %v2462 = vld [vmem:[#allocation17 + $0x128] sm:$0xff]
      %v2463 = vld [vmem:[#allocation17 + $0x130] sm:$0xff]
      %v2464 = vld [vmem:[#allocation17 + $0x138] sm:$0xff]
      %v2465 = vld [vmem:[#allocation17 + $0x140] sm:$0xff]
      %v2466 = vld [vmem:[#allocation17 + $0x148] sm:$0xff]
      %v2467 = vld [vmem:[#allocation17 + $0x150] sm:$0xff]
      %v2468 = vld [vmem:[#allocation17 + $0x158] sm:$0xff]
      %v2469 = vld [vmem:[#allocation17 + $0x160] sm:$0xff]
      %v2470 = vld [vmem:[#allocation17 + $0x168] sm:$0xff]
      %v2471 = vld [vmem:[#allocation17 + $0x170] sm:$0xff]
      %v2472 = vld [vmem:[#allocation17 + $0x178] sm:$0xff]
      %v2473 = vld [vmem:[#allocation17 + $0x180] sm:$0xff]
      %v2474 = vld [vmem:[#allocation17 + $0x188] sm:$0xff]
      %v2475 = vld [vmem:[#allocation17 + $0x190] sm:$0xff]
      %v2476 = vld [vmem:[#allocation17 + $0x198] sm:$0xff]
      %v2477 = vld [vmem:[#allocation17 + $0x1a0] sm:$0xff]
      %v2478 = vld [vmem:[#allocation17 + $0x1a8] sm:$0xff]
      %v2479 = vld [vmem:[#allocation17 + $0x1b0] sm:$0xff]
      %v2480 = vld [vmem:[#allocation17 + $0x1b8] sm:$0xff]
      %v2481 = vld [vmem:[#allocation17 + $0x1c0] sm:$0xff]
      %v2482 = vld [vmem:[#allocation17 + $0x1c8] sm:$0xff]
      %v2483 = vld [vmem:[#allocation17 + $0x1d0] sm:$0xff]
      %v2484 = vld [vmem:[#allocation17 + $0x1d8] sm:$0xff]
      %v2485 = vld [vmem:[#allocation17 + $0x1e0] sm:$0xff]
      %v2486 = vld [vmem:[#allocation17 + $0x1e8] sm:$0xff]
      %v2487 = vld [vmem:[#allocation17 + $0x1f0] sm:$0xff]
      %v2488 = vld [vmem:[#allocation17 + $0x1f8] sm:$0xff]
      %v2489 = vld [vmem:[#allocation17 + $0x200] sm:$0xff]
      %v2490 = vld [vmem:[#allocation17 + $0x208] sm:$0xff]
      %v2491 = vld [vmem:[#allocation17 + $0x210] sm:$0xff]
      %v2492 = vld [vmem:[#allocation17 + $0x218] sm:$0xff]
      %v2493 = vld [vmem:[#allocation17 + $0x220] sm:$0xff]
      %v2494 = vld [vmem:[#allocation17 + $0x228] sm:$0xff]
      %v2495 = vld [vmem:[#allocation17 + $0x230] sm:$0xff]
      %v2496 = vld [vmem:[#allocation17 + $0x238] sm:$0xff]
      %v2497 = vld [vmem:[#allocation17 + $0x240] sm:$0xff]
      %v2498 = vld [vmem:[#allocation17 + $0x248] sm:$0xff]
      %v2499 = vld [vmem:[#allocation17 + $0x250] sm:$0xff]
      %v2500 = vld [vmem:[#allocation17 + $0x258] sm:$0xff]
      %v2501 = vld [vmem:[#allocation17 + $0x260] sm:$0xff]
      %v2502 = vld [vmem:[#allocation17 + $0x268] sm:$0xff]
      %v2503 = vld [vmem:[#allocation17 + $0x270] sm:$0xff]
      %v2504 = vld [vmem:[#allocation17 + $0x278] sm:$0xff]
      %v2505 = vld [vmem:[#allocation17 + $0x280] sm:$0xff]
      %v2506 = vld [vmem:[#allocation17 + $0x288] sm:$0xff]
      %v2507 = vld [vmem:[#allocation17 + $0x290] sm:$0xff]
      %v2508 = vld [vmem:[#allocation17 + $0x298] sm:$0xff]
      %v2509 = vld [vmem:[#allocation17 + $0x2a0] sm:$0xff]
      %v2510 = vld [vmem:[#allocation17 + $0x2a8] sm:$0xff]
      %v2511 = vld [vmem:[#allocation17 + $0x2b0] sm:$0xff]
      %v2512 = vld [vmem:[#allocation17 + $0x2b8] sm:$0xff]
      %v2513 = vld [vmem:[#allocation17 + $0x2c0] sm:$0xff]
      %v2514 = vld [vmem:[#allocation17 + $0x2c8] sm:$0xff]
      %v2515 = vld [vmem:[#allocation17 + $0x2d0] sm:$0xff]
      %v2516 = vld [vmem:[#allocation17 + $0x2d8] sm:$0xff]
      %v2517 = vld [vmem:[#allocation17 + $0x2e0] sm:$0xff]
      %v2518 = vld [vmem:[#allocation17 + $0x2e8] sm:$0xff]
      %v2519 = vld [vmem:[#allocation17 + $0x2f0] sm:$0xff]
      %v2520 = vld [vmem:[#allocation17 + $0x2f8] sm:$0xff]
      %v2521 = vld [vmem:[#allocation17 + $0x300] sm:$0xff]
      %v2522 = vld [vmem:[#allocation17 + $0x308] sm:$0xff]
      %v2523 = vld [vmem:[#allocation17 + $0x310] sm:$0xff]
      %v2524 = vld [vmem:[#allocation17 + $0x318] sm:$0xff]
      %v2525 = vld [vmem:[#allocation17 + $0x320] sm:$0xff]
      %v2526 = vld [vmem:[#allocation17 + $0x328] sm:$0xff]
      %v2527 = vld [vmem:[#allocation17 + $0x330] sm:$0xff]
      %v2528 = vld [vmem:[#allocation17 + $0x338] sm:$0xff]
      %v2529 = vld [vmem:[#allocation17 + $0x340] sm:$0xff]
      %v2530 = vld [vmem:[#allocation17 + $0x348] sm:$0xff]
      %v2531 = vld [vmem:[#allocation17 + $0x350] sm:$0xff]
      %v2532 = vld [vmem:[#allocation17 + $0x358] sm:$0xff]
      %v2533 = vld [vmem:[#allocation17 + $0x360] sm:$0xff]
      %v2534 = vld [vmem:[#allocation17 + $0x368] sm:$0xff]
      %v2535 = vld [vmem:[#allocation17 + $0x370] sm:$0xff]
      %v2536 = vld [vmem:[#allocation17 + $0x378] sm:$0xff]
      %v2537 = vld [vmem:[#allocation17 + $0x380] sm:$0xff]
      %v2538 = vld [vmem:[#allocation17 + $0x388] sm:$0xff]
      %v2539 = vld [vmem:[#allocation17 + $0x390] sm:$0xff]
      %v2540 = vld [vmem:[#allocation17 + $0x398] sm:$0xff]
      %v2541 = vld [vmem:[#allocation17 + $0x3a0] sm:$0xff]
      %v2542 = vld [vmem:[#allocation17 + $0x3a8] sm:$0xff]
      %v2543 = vld [vmem:[#allocation17 + $0x3b0] sm:$0xff]
      %v2544 = vld [vmem:[#allocation17 + $0x3b8] sm:$0xff]
      %v2545 = vld [vmem:[#allocation17 + $0x3c0] sm:$0xff]
      %v2546 = vld [vmem:[#allocation17 + $0x3c8] sm:$0xff]
      %v2547 = vld [vmem:[#allocation17 + $0x3d0] sm:$0xff]
      %v2548 = vld [vmem:[#allocation17 + $0x3d8] sm:$0xff]
      %v2549 = vld [vmem:[#allocation17 + $0x3e0] sm:$0xff]
      %v2550 = vld [vmem:[#allocation17 + $0x3e8] sm:$0xff]
      %v2551 = vld [vmem:[#allocation17 + $0x3f0] sm:$0xff]
      %v2552 = vld [vmem:[#allocation17 + $0x3f8] sm:$0xff]
      %v2553 = vld [vmem:[#allocation18] sm:$0x3]
      %v2555 = vlaneseq
      %v2556 = vshrl.u32 %v2555, 7
      %v2557 = vsub.s32 0, %v2556
      %v2558 = vrot.slane %v2553, %v2557
      %v2559 = vlaneseq
      %v2560 = vshrl.u32 %v2559, 7
      %v2561 = vsub.s32 1, %v2560
      %v2562 = vrot.slane %v2553, %v2561
      %2565 = vmatprep.subr.mxu0 %v2426
      %2566 = vmatpush1.msra.mxu0 %v2425
      %2567 = vmatprep.subr.mxu0 %v2428
      %2568 = vmatpush1.msra.mxu0 %v2427
      %2569 = vmatprep.subr.mxu0 %v2430
      %2570 = vmatpush1.msra.mxu0 %v2429
      %2571 = vmatprep.subr.mxu0 %v2432
      %2572 = vmatpush1.msra.mxu0 %v2431
      %2573 = vmatprep.subr.mxu0 %v2434
      %2574 = vmatpush1.msra.mxu0 %v2433
      %2575 = vmatprep.subr.mxu0 %v2436
      %2576 = vmatpush1.msra.mxu0 %v2435
      %2577 = vmatprep.subr.mxu0 %v2438
      %2578 = vmatpush1.msra.mxu0 %v2437
      %2579 = vmatprep.subr.mxu0 %v2440
      %2580 = vmatpush1.msra.mxu0 %v2439
      %2581 = vmatprep.subr.mxu0 %v2442
      %2582 = vmatpush1.msra.mxu0 %v2441
      %2583 = vmatprep.subr.mxu0 %v2444
      %2584 = vmatpush1.msra.mxu0 %v2443
      %2585 = vmatprep.subr.mxu0 %v2446
      %2586 = vmatpush1.msra.mxu0 %v2445
      %2587 = vmatprep.subr.mxu0 %v2448
      %2588 = vmatpush1.msra.mxu0 %v2447
      %2589 = vmatprep.subr.mxu0 %v2450
      %2590 = vmatpush1.msra.mxu0 %v2449
      %2591 = vmatprep.subr.mxu0 %v2452
      %2592 = vmatpush1.msra.mxu0 %v2451
      %2593 = vmatprep.subr.mxu0 %v2454
      %2594 = vmatpush1.msra.mxu0 %v2453
      %2595 = vmatprep.subr.mxu0 %v2456
      %2596 = vmatpush1.msra.mxu0 %v2455
      %2597 = vmatprep.subr.mxu0 %v2458
      %2598 = vmatpush1.msra.mxu0 %v2457
      %2599 = vmatprep.subr.mxu0 %v2460
      %2600 = vmatpush1.msra.mxu0 %v2459
      %2601 = vmatprep.subr.mxu0 %v2462
      %2602 = vmatpush1.msra.mxu0 %v2461
      %2603 = vmatprep.subr.mxu0 %v2464
      %2604 = vmatpush1.msra.mxu0 %v2463
      %2605 = vmatprep.subr.mxu0 %v2466
      %2606 = vmatpush1.msra.mxu0 %v2465
      %2607 = vmatprep.subr.mxu0 %v2468
      %2608 = vmatpush1.msra.mxu0 %v2467
      %2609 = vmatprep.subr.mxu0 %v2470
      %2610 = vmatpush1.msra.mxu0 %v2469
      %2611 = vmatprep.subr.mxu0 %v2472
      %2612 = vmatpush1.msra.mxu0 %v2471
      %2613 = vmatprep.subr.mxu0 %v2474
      %2614 = vmatpush1.msra.mxu0 %v2473
      %2615 = vmatprep.subr.mxu0 %v2476
      %2616 = vmatpush1.msra.mxu0 %v2475
      %2617 = vmatprep.subr.mxu0 %v2478
      %2618 = vmatpush1.msra.mxu0 %v2477
      %2619 = vmatprep.subr.mxu0 %v2480
      %2620 = vmatpush1.msra.mxu0 %v2479
      %2621 = vmatprep.subr.mxu0 %v2482
      %2622 = vmatpush1.msra.mxu0 %v2481
      %2623 = vmatprep.subr.mxu0 %v2484
      %2624 = vmatpush1.msra.mxu0 %v2483
      %2625 = vmatprep.subr.mxu0 %v2486
      %2626 = vmatpush1.msra.mxu0 %v2485
      %2627 = vmatprep.subr.mxu0 %v2488
      %2628 = vmatpush1.msra.mxu0 %v2487
      %2629 = vmatprep.mubr.f32.mxu0 %v2422
      %2630 = vmatmul.mubr.f32.gmra.mrb[0].mxu0 %v2421
      %v2631 = vpop.f32.mrb[0].mxu0
      %v2632 = vadd.f32 %v2558, %v2631
      %v2633 = vpop.f32.mrb[0].mxu0
      %v2634 = vadd.f32 %v2562, %v2633
      %2635 = vdwg.mxu0
      %2636 = vmatprep.subr.mxu0 %v2490
      %2637 = vmatpush1.msra.mxu0 %v2489
      %2638 = vmatprep.subr.mxu0 %v2492
      %2639 = vmatpush1.msra.mxu0 %v2491
      %2640 = vmatprep.subr.mxu0 %v2494
      %2641 = vmatpush1.msra.mxu0 %v2493
      %2642 = vmatprep.subr.mxu0 %v2496
      %2643 = vmatpush1.msra.mxu0 %v2495
      %2644 = vmatprep.subr.mxu0 %v2498
      %2645 = vmatpush1.msra.mxu0 %v2497
      %2646 = vmatprep.subr.mxu0 %v2500
      %2647 = vmatpush1.msra.mxu0 %v2499
      %2648 = vmatprep.subr.mxu0 %v2502
      %2649 = vmatpush1.msra.mxu0 %v2501
      %2650 = vmatprep.subr.mxu0 %v2504
      %2651 = vmatpush1.msra.mxu0 %v2503
      %2652 = vmatprep.subr.mxu0 %v2506
      %2653 = vmatpush1.msra.mxu0 %v2505
      %2654 = vmatprep.subr.mxu0 %v2508
      %2655 = vmatpush1.msra.mxu0 %v2507
      %2656 = vmatprep.subr.mxu0 %v2510
      %2657 = vmatpush1.msra.mxu0 %v2509
      %2658 = vmatprep.subr.mxu0 %v2512
      %2659 = vmatpush1.msra.mxu0 %v2511
      %2660 = vmatprep.subr.mxu0 %v2514
      %2661 = vmatpush1.msra.mxu0 %v2513
      %2662 = vmatprep.subr.mxu0 %v2516
      %2663 = vmatpush1.msra.mxu0 %v2515
      %2664 = vmatprep.subr.mxu0 %v2518
      %2665 = vmatpush1.msra.mxu0 %v2517
      %2666 = vmatprep.subr.mxu0 %v2520
      %2667 = vmatpush1.msra.mxu0 %v2519
      %2668 = vmatprep.subr.mxu0 %v2522
      %2669 = vmatpush1.msra.mxu0 %v2521
      %2670 = vmatprep.subr.mxu0 %v2524
      %2671 = vmatpush1.msra.mxu0 %v2523
      %2672 = vmatprep.subr.mxu0 %v2526
      %2673 = vmatpush1.msra.mxu0 %v2525
      %2674 = vmatprep.subr.mxu0 %v2528
      %2675 = vmatpush1.msra.mxu0 %v2527
      %2676 = vmatprep.subr.mxu0 %v2530
      %2677 = vmatpush1.msra.mxu0 %v2529
      %2678 = vmatprep.subr.mxu0 %v2532
      %2679 = vmatpush1.msra.mxu0 %v2531
      %2680 = vmatprep.subr.mxu0 %v2534
      %2681 = vmatpush1.msra.mxu0 %v2533
      %2682 = vmatprep.subr.mxu0 %v2536
      %2683 = vmatpush1.msra.mxu0 %v2535
      %2684 = vmatprep.subr.mxu0 %v2538
      %2685 = vmatpush1.msra.mxu0 %v2537
      %2686 = vmatprep.subr.mxu0 %v2540
      %2687 = vmatpush1.msra.mxu0 %v2539
      %2688 = vmatprep.subr.mxu0 %v2542
      %2689 = vmatpush1.msra.mxu0 %v2541
      %2690 = vmatprep.subr.mxu0 %v2544
      %2691 = vmatpush1.msra.mxu0 %v2543
      %2692 = vmatprep.subr.mxu0 %v2546
      %2693 = vmatpush1.msra.mxu0 %v2545
      %2694 = vmatprep.subr.mxu0 %v2548
      %2695 = vmatpush1.msra.mxu0 %v2547
      %2696 = vmatprep.subr.mxu0 %v2550
      %2697 = vmatpush1.msra.mxu0 %v2549
      %2698 = vmatprep.subr.mxu0 %v2552
      %2699 = vmatpush1.msra.mxu0 %v2551
      %2700 = vmatprep.mubr.f32.mxu0 %v2424
      %2701 = vmatmul.mubr.f32.gmra.mrb[0].mxu0 %v2423
      %v2702 = vpop.f32.mrb[0].mxu0
      %v2703 = vadd.f32 %v2632, %v2702
      %v2704 = vpop.f32.mrb[0].mxu0
      %v2705 = vadd.f32 %v2634, %v2704
      %2706 = vdwg.mxu0
      %v2707 = vmax.f32 %v2703, 0.0
      %v2708 = vmax.f32 %v2705, 0.0
      %v2709 = vld [vmem:[%s11] sm:$0xff]
      %v2710 = vld [vmem:[%s11 + $0x8] sm:$0xff]
      %v2711 = vld [vmem:[%s11 + $0x10] sm:$0xff]
      %v2712 = vld [vmem:[%s11 + $0x18] sm:$0xff]
      %v2713 = vld [vmem:[%s11 + $0x20] sm:$0xff]
      %v2714 = vld [vmem:[%s11 + $0x28] sm:$0xff]
      %v2715 = vld [vmem:[%s11 + $0x30] sm:$0xff]
      %v2716 = vld [vmem:[%s11 + $0x38] sm:$0xff]
      %v2717 = vld [vmem:[%s11 + $0x40] sm:$0xff]
      %v2718 = vld [vmem:[%s11 + $0x48] sm:$0xff]
      %v2719 = vld [vmem:[%s11 + $0x50] sm:$0xff]
      %v2720 = vld [vmem:[%s11 + $0x58] sm:$0xff]
      %v2721 = vld [vmem:[%s11 + $0x60] sm:$0xff]
      %v2722 = vld [vmem:[%s11 + $0x68] sm:$0xff]
      %v2723 = vld [vmem:[%s11 + $0x70] sm:$0xff]
      %v2724 = vld [vmem:[%s11 + $0x78] sm:$0xff]
      %v2725 = vld [vmem:[%s11 + $0x80] sm:$0xff]
      %v2726 = vld [vmem:[%s11 + $0x88] sm:$0xff]
      %v2727 = vld [vmem:[%s11 + $0x90] sm:$0xff]
      %v2728 = vld [vmem:[%s11 + $0x98] sm:$0xff]
      %v2729 = vld [vmem:[%s11 + $0xa0] sm:$0xff]
      %v2730 = vld [vmem:[%s11 + $0xa8] sm:$0xff]
      %v2731 = vld [vmem:[%s11 + $0xb0] sm:$0xff]
      %v2732 = vld [vmem:[%s11 + $0xb8] sm:$0xff]
      %v2733 = vld [vmem:[%s11 + $0xc0] sm:$0xff]
      %v2734 = vld [vmem:[%s11 + $0xc8] sm:$0xff]
      %v2735 = vld [vmem:[%s11 + $0xd0] sm:$0xff]
      %v2736 = vld [vmem:[%s11 + $0xd8] sm:$0xff]
      %v2737 = vld [vmem:[%s11 + $0xe0] sm:$0xff]
      %v2738 = vld [vmem:[%s11 + $0xe8] sm:$0xff]
      %v2739 = vld [vmem:[%s11 + $0xf0] sm:$0xff]
      %v2740 = vld [vmem:[%s11 + $0xf8] sm:$0xff]
      %v2741 = vld [vmem:[#allocation20] sm:$0x1]
      %v2743 = vlaneseq
      %v2744 = vshrl.u32 %v2743, 7
      %v2745 = vsub.s32 0, %v2744
      %v2746 = vrot.slane %v2741, %v2745
      %2748 = vmatprep.subr.mxu0 0.0
      %2749 = vmatpush1.msra.mxu0 %v2709
      %2750 = vmatprep.subr.mxu0 0.0
      %2751 = vmatpush1.msra.mxu0 %v2710
      %2752 = vmatprep.subr.mxu0 0.0
      %2753 = vmatpush1.msra.mxu0 %v2711
      %2754 = vmatprep.subr.mxu0 0.0
      %2755 = vmatpush1.msra.mxu0 %v2712
      %2756 = vmatprep.subr.mxu0 0.0
      %2757 = vmatpush1.msra.mxu0 %v2713
      %2758 = vmatprep.subr.mxu0 0.0
      %2759 = vmatpush1.msra.mxu0 %v2714
      %2760 = vmatprep.subr.mxu0 0.0
      %2761 = vmatpush1.msra.mxu0 %v2715
      %2762 = vmatprep.subr.mxu0 0.0
      %2763 = vmatpush1.msra.mxu0 %v2716
      %2764 = vmatprep.subr.mxu0 0.0
      %2765 = vmatpush1.msra.mxu0 %v2717
      %2766 = vmatprep.subr.mxu0 0.0
      %2767 = vmatpush1.msra.mxu0 %v2718
      %2768 = vmatprep.subr.mxu0 0.0
      %2769 = vmatpush1.msra.mxu0 %v2719
      %2770 = vmatprep.subr.mxu0 0.0
      %2771 = vmatpush1.msra.mxu0 %v2720
      %2772 = vmatprep.subr.mxu0 0.0
      %2773 = vmatpush1.msra.mxu0 %v2721
      %2774 = vmatprep.subr.mxu0 0.0
      %2775 = vmatpush1.msra.mxu0 %v2722
      %2776 = vmatprep.subr.mxu0 0.0
      %2777 = vmatpush1.msra.mxu0 %v2723
      %2778 = vmatprep.subr.mxu0 0.0
      %2779 = vmatpush1.msra.mxu0 %v2724
      %2780 = vmatprep.subr.mxu0 0.0
      %2781 = vmatpush1.msra.mxu0 %v2725
      %2782 = vmatprep.subr.mxu0 0.0
      %2783 = vmatpush1.msra.mxu0 %v2726
      %2784 = vmatprep.subr.mxu0 0.0
      %2785 = vmatpush1.msra.mxu0 %v2727
      %2786 = vmatprep.subr.mxu0 0.0
      %2787 = vmatpush1.msra.mxu0 %v2728
      %2788 = vmatprep.subr.mxu0 0.0
      %2789 = vmatpush1.msra.mxu0 %v2729
      %2790 = vmatprep.subr.mxu0 0.0
      %2791 = vmatpush1.msra.mxu0 %v2730
      %2792 = vmatprep.subr.mxu0 0.0
      %2793 = vmatpush1.msra.mxu0 %v2731
      %2794 = vmatprep.subr.mxu0 0.0
      %2795 = vmatpush1.msra.mxu0 %v2732
      %2796 = vmatprep.subr.mxu0 0.0
      %2797 = vmatpush1.msra.mxu0 %v2733
      %2798 = vmatprep.subr.mxu0 0.0
      %2799 = vmatpush1.msra.mxu0 %v2734
      %2800 = vmatprep.subr.mxu0 0.0
      %2801 = vmatpush1.msra.mxu0 %v2735
      %2802 = vmatprep.subr.mxu0 0.0
      %2803 = vmatpush1.msra.mxu0 %v2736
      %2804 = vmatprep.subr.mxu0 0.0
      %2805 = vmatpush1.msra.mxu0 %v2737
      %2806 = vmatprep.subr.mxu0 0.0
      %2807 = vmatpush1.msra.mxu0 %v2738
      %2808 = vmatprep.subr.mxu0 0.0
      %2809 = vmatpush1.msra.mxu0 %v2739
      %2810 = vmatprep.subr.mxu0 0.0
      %2811 = vmatpush1.msra.mxu0 %v2740
      %2812 = vmatprep.mubr.f32.mxu0 %v2708
      %2813 = vmatmul.mubr.f32.gmra.mrb[0].mxu0 %v2707
      %v2814 = vpop.f32.mrb[0].mxu0
      %v2815 = vadd.f32 %v2746, %v2814
      %v2816 = vpop.f32.mrb[0].mxu0
      %2817 = vdwg.mxu0
      %vm2818 = vcmask 66560
      %2819 = vst.msk [vmem:[#allocation21] sm:$0x3] %vm2818, %v2815
    $region105: #{tpu_custom_call.1} parent=1 // pred_fallthru
      _
    // Predicated region
    $region106: #{tpu_custom_call.1} parent=1 // pred_check
      _
    $region107: #{tpu_custom_call.1} parent=1 // pred_check_branch
      %2821 = sbr.rel (0) target = $region109
    $region108: #{tpu_custom_call.1} parent=1 // pred_region
      %s2823 = ssub.s32 32, 32
      %2824 = vsyncadd [#allocation5], %s2823
      %s2826 = sshll.u32 [#allocation21], 4
      %s2827 = int_to_ptr.vmem [resolvable:$true] %s2826
      %2829 = dma.vmem_to_hbm [thread:$0]  %s2827, 32, %s13, [#allocation5]
    $region109: #{tpu_custom_call.1} parent=1 // pred_fallthru
      _
    // Predicated region
    $region110: #{tpu_custom_call.1} parent=1 // pred_check
      _
    $region111: #{tpu_custom_call.1} parent=1 // pred_check_branch
      %2831 = sbr.rel (0) target = $region113
    $region112: #{tpu_custom_call.1} parent=1 // pred_region
      %2832 = dma.done [#allocation5], 32
    $region113: #{tpu_custom_call.1} parent=1 // pred_fallthru
      _
    %2833 = vsyncpa [#allocation4], 1
    %2834 = vsyncpa [#allocation7], 1
    %2835 = vsyncpa [#allocation10], 1
    %2836 = vsyncpa [#allocation13], 1
    %2837 = vsyncpa [#allocation16], 1
    %2838 = vsyncpa [#allocation19], 1
    %2839 = vsyncpa [#allocation5], 1

</llo_original>
